<compile_context>
chip_gen: v7x
topology: tpu7x:2x2x1
jax: 0.10.0
libtpu: 0.0.40
codegen_flags: <defaults>
</compile_context>

<pallas_src>
import functools
import math

import numpy as np
import jax
import jax.numpy as jnp
from jax import lax
from jax.experimental import pallas as pl
from jax.experimental.pallas import tpu as pltpu

EPS = 1e-5  # PyTorch LayerNorm default eps


def _layernorm(x, w, b):
    mu = jnp.mean(x, axis=-1, keepdims=True)
    xc = x - mu
    var = jnp.mean(xc * xc, axis=-1, keepdims=True)
    return xc * lax.rsqrt(var + EPS) * w + b


# ----------------------------------------------------------------------------
# The single fused kernel
# ----------------------------------------------------------------------------
def _fused_forward_kernel(nheads,
                          x_ref, pe_ref, bias_ref,
                          wqkv_ref, bqkv_ref, wo_ref, bo_ref,
                          ln1w_ref, ln1b_ref, w1_ref, b1_ref,
                          w2_ref, b2_ref, ln2w_ref, ln2b_ref,
                          dM_ref, dbr_ref, dW2_ref, db2_ref, dwf_ref, dbl_ref,
                          o_ref, xf_scratch):
    B, T, D = x_ref.shape
    L = B * T
    H = nheads
    hd = D // H
    nly = wqkv_ref.shape[0]

    # Positional encoding: module adds the single row pe[:, x.size(1), :]
    # broadcast over the whole tensor; dropout = identity in eval.
    slab = x_ref[...].reshape(L, D) + pe_ref[...]              # (B*T, D)

    # Additive attention bias (precomputed constant): row i attends row j iff
    # they carry the same token index -> reproduces batch_first=False
    # semantics (attention mixes across B; T acts as the batch axis).
    attn_bias = bias_ref[...]                                  # (L, L)

    for l in range(nly):                    # static unroll over encoder layers
        # Batched QKV projection over all B*T rows (1/sqrt(hd) folded into Wq/bq).
        qkv = jnp.dot(slab, wqkv_ref[l],
                      preferred_element_type=jnp.float32) + bqkv_ref[l]   # (L, 3D)
        heads = []
        for h in range(H):
            q = qkv[:, h * hd:(h + 1) * hd]
            k = qkv[:, D + h * hd:D + (h + 1) * hd]
            v = qkv[:, 2 * D + h * hd:2 * D + (h + 1) * hd]
            s = lax.dot_general(q, k, (((1,), (1,)), ((), ())),
                                preferred_element_type=jnp.float32) + attn_bias
            s = s - jnp.max(s, axis=-1, keepdims=True)
            p = jnp.exp(s)
            den = jnp.sum(p, axis=-1, keepdims=True)
            inv = pl.reciprocal(den, approx=True)       # EUP slot
            inv = inv * (2.0 - den * inv)               # one Newton step -> ~fp32
            heads.append(jnp.dot(p * inv, v, preferred_element_type=jnp.float32))
        attn = jnp.concatenate(heads, axis=1)                               # (L, D)
        attn = jnp.dot(attn, wo_ref[l],
                       preferred_element_type=jnp.float32) + bo_ref[l]
        y = _layernorm(slab + attn, ln1w_ref[l], ln1b_ref[l])
        ff = jnp.maximum(jnp.dot(y, w1_ref[l],
                                 preferred_element_type=jnp.float32) + b1_ref[l], 0.0)
        ff = jnp.dot(ff, w2_ref[l], preferred_element_type=jnp.float32) + b2_ref[l]
        slab = _layernorm(y + ff, ln2w_ref[l], ln2b_ref[l])

    # Decoder_Conv_Pooling: both conv branches fused into one lane-dense
    # im2col matmul chain.  Re-layout (B*T, D) -> (B, T*D) via VMEM scratch.
    for b in range(B):
        for t in range(T):
            xf_scratch[b:b + 1, t * D:(t + 1) * D] = slab[b * T + t:b * T + t + 1, :]
    xf = xf_scratch[...]                                                    # (B, T*D)
    h1 = jnp.maximum(jnp.dot(xf, dM_ref[...],
                             preferred_element_type=jnp.float32) + dbr_ref[...], 0.0)
    s2 = jnp.maximum(jnp.dot(h1, dW2_ref[...],
                             preferred_element_type=jnp.float32) + db2_ref[...], 0.0)
    # AvgPool means + Linear(2,1) folded into one weighted lane reduction.
    y = jnp.sum(s2 * dwf_ref[...], axis=1, keepdims=True) + dbl_ref[...]    # (B, 1)
    o_ref[...] = jnp.maximum(y, 0.0)


# ----------------------------------------------------------------------------
# Wrapper: one pallas_call for the whole forward pass
# ----------------------------------------------------------------------------
def forward(params, X):
    B, T, D = X.shape
    kp = params['krn']
    tok = np.arange(B * T) % T
    attn_bias = jnp.asarray(np.where(tok[:, None] == tok[None, :], 0.0, -1e30),
                            dtype=jnp.float32)
    args = (X, kp['pe'], attn_bias,
            kp['wqkv'], kp['bqkv'], kp['wo'], kp['bo'],
            kp['ln1w'], kp['ln1b'], kp['w1'], kp['b1'],
            kp['w2'], kp['b2'], kp['ln2w'], kp['ln2b'],
            kp['dM'], kp['dbr'], kp['dW2'], kp['db2'], kp['dwf'], kp['dbl'])
    vmem = pl.BlockSpec(memory_space=pltpu.MemorySpace.VMEM)
    return pl.pallas_call(
        functools.partial(_fused_forward_kernel, params['nhd']),
        out_shape=jax.ShapeDtypeStruct((B, 1), jnp.float32),
        in_specs=[vmem] * len(args),
        out_specs=vmem,
        scratch_shapes=[pltpu.VMEM((B, T * D), jnp.float32)],
    )(*args)


# ----------------------------------------------------------------------------
# Parameter construction (deterministic): raw "torch-like" params for the
# reference + stacked / transposed / scale-folded / fused tensors for the kernel
# ----------------------------------------------------------------------------
def init_params(key, d_model, n_token, nhd, nly, hid):
    assert d_model % nhd == 0
    E, T = d_model, n_token
    hd = E // nhd
    C1 = 32
    keys = jax.random.split(key, 8 * nly + 10)
    ki = iter(keys)

    def unif(k, shape, fan_in):
        bound = 1.0 / math.sqrt(fan_in)
        return jax.random.uniform(k, shape, jnp.float32, -bound, bound)

    layers = []
    for _ in range(nly):
        layers.append(dict(
            wqkv=unif(next(ki), (3 * E, E), E),
            bqkv=unif(next(ki), (3 * E,), E),
            wo=unif(next(ki), (E, E), E),
            bo=unif(next(ki), (E,), E),
            w1=unif(next(ki), (hid, E), E),
            b1=unif(next(ki), (hid,), E),
            w2=unif(next(ki), (E, hid), hid),
            b2=unif(next(ki), (E,), hid),
            ln1w=jnp.ones((E,), jnp.float32), ln1b=jnp.zeros((E,), jnp.float32),
            ln2w=jnp.ones((E,), jnp.float32), ln2b=jnp.zeros((E,), jnp.float32),
        ))

    # decoder conv weights (PyTorch shapes)
    w11 = unif(next(ki), (C1, 1, 2, E), 2 * E)                  # conv1_1
    b11 = unif(next(ki), (C1,), 2 * E)
    w12 = unif(next(ki), (1, C1, 1, 1), C1)                     # conv1_2
    b12 = unif(next(ki), (1,), C1)
    w21 = unif(next(ki), (C1, 1, T, 2 * hd), T * 2 * hd)        # conv2_1
    b21 = unif(next(ki), (C1,), T * 2 * hd)
    w22 = unif(next(ki), (1, C1, 1, 1), C1)                     # conv2_2
    b22 = unif(next(ki), (1,), C1)
    wl = unif(next(ki), (1, 2), 2)                              # last Linear(2,1)
    bl = unif(next(ki), (1,), 2)

    P1 = T - 1        # conv1_1 output rows
    P2 = nhd - 1      # conv2_1 output cols
    # AvgPool((3,1))/((1,3)) + squeeze collapse each branch to (B,1) only here.
    assert P1 == 3 and P2 == 3, "decoder pooling requires n_token=4 and nhd=4"

    # im2col unroll of conv1_1 (kernel (2, d_model), stride 1 along H)
    M1 = jnp.zeros((T * E, P1 * C1), jnp.float32)
    for i in range(P1):
        for rr in range(2):
            M1 = M1.at[(i + rr) * E:(i + rr + 1) * E, i * C1:(i + 1) * C1].set(w11[:, 0, rr, :].T)
    b1r = jnp.tile(b11, (P1,))
    W12 = jnp.zeros((P1 * C1, P1), jnp.float32)
    for i in range(P1):
        W12 = W12.at[i * C1:(i + 1) * C1, i].set(w12[0, :, 0, 0])

    # im2col unroll of conv2_1 (kernel (n_token, 2*hid_dim), stride hid_dim along W)
    M2 = jnp.zeros((T * E, P2 * C1), jnp.float32)
    for j in range(P2):
        for t in range(T):
            r0 = t * E + j * hd
            M2 = M2.at[r0:r0 + 2 * hd, j * C1:(j + 1) * C1].set(w21[:, 0, t, :].T)
    b2r = jnp.tile(b21, (P2,))
    W22 = jnp.zeros((P2 * C1, P2), jnp.float32)
    for j in range(P2):
        W22 = W22.at[j * C1:(j + 1) * C1, j].set(w22[0, :, 0, 0])

    # fixed positional-encoding row pe[n_token] (module indexes pe[:, x.size(1), :])
    pos = float(T)
    idxv = jnp.arange(0, E, 2, dtype=jnp.float32)
    div = jnp.exp(idxv * (-math.log(10000.0) / E))
    pe_row = jnp.zeros((E,), jnp.float32)
    pe_row = pe_row.at[0::2].set(jnp.sin(pos * div))
    pe_row = pe_row.at[1::2].set(jnp.cos(pos * div))

    ref = dict(layers=layers, pe_row=pe_row[None, :],
               dec=dict(M1=M1, b1r=b1r[None, :], W12=W12, b12=jnp.full((1, 1), b12[0]),
                        M2=M2, b2r=b2r[None, :], W22=W22, b22=jnp.full((1, 1), b22[0]),
                        wl=wl, bl=bl[None, :]))

    # ---- kernel-prepped tensors: stacked per-layer, transposed, scale folded ----
    scale = 1.0 / math.sqrt(hd)

    def stack(f):
        return jnp.stack([f(p) for p in layers], axis=0)

    def fold_qkv_w(p):
        return p['wqkv'].at[:E, :].multiply(scale).T        # (E, 3E), q cols scaled

    def fold_qkv_b(p):
        return p['bqkv'].at[:E].multiply(scale)[None, :]    # (1, 3E)

    # fused decoder: M1|M2 side-by-side, block-diag second stage, folded pool+linear
    dW2 = jnp.block([[W12, jnp.zeros((P1 * C1, P2), jnp.float32)],
                     [jnp.zeros((P2 * C1, P1), jnp.float32), W22]]).astype(jnp.float32)
    db2 = jnp.concatenate([jnp.full((P1,), b12[0]), jnp.full((P2,), b22[0])])[None, :]
    dwf = jnp.concatenate([jnp.full((P1,), wl[0, 0] / P1),
                           jnp.full((P2,), wl[0, 1] / P2)])[None, :]

    krn = dict(
        pe=pe_row[None, :],
        wqkv=stack(fold_qkv_w), bqkv=stack(fold_qkv_b),
        wo=stack(lambda p: p['wo'].T), bo=stack(lambda p: p['bo'][None, :]),
        ln1w=stack(lambda p: p['ln1w'][None, :]), ln1b=stack(lambda p: p['ln1b'][None, :]),
        w1=stack(lambda p: p['w1'].T), b1=stack(lambda p: p['b1'][None, :]),
        w2=stack(lambda p: p['w2'].T), b2=stack(lambda p: p['b2'][None, :]),
        ln2w=stack(lambda p: p['ln2w'][None, :]), ln2b=stack(lambda p: p['ln2b'][None, :]),
        dM=jnp.concatenate([M1, M2], axis=1),                    # (T*E, (P1+P2)*C1)
        dbr=jnp.concatenate([b1r, b2r])[None, :],                # (1, 192)
        dW2=dW2,                                                 # (192, 6)
        db2=db2,                                                 # (1, 6)
        dwf=dwf,                                                 # (1, 6)
        dbl=bl[None, :],                                         # (1, 1)
    )
    return dict(ref=ref, krn=krn, nhd=nhd)


# ----------------------------------------------------------------------------
# Pure-JAX reference (un-fused, un-folded math) used as a sanity check
# ----------------------------------------------------------------------------
def _layernorm_ref(x, w, b):
    mu = jnp.mean(x, -1, keepdims=True)
    xc = x - mu
    var = jnp.mean(xc * xc, -1, keepdims=True)
    return xc / jnp.sqrt(var + EPS) * w + b


def forward_ref(params, X):
    B, T, D = X.shape
    H = params['nhd']
    hd = D // H
    r = params['ref']
    x = X + r['pe_row']
    h = jnp.transpose(x, (1, 0, 2))          # (T, B, D): attention over axis B
    for p in r['layers']:
        qkv = h @ p['wqkv'].T + p['bqkv']
        q, k, v = qkv[..., :D], qkv[..., D:2 * D], qkv[..., 2 * D:]
        qh = q.reshape(T, B, H, hd)
        kh = k.reshape(T, B, H, hd)
        vh = v.reshape(T, B, H, hd)
        s = jnp.einsum('nlhd,nmhd->nhlm', qh, kh) / math.sqrt(hd)
        pa = jax.nn.softmax(s, axis=-1)
        o = jnp.einsum('nhlm,nmhd->nlhd', pa, vh).reshape(T, B, D)
        o = o @ p['wo'].T + p['bo']
        y = _layernorm_ref(h + o, p['ln1w'], p['ln1b'])
        ff = jnp.maximum(y @ p['w1'].T + p['b1'], 0.0) @ p['w2'].T + p['b2']
        h = _layernorm_ref(y + ff, p['ln2w'], p['ln2b'])
    xf = jnp.transpose(h, (1, 0, 2)).reshape(B, T * D)
    d = r['dec']
    r1 = jnp.mean(jnp.maximum(
        jnp.maximum(xf @ d['M1'] + d['b1r'], 0.0) @ d['W12'] + d['b12'], 0.0),
        axis=1, keepdims=True)
    r2 = jnp.mean(jnp.maximum(
        jnp.maximum(xf @ d['M2'] + d['b2r'], 0.0) @ d['W22'] + d['b22'], 0.0),
        axis=1, keepdims=True)
    cat = jnp.concatenate([r1, r2], axis=1)
    return jnp.maximum(cat @ d['wl'].T + d['bl'], 0.0)


if __name__ == "__main__":
    # config consistent with the module: d_model % nhd == 0,
    # n_token = 4 and nhd = 4 so both conv branches pool/squeeze down to (B, 1)
    d_model, n_token, nhd, nly, hid = 32, 4, 4, 2, 64
    B = 2

    key = jax.random.PRNGKey(0)
    pkey, xkey = jax.random.split(key)
    params = init_params(pkey, d_model, n_token, nhd, nly, hid)
    X = jax.random.normal(xkey, (B, n_token, d_model), jnp.float32)

    out = jax.block_until_ready(forward(params, X))

    assert out.shape == (B, 1), out.shape
    assert bool(jnp.all(jnp.isfinite(out)))
    with jax.default_matmul_precision('float32'):
        ref = jax.block_until_ready(forward_ref(params, X))
    assert bool(jnp.allclose(out, ref, atol=1e-3, rtol=1e-3)), (out, ref)

    print("KERNEL_OK")
</pallas_src>

<mosaic_0001>
module attributes {stable_mosaic.version = 11 : i64} {
  func.func @_fused_forward_kernel(%arg0: memref<2x4x32xf32, #tpu.memory_space<vmem>>, %arg1: memref<1x32xf32, #tpu.memory_space<vmem>>, %arg2: memref<8x8xf32, #tpu.memory_space<vmem>>, %arg3: memref<2x32x96xf32, #tpu.memory_space<vmem>>, %arg4: memref<2x1x96xf32, #tpu.memory_space<vmem>>, %arg5: memref<2x32x32xf32, #tpu.memory_space<vmem>>, %arg6: memref<2x1x32xf32, #tpu.memory_space<vmem>>, %arg7: memref<2x1x32xf32, #tpu.memory_space<vmem>>, %arg8: memref<2x1x32xf32, #tpu.memory_space<vmem>>, %arg9: memref<2x32x64xf32, #tpu.memory_space<vmem>>, %arg10: memref<2x1x64xf32, #tpu.memory_space<vmem>>, %arg11: memref<2x64x32xf32, #tpu.memory_space<vmem>>, %arg12: memref<2x1x32xf32, #tpu.memory_space<vmem>>, %arg13: memref<2x1x32xf32, #tpu.memory_space<vmem>>, %arg14: memref<2x1x32xf32, #tpu.memory_space<vmem>>, %arg15: memref<128x192xf32, #tpu.memory_space<vmem>>, %arg16: memref<1x192xf32, #tpu.memory_space<vmem>>, %arg17: memref<192x6xf32, #tpu.memory_space<vmem>>, %arg18: memref<1x6xf32, #tpu.memory_space<vmem>>, %arg19: memref<1x6xf32, #tpu.memory_space<vmem>>, %arg20: memref<1x1xf32, #tpu.memory_space<vmem>>, %arg21: memref<2x1xf32, #tpu.memory_space<vmem>>, %arg22: memref<2x128xf32, #tpu.memory_space<vmem>>) attributes {dimension_semantics = [], scalar_prefetch = 0 : i64, scratch_operands = 1 : i64, tpu.core_type = #tpu.core_type<tc>} {
    %c0 = arith.constant 0 : index
    %c0_0 = arith.constant 0 : index
    %c0_1 = arith.constant 0 : index
    %0 = vector.load %arg0[%c0, %c0_0, %c0_1] : memref<2x4x32xf32, #tpu.memory_space<vmem>>, vector<2x4x32xf32>
    %1 = vector.shape_cast %0 : vector<2x4x32xf32> to vector<8x32xf32>
    %c0_2 = arith.constant 0 : index
    %c0_3 = arith.constant 0 : index
    %2 = vector.load %arg1[%c0_2, %c0_3] : memref<1x32xf32, #tpu.memory_space<vmem>>, vector<1x32xf32>
    %3 = vector.broadcast %2 : vector<1x32xf32> to vector<8x32xf32>
    %4 = arith.addf %1, %3 : vector<8x32xf32>
    %c0_4 = arith.constant 0 : index
    %c0_5 = arith.constant 0 : index
    %5 = vector.load %arg2[%c0_4, %c0_5] : memref<8x8xf32, #tpu.memory_space<vmem>>, vector<8x8xf32>
    %c0_6 = arith.constant 0 : index
    %c0_7 = arith.constant 0 : index
    %c0_8 = arith.constant 0 : index
    %6 = vector.load %arg3[%c0_6, %c0_7, %c0_8] : memref<2x32x96xf32, #tpu.memory_space<vmem>>, vector<1x32x96xf32>
    %7 = vector.shape_cast %6 : vector<1x32x96xf32> to vector<32x96xf32>
    %cst = arith.constant dense<0.000000e+00> : vector<8x96xf32>
    %8 = tpu.matmul %4, %7, %cst {dimension_numbers = #tpu.dot_dimension_numbers<[1], [0], [0], [1], [0, 0, 1, 1], [], []>} : vector<8x32xf32>, vector<32x96xf32>, vector<8x96xf32> -> vector<8x96xf32>
    %c0_9 = arith.constant 0 : index
    %c0_10 = arith.constant 0 : index
    %c0_11 = arith.constant 0 : index
    %9 = vector.load %arg4[%c0_9, %c0_10, %c0_11] : memref<2x1x96xf32, #tpu.memory_space<vmem>>, vector<1x1x96xf32>
    %10 = vector.shape_cast %9 : vector<1x1x96xf32> to vector<1x96xf32>
    %11 = vector.broadcast %10 : vector<1x96xf32> to vector<8x96xf32>
    %12 = arith.addf %8, %11 : vector<8x96xf32>
    %13 = vector.extract_strided_slice %12 {offsets = [0, 0], sizes = [8, 8], strides = [1, 1]} : vector<8x96xf32> to vector<8x8xf32>
    %14 = vector.extract_strided_slice %12 {offsets = [0, 32], sizes = [8, 8], strides = [1, 1]} : vector<8x96xf32> to vector<8x8xf32>
    %15 = vector.extract_strided_slice %12 {offsets = [0, 64], sizes = [8, 8], strides = [1, 1]} : vector<8x96xf32> to vector<8x8xf32>
    %cst_12 = arith.constant dense<0.000000e+00> : vector<8x8xf32>
    %16 = tpu.matmul %13, %14, %cst_12 {dimension_numbers = #tpu.dot_dimension_numbers<[1], [1], [0], [0], [0, 0, 1, 0], [], []>} : vector<8x8xf32>, vector<8x8xf32>, vector<8x8xf32> -> vector<8x8xf32>
    %17 = arith.addf %16, %5 : vector<8x8xf32>
    %cst_13 = arith.constant dense<0xFF800000> : vector<8xf32>
    %18 = vector.multi_reduction <maximumf>, %17, %cst_13 [1] : vector<8x8xf32> to vector<8xf32>
    %19 = vector.shape_cast %18 : vector<8xf32> to vector<8x1xf32>
    %20 = vector.broadcast %19 : vector<8x1xf32> to vector<8x8xf32>
    %21 = arith.subf %17, %20 : vector<8x8xf32>
    %22 = math.exp %21 : vector<8x8xf32>
    %cst_14 = arith.constant dense<0.000000e+00> : vector<8xf32>
    %23 = vector.multi_reduction <add>, %22, %cst_14 [1] : vector<8x8xf32> to vector<8xf32>
    %24 = vector.shape_cast %23 : vector<8xf32> to vector<8x1xf32>
    %25 = tpu.reciprocal %24 {approx = true} : vector<8x1xf32> -> vector<8x1xf32>
    %26 = arith.mulf %24, %25 : vector<8x1xf32>
    %cst_15 = arith.constant 2.000000e+00 : f32
    %27 = vector.broadcast %cst_15 : f32 to vector<8x1xf32>
    %28 = arith.subf %27, %26 : vector<8x1xf32>
    %29 = arith.mulf %25, %28 : vector<8x1xf32>
    %30 = vector.broadcast %29 : vector<8x1xf32> to vector<8x8xf32>
    %31 = arith.mulf %22, %30 : vector<8x8xf32>
    %cst_16 = arith.constant dense<0.000000e+00> : vector<8x8xf32>
    %32 = tpu.matmul %31, %15, %cst_16 {dimension_numbers = #tpu.dot_dimension_numbers<[1], [0], [0], [1], [0, 0, 1, 1], [], []>} : vector<8x8xf32>, vector<8x8xf32>, vector<8x8xf32> -> vector<8x8xf32>
    %33 = vector.extract_strided_slice %12 {offsets = [0, 8], sizes = [8, 8], strides = [1, 1]} : vector<8x96xf32> to vector<8x8xf32>
    %34 = vector.extract_strided_slice %12 {offsets = [0, 40], sizes = [8, 8], strides = [1, 1]} : vector<8x96xf32> to vector<8x8xf32>
    %35 = vector.extract_strided_slice %12 {offsets = [0, 72], sizes = [8, 8], strides = [1, 1]} : vector<8x96xf32> to vector<8x8xf32>
    %cst_17 = arith.constant dense<0.000000e+00> : vector<8x8xf32>
    %36 = tpu.matmul %33, %34, %cst_17 {dimension_numbers = #tpu.dot_dimension_numbers<[1], [1], [0], [0], [0, 0, 1, 0], [], []>} : vector<8x8xf32>, vector<8x8xf32>, vector<8x8xf32> -> vector<8x8xf32>
    %37 = arith.addf %36, %5 : vector<8x8xf32>
    %cst_18 = arith.constant dense<0xFF800000> : vector<8xf32>
    %38 = vector.multi_reduction <maximumf>, %37, %cst_18 [1] : vector<8x8xf32> to vector<8xf32>
    %39 = vector.shape_cast %38 : vector<8xf32> to vector<8x1xf32>
    %40 = vector.broadcast %39 : vector<8x1xf32> to vector<8x8xf32>
    %41 = arith.subf %37, %40 : vector<8x8xf32>
    %42 = math.exp %41 : vector<8x8xf32>
    %cst_19 = arith.constant dense<0.000000e+00> : vector<8xf32>
    %43 = vector.multi_reduction <add>, %42, %cst_19 [1] : vector<8x8xf32> to vector<8xf32>
    %44 = vector.shape_cast %43 : vector<8xf32> to vector<8x1xf32>
    %45 = tpu.reciprocal %44 {approx = true} : vector<8x1xf32> -> vector<8x1xf32>
    %46 = arith.mulf %44, %45 : vector<8x1xf32>
    %cst_20 = arith.constant 2.000000e+00 : f32
    %47 = vector.broadcast %cst_20 : f32 to vector<8x1xf32>
    %48 = arith.subf %47, %46 : vector<8x1xf32>
    %49 = arith.mulf %45, %48 : vector<8x1xf32>
    %50 = vector.broadcast %49 : vector<8x1xf32> to vector<8x8xf32>
    %51 = arith.mulf %42, %50 : vector<8x8xf32>
    %cst_21 = arith.constant dense<0.000000e+00> : vector<8x8xf32>
    %52 = tpu.matmul %51, %35, %cst_21 {dimension_numbers = #tpu.dot_dimension_numbers<[1], [0], [0], [1], [0, 0, 1, 1], [], []>} : vector<8x8xf32>, vector<8x8xf32>, vector<8x8xf32> -> vector<8x8xf32>
    %53 = vector.extract_strided_slice %12 {offsets = [0, 16], sizes = [8, 8], strides = [1, 1]} : vector<8x96xf32> to vector<8x8xf32>
    %54 = vector.extract_strided_slice %12 {offsets = [0, 48], sizes = [8, 8], strides = [1, 1]} : vector<8x96xf32> to vector<8x8xf32>
    %55 = vector.extract_strided_slice %12 {offsets = [0, 80], sizes = [8, 8], strides = [1, 1]} : vector<8x96xf32> to vector<8x8xf32>
    %cst_22 = arith.constant dense<0.000000e+00> : vector<8x8xf32>
    %56 = tpu.matmul %53, %54, %cst_22 {dimension_numbers = #tpu.dot_dimension_numbers<[1], [1], [0], [0], [0, 0, 1, 0], [], []>} : vector<8x8xf32>, vector<8x8xf32>, vector<8x8xf32> -> vector<8x8xf32>
    %57 = arith.addf %56, %5 : vector<8x8xf32>
    %cst_23 = arith.constant dense<0xFF800000> : vector<8xf32>
    %58 = vector.multi_reduction <maximumf>, %57, %cst_23 [1] : vector<8x8xf32> to vector<8xf32>
    %59 = vector.shape_cast %58 : vector<8xf32> to vector<8x1xf32>
    %60 = vector.broadcast %59 : vector<8x1xf32> to vector<8x8xf32>
    %61 = arith.subf %57, %60 : vector<8x8xf32>
    %62 = math.exp %61 : vector<8x8xf32>
    %cst_24 = arith.constant dense<0.000000e+00> : vector<8xf32>
    %63 = vector.multi_reduction <add>, %62, %cst_24 [1] : vector<8x8xf32> to vector<8xf32>
    %64 = vector.shape_cast %63 : vector<8xf32> to vector<8x1xf32>
    %65 = tpu.reciprocal %64 {approx = true} : vector<8x1xf32> -> vector<8x1xf32>
    %66 = arith.mulf %64, %65 : vector<8x1xf32>
    %cst_25 = arith.constant 2.000000e+00 : f32
    %67 = vector.broadcast %cst_25 : f32 to vector<8x1xf32>
    %68 = arith.subf %67, %66 : vector<8x1xf32>
    %69 = arith.mulf %65, %68 : vector<8x1xf32>
    %70 = vector.broadcast %69 : vector<8x1xf32> to vector<8x8xf32>
    %71 = arith.mulf %62, %70 : vector<8x8xf32>
    %cst_26 = arith.constant dense<0.000000e+00> : vector<8x8xf32>
    %72 = tpu.matmul %71, %55, %cst_26 {dimension_numbers = #tpu.dot_dimension_numbers<[1], [0], [0], [1], [0, 0, 1, 1], [], []>} : vector<8x8xf32>, vector<8x8xf32>, vector<8x8xf32> -> vector<8x8xf32>
    %73 = vector.extract_strided_slice %12 {offsets = [0, 24], sizes = [8, 8], strides = [1, 1]} : vector<8x96xf32> to vector<8x8xf32>
    %74 = vector.extract_strided_slice %12 {offsets = [0, 56], sizes = [8, 8], strides = [1, 1]} : vector<8x96xf32> to vector<8x8xf32>
    %75 = vector.extract_strided_slice %12 {offsets = [0, 88], sizes = [8, 8], strides = [1, 1]} : vector<8x96xf32> to vector<8x8xf32>
    %cst_27 = arith.constant dense<0.000000e+00> : vector<8x8xf32>
    %76 = tpu.matmul %73, %74, %cst_27 {dimension_numbers = #tpu.dot_dimension_numbers<[1], [1], [0], [0], [0, 0, 1, 0], [], []>} : vector<8x8xf32>, vector<8x8xf32>, vector<8x8xf32> -> vector<8x8xf32>
    %77 = arith.addf %76, %5 : vector<8x8xf32>
    %cst_28 = arith.constant dense<0xFF800000> : vector<8xf32>
    %78 = vector.multi_reduction <maximumf>, %77, %cst_28 [1] : vector<8x8xf32> to vector<8xf32>
    %79 = vector.shape_cast %78 : vector<8xf32> to vector<8x1xf32>
    %80 = vector.broadcast %79 : vector<8x1xf32> to vector<8x8xf32>
    %81 = arith.subf %77, %80 : vector<8x8xf32>
    %82 = math.exp %81 : vector<8x8xf32>
    %cst_29 = arith.constant dense<0.000000e+00> : vector<8xf32>
    %83 = vector.multi_reduction <add>, %82, %cst_29 [1] : vector<8x8xf32> to vector<8xf32>
    %84 = vector.shape_cast %83 : vector<8xf32> to vector<8x1xf32>
    %85 = tpu.reciprocal %84 {approx = true} : vector<8x1xf32> -> vector<8x1xf32>
    %86 = arith.mulf %84, %85 : vector<8x1xf32>
    %cst_30 = arith.constant 2.000000e+00 : f32
    %87 = vector.broadcast %cst_30 : f32 to vector<8x1xf32>
    %88 = arith.subf %87, %86 : vector<8x1xf32>
    %89 = arith.mulf %85, %88 : vector<8x1xf32>
    %90 = vector.broadcast %89 : vector<8x1xf32> to vector<8x8xf32>
    %91 = arith.mulf %82, %90 : vector<8x8xf32>
    %cst_31 = arith.constant dense<0.000000e+00> : vector<8x8xf32>
    %92 = tpu.matmul %91, %75, %cst_31 {dimension_numbers = #tpu.dot_dimension_numbers<[1], [0], [0], [1], [0, 0, 1, 1], [], []>} : vector<8x8xf32>, vector<8x8xf32>, vector<8x8xf32> -> vector<8x8xf32>
    %93 = tpu.concatenate %32, %52, %72, %92 in 1 : vector<8x8xf32>, vector<8x8xf32>, vector<8x8xf32>, vector<8x8xf32> -> vector<8x32xf32>
    %c0_32 = arith.constant 0 : index
    %c0_33 = arith.constant 0 : index
    %c0_34 = arith.constant 0 : index
    %94 = vector.load %arg5[%c0_32, %c0_33, %c0_34] : memref<2x32x32xf32, #tpu.memory_space<vmem>>, vector<1x32x32xf32>
    %95 = vector.shape_cast %94 : vector<1x32x32xf32> to vector<32x32xf32>
    %cst_35 = arith.constant dense<0.000000e+00> : vector<8x32xf32>
    %96 = tpu.matmul %93, %95, %cst_35 {dimension_numbers = #tpu.dot_dimension_numbers<[1], [0], [0], [1], [0, 0, 1, 1], [], []>} : vector<8x32xf32>, vector<32x32xf32>, vector<8x32xf32> -> vector<8x32xf32>
    %c0_36 = arith.constant 0 : index
    %c0_37 = arith.constant 0 : index
    %c0_38 = arith.constant 0 : index
    %97 = vector.load %arg6[%c0_36, %c0_37, %c0_38] : memref<2x1x32xf32, #tpu.memory_space<vmem>>, vector<1x1x32xf32>
    %98 = vector.shape_cast %97 : vector<1x1x32xf32> to vector<1x32xf32>
    %99 = vector.broadcast %98 : vector<1x32xf32> to vector<8x32xf32>
    %100 = arith.addf %96, %99 : vector<8x32xf32>
    %101 = arith.addf %4, %100 : vector<8x32xf32>
    %c0_39 = arith.constant 0 : index
    %c0_40 = arith.constant 0 : index
    %c0_41 = arith.constant 0 : index
    %102 = vector.load %arg7[%c0_39, %c0_40, %c0_41] : memref<2x1x32xf32, #tpu.memory_space<vmem>>, vector<1x1x32xf32>
    %103 = vector.shape_cast %102 : vector<1x1x32xf32> to vector<1x32xf32>
    %c0_42 = arith.constant 0 : index
    %c0_43 = arith.constant 0 : index
    %c0_44 = arith.constant 0 : index
    %104 = vector.load %arg8[%c0_42, %c0_43, %c0_44] : memref<2x1x32xf32, #tpu.memory_space<vmem>>, vector<1x1x32xf32>
    %105 = vector.shape_cast %104 : vector<1x1x32xf32> to vector<1x32xf32>
    %cst_45 = arith.constant dense<0.000000e+00> : vector<8xf32>
    %106 = vector.multi_reduction <add>, %101, %cst_45 [1] : vector<8x32xf32> to vector<8xf32>
    %107 = vector.shape_cast %106 : vector<8xf32> to vector<8x1xf32>
    %cst_46 = arith.constant 3.200000e+01 : f32
    %108 = vector.broadcast %cst_46 : f32 to vector<8x1xf32>
    %109 = arith.divf %107, %108 : vector<8x1xf32>
    %110 = vector.broadcast %109 : vector<8x1xf32> to vector<8x32xf32>
    %111 = arith.subf %101, %110 : vector<8x32xf32>
    %112 = arith.mulf %111, %111 : vector<8x32xf32>
    %cst_47 = arith.constant dense<0.000000e+00> : vector<8xf32>
    %113 = vector.multi_reduction <add>, %112, %cst_47 [1] : vector<8x32xf32> to vector<8xf32>
    %114 = vector.shape_cast %113 : vector<8xf32> to vector<8x1xf32>
    %cst_48 = arith.constant 3.200000e+01 : f32
    %115 = vector.broadcast %cst_48 : f32 to vector<8x1xf32>
    %116 = arith.divf %114, %115 : vector<8x1xf32>
    %cst_49 = arith.constant 9.99999974E-6 : f32
    %117 = vector.broadcast %cst_49 : f32 to vector<8x1xf32>
    %118 = arith.addf %116, %117 : vector<8x1xf32>
    %119 = math.rsqrt %118 : vector<8x1xf32>
    %120 = vector.broadcast %119 : vector<8x1xf32> to vector<8x32xf32>
    %121 = arith.mulf %111, %120 : vector<8x32xf32>
    %122 = vector.broadcast %103 : vector<1x32xf32> to vector<8x32xf32>
    %123 = arith.mulf %121, %122 : vector<8x32xf32>
    %124 = vector.broadcast %105 : vector<1x32xf32> to vector<8x32xf32>
    %125 = arith.addf %123, %124 : vector<8x32xf32>
    %c0_50 = arith.constant 0 : index
    %c0_51 = arith.constant 0 : index
    %c0_52 = arith.constant 0 : index
    %126 = vector.load %arg9[%c0_50, %c0_51, %c0_52] : memref<2x32x64xf32, #tpu.memory_space<vmem>>, vector<1x32x64xf32>
    %127 = vector.shape_cast %126 : vector<1x32x64xf32> to vector<32x64xf32>
    %cst_53 = arith.constant dense<0.000000e+00> : vector<8x64xf32>
    %128 = tpu.matmul %125, %127, %cst_53 {dimension_numbers = #tpu.dot_dimension_numbers<[1], [0], [0], [1], [0, 0, 1, 1], [], []>} : vector<8x32xf32>, vector<32x64xf32>, vector<8x64xf32> -> vector<8x64xf32>
    %c0_54 = arith.constant 0 : index
    %c0_55 = arith.constant 0 : index
    %c0_56 = arith.constant 0 : index
    %129 = vector.load %arg10[%c0_54, %c0_55, %c0_56] : memref<2x1x64xf32, #tpu.memory_space<vmem>>, vector<1x1x64xf32>
    %130 = vector.shape_cast %129 : vector<1x1x64xf32> to vector<1x64xf32>
    %131 = vector.broadcast %130 : vector<1x64xf32> to vector<8x64xf32>
    %132 = arith.addf %128, %131 : vector<8x64xf32>
    %cst_57 = arith.constant 0.000000e+00 : f32
    %133 = vector.broadcast %cst_57 : f32 to vector<8x64xf32>
    %134 = arith.maximumf %132, %133 : vector<8x64xf32>
    %c0_58 = arith.constant 0 : index
    %c0_59 = arith.constant 0 : index
    %c0_60 = arith.constant 0 : index
    %135 = vector.load %arg11[%c0_58, %c0_59, %c0_60] : memref<2x64x32xf32, #tpu.memory_space<vmem>>, vector<1x64x32xf32>
    %136 = vector.shape_cast %135 : vector<1x64x32xf32> to vector<64x32xf32>
    %cst_61 = arith.constant dense<0.000000e+00> : vector<8x32xf32>
    %137 = tpu.matmul %134, %136, %cst_61 {dimension_numbers = #tpu.dot_dimension_numbers<[1], [0], [0], [1], [0, 0, 1, 1], [], []>} : vector<8x64xf32>, vector<64x32xf32>, vector<8x32xf32> -> vector<8x32xf32>
    %c0_62 = arith.constant 0 : index
    %c0_63 = arith.constant 0 : index
    %c0_64 = arith.constant 0 : index
    %138 = vector.load %arg12[%c0_62, %c0_63, %c0_64] : memref<2x1x32xf32, #tpu.memory_space<vmem>>, vector<1x1x32xf32>
    %139 = vector.shape_cast %138 : vector<1x1x32xf32> to vector<1x32xf32>
    %140 = vector.broadcast %139 : vector<1x32xf32> to vector<8x32xf32>
    %141 = arith.addf %137, %140 : vector<8x32xf32>
    %142 = arith.addf %125, %141 : vector<8x32xf32>
    %c0_65 = arith.constant 0 : index
    %c0_66 = arith.constant 0 : index
    %c0_67 = arith.constant 0 : index
    %143 = vector.load %arg13[%c0_65, %c0_66, %c0_67] : memref<2x1x32xf32, #tpu.memory_space<vmem>>, vector<1x1x32xf32>
    %144 = vector.shape_cast %143 : vector<1x1x32xf32> to vector<1x32xf32>
    %c0_68 = arith.constant 0 : index
    %c0_69 = arith.constant 0 : index
    %c0_70 = arith.constant 0 : index
    %145 = vector.load %arg14[%c0_68, %c0_69, %c0_70] : memref<2x1x32xf32, #tpu.memory_space<vmem>>, vector<1x1x32xf32>
    %146 = vector.shape_cast %145 : vector<1x1x32xf32> to vector<1x32xf32>
    %cst_71 = arith.constant dense<0.000000e+00> : vector<8xf32>
    %147 = vector.multi_reduction <add>, %142, %cst_71 [1] : vector<8x32xf32> to vector<8xf32>
    %148 = vector.shape_cast %147 : vector<8xf32> to vector<8x1xf32>
    %cst_72 = arith.constant 3.200000e+01 : f32
    %149 = vector.broadcast %cst_72 : f32 to vector<8x1xf32>
    %150 = arith.divf %148, %149 : vector<8x1xf32>
    %151 = vector.broadcast %150 : vector<8x1xf32> to vector<8x32xf32>
    %152 = arith.subf %142, %151 : vector<8x32xf32>
    %153 = arith.mulf %152, %152 : vector<8x32xf32>
    %cst_73 = arith.constant dense<0.000000e+00> : vector<8xf32>
    %154 = vector.multi_reduction <add>, %153, %cst_73 [1] : vector<8x32xf32> to vector<8xf32>
    %155 = vector.shape_cast %154 : vector<8xf32> to vector<8x1xf32>
    %cst_74 = arith.constant 3.200000e+01 : f32
    %156 = vector.broadcast %cst_74 : f32 to vector<8x1xf32>
    %157 = arith.divf %155, %156 : vector<8x1xf32>
    %cst_75 = arith.constant 9.99999974E-6 : f32
    %158 = vector.broadcast %cst_75 : f32 to vector<8x1xf32>
    %159 = arith.addf %157, %158 : vector<8x1xf32>
    %160 = math.rsqrt %159 : vector<8x1xf32>
    %161 = vector.broadcast %160 : vector<8x1xf32> to vector<8x32xf32>
    %162 = arith.mulf %152, %161 : vector<8x32xf32>
    %163 = vector.broadcast %144 : vector<1x32xf32> to vector<8x32xf32>
    %164 = arith.mulf %162, %163 : vector<8x32xf32>
    %165 = vector.broadcast %146 : vector<1x32xf32> to vector<8x32xf32>
    %166 = arith.addf %164, %165 : vector<8x32xf32>
    %c1 = arith.constant 1 : index
    %c0_76 = arith.constant 0 : index
    %c0_77 = arith.constant 0 : index
    %167 = vector.load %arg3[%c1, %c0_76, %c0_77] : memref<2x32x96xf32, #tpu.memory_space<vmem>>, vector<1x32x96xf32>
    %168 = vector.shape_cast %167 : vector<1x32x96xf32> to vector<32x96xf32>
    %cst_78 = arith.constant dense<0.000000e+00> : vector<8x96xf32>
    %169 = tpu.matmul %166, %168, %cst_78 {dimension_numbers = #tpu.dot_dimension_numbers<[1], [0], [0], [1], [0, 0, 1, 1], [], []>} : vector<8x32xf32>, vector<32x96xf32>, vector<8x96xf32> -> vector<8x96xf32>
    %c1_79 = arith.constant 1 : index
    %c0_80 = arith.constant 0 : index
    %c0_81 = arith.constant 0 : index
    %170 = vector.load %arg4[%c1_79, %c0_80, %c0_81] : memref<2x1x96xf32, #tpu.memory_space<vmem>>, vector<1x1x96xf32>
    %171 = vector.shape_cast %170 : vector<1x1x96xf32> to vector<1x96xf32>
    %172 = vector.broadcast %171 : vector<1x96xf32> to vector<8x96xf32>
    %173 = arith.addf %169, %172 : vector<8x96xf32>
    %174 = vector.extract_strided_slice %173 {offsets = [0, 0], sizes = [8, 8], strides = [1, 1]} : vector<8x96xf32> to vector<8x8xf32>
    %175 = vector.extract_strided_slice %173 {offsets = [0, 32], sizes = [8, 8], strides = [1, 1]} : vector<8x96xf32> to vector<8x8xf32>
    %176 = vector.extract_strided_slice %173 {offsets = [0, 64], sizes = [8, 8], strides = [1, 1]} : vector<8x96xf32> to vector<8x8xf32>
    %cst_82 = arith.constant dense<0.000000e+00> : vector<8x8xf32>
    %177 = tpu.matmul %174, %175, %cst_82 {dimension_numbers = #tpu.dot_dimension_numbers<[1], [1], [0], [0], [0, 0, 1, 0], [], []>} : vector<8x8xf32>, vector<8x8xf32>, vector<8x8xf32> -> vector<8x8xf32>
    %178 = arith.addf %177, %5 : vector<8x8xf32>
    %cst_83 = arith.constant dense<0xFF800000> : vector<8xf32>
    %179 = vector.multi_reduction <maximumf>, %178, %cst_83 [1] : vector<8x8xf32> to vector<8xf32>
    %180 = vector.shape_cast %179 : vector<8xf32> to vector<8x1xf32>
    %181 = vector.broadcast %180 : vector<8x1xf32> to vector<8x8xf32>
    %182 = arith.subf %178, %181 : vector<8x8xf32>
    %183 = math.exp %182 : vector<8x8xf32>
    %cst_84 = arith.constant dense<0.000000e+00> : vector<8xf32>
    %184 = vector.multi_reduction <add>, %183, %cst_84 [1] : vector<8x8xf32> to vector<8xf32>
    %185 = vector.shape_cast %184 : vector<8xf32> to vector<8x1xf32>
    %186 = tpu.reciprocal %185 {approx = true} : vector<8x1xf32> -> vector<8x1xf32>
    %187 = arith.mulf %185, %186 : vector<8x1xf32>
    %cst_85 = arith.constant 2.000000e+00 : f32
    %188 = vector.broadcast %cst_85 : f32 to vector<8x1xf32>
    %189 = arith.subf %188, %187 : vector<8x1xf32>
    %190 = arith.mulf %186, %189 : vector<8x1xf32>
    %191 = vector.broadcast %190 : vector<8x1xf32> to vector<8x8xf32>
    %192 = arith.mulf %183, %191 : vector<8x8xf32>
    %cst_86 = arith.constant dense<0.000000e+00> : vector<8x8xf32>
    %193 = tpu.matmul %192, %176, %cst_86 {dimension_numbers = #tpu.dot_dimension_numbers<[1], [0], [0], [1], [0, 0, 1, 1], [], []>} : vector<8x8xf32>, vector<8x8xf32>, vector<8x8xf32> -> vector<8x8xf32>
    %194 = vector.extract_strided_slice %173 {offsets = [0, 8], sizes = [8, 8], strides = [1, 1]} : vector<8x96xf32> to vector<8x8xf32>
    %195 = vector.extract_strided_slice %173 {offsets = [0, 40], sizes = [8, 8], strides = [1, 1]} : vector<8x96xf32> to vector<8x8xf32>
    %196 = vector.extract_strided_slice %173 {offsets = [0, 72], sizes = [8, 8], strides = [1, 1]} : vector<8x96xf32> to vector<8x8xf32>
    %cst_87 = arith.constant dense<0.000000e+00> : vector<8x8xf32>
    %197 = tpu.matmul %194, %195, %cst_87 {dimension_numbers = #tpu.dot_dimension_numbers<[1], [1], [0], [0], [0, 0, 1, 0], [], []>} : vector<8x8xf32>, vector<8x8xf32>, vector<8x8xf32> -> vector<8x8xf32>
    %198 = arith.addf %197, %5 : vector<8x8xf32>
    %cst_88 = arith.constant dense<0xFF800000> : vector<8xf32>
    %199 = vector.multi_reduction <maximumf>, %198, %cst_88 [1] : vector<8x8xf32> to vector<8xf32>
    %200 = vector.shape_cast %199 : vector<8xf32> to vector<8x1xf32>
    %201 = vector.broadcast %200 : vector<8x1xf32> to vector<8x8xf32>
    %202 = arith.subf %198, %201 : vector<8x8xf32>
    %203 = math.exp %202 : vector<8x8xf32>
    %cst_89 = arith.constant dense<0.000000e+00> : vector<8xf32>
    %204 = vector.multi_reduction <add>, %203, %cst_89 [1] : vector<8x8xf32> to vector<8xf32>
    %205 = vector.shape_cast %204 : vector<8xf32> to vector<8x1xf32>
    %206 = tpu.reciprocal %205 {approx = true} : vector<8x1xf32> -> vector<8x1xf32>
    %207 = arith.mulf %205, %206 : vector<8x1xf32>
    %cst_90 = arith.constant 2.000000e+00 : f32
    %208 = vector.broadcast %cst_90 : f32 to vector<8x1xf32>
    %209 = arith.subf %208, %207 : vector<8x1xf32>
    %210 = arith.mulf %206, %209 : vector<8x1xf32>
    %211 = vector.broadcast %210 : vector<8x1xf32> to vector<8x8xf32>
    %212 = arith.mulf %203, %211 : vector<8x8xf32>
    %cst_91 = arith.constant dense<0.000000e+00> : vector<8x8xf32>
    %213 = tpu.matmul %212, %196, %cst_91 {dimension_numbers = #tpu.dot_dimension_numbers<[1], [0], [0], [1], [0, 0, 1, 1], [], []>} : vector<8x8xf32>, vector<8x8xf32>, vector<8x8xf32> -> vector<8x8xf32>
    %214 = vector.extract_strided_slice %173 {offsets = [0, 16], sizes = [8, 8], strides = [1, 1]} : vector<8x96xf32> to vector<8x8xf32>
    %215 = vector.extract_strided_slice %173 {offsets = [0, 48], sizes = [8, 8], strides = [1, 1]} : vector<8x96xf32> to vector<8x8xf32>
    %216 = vector.extract_strided_slice %173 {offsets = [0, 80], sizes = [8, 8], strides = [1, 1]} : vector<8x96xf32> to vector<8x8xf32>
    %cst_92 = arith.constant dense<0.000000e+00> : vector<8x8xf32>
    %217 = tpu.matmul %214, %215, %cst_92 {dimension_numbers = #tpu.dot_dimension_numbers<[1], [1], [0], [0], [0, 0, 1, 0], [], []>} : vector<8x8xf32>, vector<8x8xf32>, vector<8x8xf32> -> vector<8x8xf32>
    %218 = arith.addf %217, %5 : vector<8x8xf32>
    %cst_93 = arith.constant dense<0xFF800000> : vector<8xf32>
    %219 = vector.multi_reduction <maximumf>, %218, %cst_93 [1] : vector<8x8xf32> to vector<8xf32>
    %220 = vector.shape_cast %219 : vector<8xf32> to vector<8x1xf32>
    %221 = vector.broadcast %220 : vector<8x1xf32> to vector<8x8xf32>
    %222 = arith.subf %218, %221 : vector<8x8xf32>
    %223 = math.exp %222 : vector<8x8xf32>
    %cst_94 = arith.constant dense<0.000000e+00> : vector<8xf32>
    %224 = vector.multi_reduction <add>, %223, %cst_94 [1] : vector<8x8xf32> to vector<8xf32>
    %225 = vector.shape_cast %224 : vector<8xf32> to vector<8x1xf32>
    %226 = tpu.reciprocal %225 {approx = true} : vector<8x1xf32> -> vector<8x1xf32>
    %227 = arith.mulf %225, %226 : vector<8x1xf32>
    %cst_95 = arith.constant 2.000000e+00 : f32
    %228 = vector.broadcast %cst_95 : f32 to vector<8x1xf32>
    %229 = arith.subf %228, %227 : vector<8x1xf32>
    %230 = arith.mulf %226, %229 : vector<8x1xf32>
    %231 = vector.broadcast %230 : vector<8x1xf32> to vector<8x8xf32>
    %232 = arith.mulf %223, %231 : vector<8x8xf32>
    %cst_96 = arith.constant dense<0.000000e+00> : vector<8x8xf32>
    %233 = tpu.matmul %232, %216, %cst_96 {dimension_numbers = #tpu.dot_dimension_numbers<[1], [0], [0], [1], [0, 0, 1, 1], [], []>} : vector<8x8xf32>, vector<8x8xf32>, vector<8x8xf32> -> vector<8x8xf32>
    %234 = vector.extract_strided_slice %173 {offsets = [0, 24], sizes = [8, 8], strides = [1, 1]} : vector<8x96xf32> to vector<8x8xf32>
    %235 = vector.extract_strided_slice %173 {offsets = [0, 56], sizes = [8, 8], strides = [1, 1]} : vector<8x96xf32> to vector<8x8xf32>
    %236 = vector.extract_strided_slice %173 {offsets = [0, 88], sizes = [8, 8], strides = [1, 1]} : vector<8x96xf32> to vector<8x8xf32>
    %cst_97 = arith.constant dense<0.000000e+00> : vector<8x8xf32>
    %237 = tpu.matmul %234, %235, %cst_97 {dimension_numbers = #tpu.dot_dimension_numbers<[1], [1], [0], [0], [0, 0, 1, 0], [], []>} : vector<8x8xf32>, vector<8x8xf32>, vector<8x8xf32> -> vector<8x8xf32>
    %238 = arith.addf %237, %5 : vector<8x8xf32>
    %cst_98 = arith.constant dense<0xFF800000> : vector<8xf32>
    %239 = vector.multi_reduction <maximumf>, %238, %cst_98 [1] : vector<8x8xf32> to vector<8xf32>
    %240 = vector.shape_cast %239 : vector<8xf32> to vector<8x1xf32>
    %241 = vector.broadcast %240 : vector<8x1xf32> to vector<8x8xf32>
    %242 = arith.subf %238, %241 : vector<8x8xf32>
    %243 = math.exp %242 : vector<8x8xf32>
    %cst_99 = arith.constant dense<0.000000e+00> : vector<8xf32>
    %244 = vector.multi_reduction <add>, %243, %cst_99 [1] : vector<8x8xf32> to vector<8xf32>
    %245 = vector.shape_cast %244 : vector<8xf32> to vector<8x1xf32>
    %246 = tpu.reciprocal %245 {approx = true} : vector<8x1xf32> -> vector<8x1xf32>
    %247 = arith.mulf %245, %246 : vector<8x1xf32>
    %cst_100 = arith.constant 2.000000e+00 : f32
    %248 = vector.broadcast %cst_100 : f32 to vector<8x1xf32>
    %249 = arith.subf %248, %247 : vector<8x1xf32>
    %250 = arith.mulf %246, %249 : vector<8x1xf32>
    %251 = vector.broadcast %250 : vector<8x1xf32> to vector<8x8xf32>
    %252 = arith.mulf %243, %251 : vector<8x8xf32>
    %cst_101 = arith.constant dense<0.000000e+00> : vector<8x8xf32>
    %253 = tpu.matmul %252, %236, %cst_101 {dimension_numbers = #tpu.dot_dimension_numbers<[1], [0], [0], [1], [0, 0, 1, 1], [], []>} : vector<8x8xf32>, vector<8x8xf32>, vector<8x8xf32> -> vector<8x8xf32>
    %254 = tpu.concatenate %193, %213, %233, %253 in 1 : vector<8x8xf32>, vector<8x8xf32>, vector<8x8xf32>, vector<8x8xf32> -> vector<8x32xf32>
    %c1_102 = arith.constant 1 : index
    %c0_103 = arith.constant 0 : index
    %c0_104 = arith.constant 0 : index
    %255 = vector.load %arg5[%c1_102, %c0_103, %c0_104] : memref<2x32x32xf32, #tpu.memory_space<vmem>>, vector<1x32x32xf32>
    %256 = vector.shape_cast %255 : vector<1x32x32xf32> to vector<32x32xf32>
    %cst_105 = arith.constant dense<0.000000e+00> : vector<8x32xf32>
    %257 = tpu.matmul %254, %256, %cst_105 {dimension_numbers = #tpu.dot_dimension_numbers<[1], [0], [0], [1], [0, 0, 1, 1], [], []>} : vector<8x32xf32>, vector<32x32xf32>, vector<8x32xf32> -> vector<8x32xf32>
    %c1_106 = arith.constant 1 : index
    %c0_107 = arith.constant 0 : index
    %c0_108 = arith.constant 0 : index
    %258 = vector.load %arg6[%c1_106, %c0_107, %c0_108] : memref<2x1x32xf32, #tpu.memory_space<vmem>>, vector<1x1x32xf32>
    %259 = vector.shape_cast %258 : vector<1x1x32xf32> to vector<1x32xf32>
    %260 = vector.broadcast %259 : vector<1x32xf32> to vector<8x32xf32>
    %261 = arith.addf %257, %260 : vector<8x32xf32>
    %262 = arith.addf %166, %261 : vector<8x32xf32>
    %c1_109 = arith.constant 1 : index
    %c0_110 = arith.constant 0 : index
    %c0_111 = arith.constant 0 : index
    %263 = vector.load %arg7[%c1_109, %c0_110, %c0_111] : memref<2x1x32xf32, #tpu.memory_space<vmem>>, vector<1x1x32xf32>
    %264 = vector.shape_cast %263 : vector<1x1x32xf32> to vector<1x32xf32>
    %c1_112 = arith.constant 1 : index
    %c0_113 = arith.constant 0 : index
    %c0_114 = arith.constant 0 : index
    %265 = vector.load %arg8[%c1_112, %c0_113, %c0_114] : memref<2x1x32xf32, #tpu.memory_space<vmem>>, vector<1x1x32xf32>
    %266 = vector.shape_cast %265 : vector<1x1x32xf32> to vector<1x32xf32>
    %cst_115 = arith.constant dense<0.000000e+00> : vector<8xf32>
    %267 = vector.multi_reduction <add>, %262, %cst_115 [1] : vector<8x32xf32> to vector<8xf32>
    %268 = vector.shape_cast %267 : vector<8xf32> to vector<8x1xf32>
    %cst_116 = arith.constant 3.200000e+01 : f32
    %269 = vector.broadcast %cst_116 : f32 to vector<8x1xf32>
    %270 = arith.divf %268, %269 : vector<8x1xf32>
    %271 = vector.broadcast %270 : vector<8x1xf32> to vector<8x32xf32>
    %272 = arith.subf %262, %271 : vector<8x32xf32>
    %273 = arith.mulf %272, %272 : vector<8x32xf32>
    %cst_117 = arith.constant dense<0.000000e+00> : vector<8xf32>
    %274 = vector.multi_reduction <add>, %273, %cst_117 [1] : vector<8x32xf32> to vector<8xf32>
    %275 = vector.shape_cast %274 : vector<8xf32> to vector<8x1xf32>
    %cst_118 = arith.constant 3.200000e+01 : f32
    %276 = vector.broadcast %cst_118 : f32 to vector<8x1xf32>
    %277 = arith.divf %275, %276 : vector<8x1xf32>
    %cst_119 = arith.constant 9.99999974E-6 : f32
    %278 = vector.broadcast %cst_119 : f32 to vector<8x1xf32>
    %279 = arith.addf %277, %278 : vector<8x1xf32>
    %280 = math.rsqrt %279 : vector<8x1xf32>
    %281 = vector.broadcast %280 : vector<8x1xf32> to vector<8x32xf32>
    %282 = arith.mulf %272, %281 : vector<8x32xf32>
    %283 = vector.broadcast %264 : vector<1x32xf32> to vector<8x32xf32>
    %284 = arith.mulf %282, %283 : vector<8x32xf32>
    %285 = vector.broadcast %266 : vector<1x32xf32> to vector<8x32xf32>
    %286 = arith.addf %284, %285 : vector<8x32xf32>
    %c1_120 = arith.constant 1 : index
    %c0_121 = arith.constant 0 : index
    %c0_122 = arith.constant 0 : index
    %287 = vector.load %arg9[%c1_120, %c0_121, %c0_122] : memref<2x32x64xf32, #tpu.memory_space<vmem>>, vector<1x32x64xf32>
    %288 = vector.shape_cast %287 : vector<1x32x64xf32> to vector<32x64xf32>
    %cst_123 = arith.constant dense<0.000000e+00> : vector<8x64xf32>
    %289 = tpu.matmul %286, %288, %cst_123 {dimension_numbers = #tpu.dot_dimension_numbers<[1], [0], [0], [1], [0, 0, 1, 1], [], []>} : vector<8x32xf32>, vector<32x64xf32>, vector<8x64xf32> -> vector<8x64xf32>
    %c1_124 = arith.constant 1 : index
    %c0_125 = arith.constant 0 : index
    %c0_126 = arith.constant 0 : index
    %290 = vector.load %arg10[%c1_124, %c0_125, %c0_126] : memref<2x1x64xf32, #tpu.memory_space<vmem>>, vector<1x1x64xf32>
    %291 = vector.shape_cast %290 : vector<1x1x64xf32> to vector<1x64xf32>
    %292 = vector.broadcast %291 : vector<1x64xf32> to vector<8x64xf32>
    %293 = arith.addf %289, %292 : vector<8x64xf32>
    %cst_127 = arith.constant 0.000000e+00 : f32
    %294 = vector.broadcast %cst_127 : f32 to vector<8x64xf32>
    %295 = arith.maximumf %293, %294 : vector<8x64xf32>
    %c1_128 = arith.constant 1 : index
    %c0_129 = arith.constant 0 : index
    %c0_130 = arith.constant 0 : index
    %296 = vector.load %arg11[%c1_128, %c0_129, %c0_130] : memref<2x64x32xf32, #tpu.memory_space<vmem>>, vector<1x64x32xf32>
    %297 = vector.shape_cast %296 : vector<1x64x32xf32> to vector<64x32xf32>
    %cst_131 = arith.constant dense<0.000000e+00> : vector<8x32xf32>
    %298 = tpu.matmul %295, %297, %cst_131 {dimension_numbers = #tpu.dot_dimension_numbers<[1], [0], [0], [1], [0, 0, 1, 1], [], []>} : vector<8x64xf32>, vector<64x32xf32>, vector<8x32xf32> -> vector<8x32xf32>
    %c1_132 = arith.constant 1 : index
    %c0_133 = arith.constant 0 : index
    %c0_134 = arith.constant 0 : index
    %299 = vector.load %arg12[%c1_132, %c0_133, %c0_134] : memref<2x1x32xf32, #tpu.memory_space<vmem>>, vector<1x1x32xf32>
    %300 = vector.shape_cast %299 : vector<1x1x32xf32> to vector<1x32xf32>
    %301 = vector.broadcast %300 : vector<1x32xf32> to vector<8x32xf32>
    %302 = arith.addf %298, %301 : vector<8x32xf32>
    %303 = arith.addf %286, %302 : vector<8x32xf32>
    %c1_135 = arith.constant 1 : index
    %c0_136 = arith.constant 0 : index
    %c0_137 = arith.constant 0 : index
    %304 = vector.load %arg13[%c1_135, %c0_136, %c0_137] : memref<2x1x32xf32, #tpu.memory_space<vmem>>, vector<1x1x32xf32>
    %305 = vector.shape_cast %304 : vector<1x1x32xf32> to vector<1x32xf32>
    %c1_138 = arith.constant 1 : index
    %c0_139 = arith.constant 0 : index
    %c0_140 = arith.constant 0 : index
    %306 = vector.load %arg14[%c1_138, %c0_139, %c0_140] : memref<2x1x32xf32, #tpu.memory_space<vmem>>, vector<1x1x32xf32>
    %307 = vector.shape_cast %306 : vector<1x1x32xf32> to vector<1x32xf32>
    %cst_141 = arith.constant dense<0.000000e+00> : vector<8xf32>
    %308 = vector.multi_reduction <add>, %303, %cst_141 [1] : vector<8x32xf32> to vector<8xf32>
    %309 = vector.shape_cast %308 : vector<8xf32> to vector<8x1xf32>
    %cst_142 = arith.constant 3.200000e+01 : f32
    %310 = vector.broadcast %cst_142 : f32 to vector<8x1xf32>
    %311 = arith.divf %309, %310 : vector<8x1xf32>
    %312 = vector.broadcast %311 : vector<8x1xf32> to vector<8x32xf32>
    %313 = arith.subf %303, %312 : vector<8x32xf32>
    %314 = arith.mulf %313, %313 : vector<8x32xf32>
    %cst_143 = arith.constant dense<0.000000e+00> : vector<8xf32>
    %315 = vector.multi_reduction <add>, %314, %cst_143 [1] : vector<8x32xf32> to vector<8xf32>
    %316 = vector.shape_cast %315 : vector<8xf32> to vector<8x1xf32>
    %cst_144 = arith.constant 3.200000e+01 : f32
    %317 = vector.broadcast %cst_144 : f32 to vector<8x1xf32>
    %318 = arith.divf %316, %317 : vector<8x1xf32>
    %cst_145 = arith.constant 9.99999974E-6 : f32
    %319 = vector.broadcast %cst_145 : f32 to vector<8x1xf32>
    %320 = arith.addf %318, %319 : vector<8x1xf32>
    %321 = math.rsqrt %320 : vector<8x1xf32>
    %322 = vector.broadcast %321 : vector<8x1xf32> to vector<8x32xf32>
    %323 = arith.mulf %313, %322 : vector<8x32xf32>
    %324 = vector.broadcast %305 : vector<1x32xf32> to vector<8x32xf32>
    %325 = arith.mulf %323, %324 : vector<8x32xf32>
    %326 = vector.broadcast %307 : vector<1x32xf32> to vector<8x32xf32>
    %327 = arith.addf %325, %326 : vector<8x32xf32>
    %328 = vector.extract_strided_slice %327 {offsets = [0, 0], sizes = [1, 32], strides = [1, 1]} : vector<8x32xf32> to vector<1x32xf32>
    %c0_146 = arith.constant 0 : index
    %c0_147 = arith.constant 0 : index
    %329 = vector.load %arg22[%c0_146, %c0_147] : memref<2x128xf32, #tpu.memory_space<vmem>>, vector<1x32xf32>
    tpu.vector_store %arg22[%c0_146, %c0_147], %328 {strides = array<i32>} : memref<2x128xf32, #tpu.memory_space<vmem>>, vector<1x32xf32>,
    %330 = vector.extract_strided_slice %327 {offsets = [1, 0], sizes = [1, 32], strides = [1, 1]} : vector<8x32xf32> to vector<1x32xf32>
    %c0_148 = arith.constant 0 : index
    %c32 = arith.constant 32 : index
    %331 = vector.load %arg22[%c0_148, %c32] : memref<2x128xf32, #tpu.memory_space<vmem>>, vector<1x32xf32>
    tpu.vector_store %arg22[%c0_148, %c32], %330 {strides = array<i32>} : memref<2x128xf32, #tpu.memory_space<vmem>>, vector<1x32xf32>,
    %332 = vector.extract_strided_slice %327 {offsets = [2, 0], sizes = [1, 32], strides = [1, 1]} : vector<8x32xf32> to vector<1x32xf32>
    %c0_149 = arith.constant 0 : index
    %c64 = arith.constant 64 : index
    %333 = vector.load %arg22[%c0_149, %c64] : memref<2x128xf32, #tpu.memory_space<vmem>>, vector<1x32xf32>
    tpu.vector_store %arg22[%c0_149, %c64], %332 {strides = array<i32>} : memref<2x128xf32, #tpu.memory_space<vmem>>, vector<1x32xf32>,
    %334 = vector.extract_strided_slice %327 {offsets = [3, 0], sizes = [1, 32], strides = [1, 1]} : vector<8x32xf32> to vector<1x32xf32>
    %c0_150 = arith.constant 0 : index
    %c96 = arith.constant 96 : index
    %335 = vector.load %arg22[%c0_150, %c96] : memref<2x128xf32, #tpu.memory_space<vmem>>, vector<1x32xf32>
    tpu.vector_store %arg22[%c0_150, %c96], %334 {strides = array<i32>} : memref<2x128xf32, #tpu.memory_space<vmem>>, vector<1x32xf32>,
    %336 = vector.extract_strided_slice %327 {offsets = [4, 0], sizes = [1, 32], strides = [1, 1]} : vector<8x32xf32> to vector<1x32xf32>
    %c1_151 = arith.constant 1 : index
    %c0_152 = arith.constant 0 : index
    %337 = vector.load %arg22[%c1_151, %c0_152] : memref<2x128xf32, #tpu.memory_space<vmem>>, vector<1x32xf32>
    tpu.vector_store %arg22[%c1_151, %c0_152], %336 {strides = array<i32>} : memref<2x128xf32, #tpu.memory_space<vmem>>, vector<1x32xf32>,
    %338 = vector.extract_strided_slice %327 {offsets = [5, 0], sizes = [1, 32], strides = [1, 1]} : vector<8x32xf32> to vector<1x32xf32>
    %c1_153 = arith.constant 1 : index
    %c32_154 = arith.constant 32 : index
    %339 = vector.load %arg22[%c1_153, %c32_154] : memref<2x128xf32, #tpu.memory_space<vmem>>, vector<1x32xf32>
    tpu.vector_store %arg22[%c1_153, %c32_154], %338 {strides = array<i32>} : memref<2x128xf32, #tpu.memory_space<vmem>>, vector<1x32xf32>,
    %340 = vector.extract_strided_slice %327 {offsets = [6, 0], sizes = [1, 32], strides = [1, 1]} : vector<8x32xf32> to vector<1x32xf32>
    %c1_155 = arith.constant 1 : index
    %c64_156 = arith.constant 64 : index
    %341 = vector.load %arg22[%c1_155, %c64_156] : memref<2x128xf32, #tpu.memory_space<vmem>>, vector<1x32xf32>
    tpu.vector_store %arg22[%c1_155, %c64_156], %340 {strides = array<i32>} : memref<2x128xf32, #tpu.memory_space<vmem>>, vector<1x32xf32>,
    %342 = vector.extract_strided_slice %327 {offsets = [7, 0], sizes = [1, 32], strides = [1, 1]} : vector<8x32xf32> to vector<1x32xf32>
    %c1_157 = arith.constant 1 : index
    %c96_158 = arith.constant 96 : index
    %343 = vector.load %arg22[%c1_157, %c96_158] : memref<2x128xf32, #tpu.memory_space<vmem>>, vector<1x32xf32>
    tpu.vector_store %arg22[%c1_157, %c96_158], %342 {strides = array<i32>} : memref<2x128xf32, #tpu.memory_space<vmem>>, vector<1x32xf32>,
    %c0_159 = arith.constant 0 : index
    %c0_160 = arith.constant 0 : index
    %344 = vector.load %arg22[%c0_159, %c0_160] : memref<2x128xf32, #tpu.memory_space<vmem>>, vector<2x128xf32>
    %c0_161 = arith.constant 0 : index
    %c0_162 = arith.constant 0 : index
    %345 = vector.load %arg15[%c0_161, %c0_162] : memref<128x192xf32, #tpu.memory_space<vmem>>, vector<128x192xf32>
    %cst_163 = arith.constant dense<0.000000e+00> : vector<2x192xf32>
    %346 = tpu.matmul %344, %345, %cst_163 {dimension_numbers = #tpu.dot_dimension_numbers<[1], [0], [0], [1], [0, 0, 1, 1], [], []>} : vector<2x128xf32>, vector<128x192xf32>, vector<2x192xf32> -> vector<2x192xf32>
    %c0_164 = arith.constant 0 : index
    %c0_165 = arith.constant 0 : index
    %347 = vector.load %arg16[%c0_164, %c0_165] : memref<1x192xf32, #tpu.memory_space<vmem>>, vector<1x192xf32>
    %348 = vector.broadcast %347 : vector<1x192xf32> to vector<2x192xf32>
    %349 = arith.addf %346, %348 : vector<2x192xf32>
    %cst_166 = arith.constant 0.000000e+00 : f32
    %350 = vector.broadcast %cst_166 : f32 to vector<2x192xf32>
    %351 = arith.maximumf %349, %350 : vector<2x192xf32>
    %c0_167 = arith.constant 0 : index
    %c0_168 = arith.constant 0 : index
    %352 = vector.load %arg17[%c0_167, %c0_168] : memref<192x6xf32, #tpu.memory_space<vmem>>, vector<192x6xf32>
    %cst_169 = arith.constant dense<0.000000e+00> : vector<2x6xf32>
    %353 = tpu.matmul %351, %352, %cst_169 {dimension_numbers = #tpu.dot_dimension_numbers<[1], [0], [0], [1], [0, 0, 1, 1], [], []>} : vector<2x192xf32>, vector<192x6xf32>, vector<2x6xf32> -> vector<2x6xf32>
    %c0_170 = arith.constant 0 : index
    %c0_171 = arith.constant 0 : index
    %354 = vector.load %arg18[%c0_170, %c0_171] : memref<1x6xf32, #tpu.memory_space<vmem>>, vector<1x6xf32>
    %355 = vector.broadcast %354 : vector<1x6xf32> to vector<2x6xf32>
    %356 = arith.addf %353, %355 : vector<2x6xf32>
    %cst_172 = arith.constant 0.000000e+00 : f32
    %357 = vector.broadcast %cst_172 : f32 to vector<2x6xf32>
    %358 = arith.maximumf %356, %357 : vector<2x6xf32>
    %c0_173 = arith.constant 0 : index
    %c0_174 = arith.constant 0 : index
    %359 = vector.load %arg19[%c0_173, %c0_174] : memref<1x6xf32, #tpu.memory_space<vmem>>, vector<1x6xf32>
    %360 = vector.broadcast %359 : vector<1x6xf32> to vector<2x6xf32>
    %361 = arith.mulf %358, %360 : vector<2x6xf32>
    %cst_175 = arith.constant dense<0.000000e+00> : vector<2xf32>
    %362 = vector.multi_reduction <add>, %361, %cst_175 [1] : vector<2x6xf32> to vector<2xf32>
    %363 = vector.shape_cast %362 : vector<2xf32> to vector<2x1xf32>
    %c0_176 = arith.constant 0 : index
    %c0_177 = arith.constant 0 : index
    %364 = vector.load %arg20[%c0_176, %c0_177] : memref<1x1xf32, #tpu.memory_space<vmem>>, vector<1x1xf32>
    %365 = vector.broadcast %364 : vector<1x1xf32> to vector<2x1xf32>
    %366 = arith.addf %363, %365 : vector<2x1xf32>
    %cst_178 = arith.constant 0.000000e+00 : f32
    %367 = vector.broadcast %cst_178 : f32 to vector<2x1xf32>
    %368 = arith.maximumf %366, %367 : vector<2x1xf32>
    %c0_179 = arith.constant 0 : index
    %c0_180 = arith.constant 0 : index
    %369 = vector.load %arg21[%c0_179, %c0_180] : memref<2x1xf32, #tpu.memory_space<vmem>>, vector<2x1xf32>
    tpu.vector_store %arg21[%c0_179, %c0_180], %368 {strides = array<i32>} : memref<2x1xf32, #tpu.memory_space<vmem>>, vector<2x1xf32>,
    return
  }
}

</mosaic_0001>

<llo_original>
// kernel: tpu_custom_call.1
$region0: #{tpu_custom_call.1}
  #allocation0 [shape = 'u32[]', space=smem, size = 0x4, offset = 0x4, fixed_abs, tag = 'smem constant byte address 0x4 - core index']
  #allocation1 [shape = 'u32[144,128]{1,0:T(1,128)}', space=vmem, size = 0x12000, scoped, tag = 'internal scratch']
  #allocation2 [shape = 'f32[2,128]{1,0:T(2,128)}', space=vmem, size = 0x400, scoped, tag = 'scratch operand']
  #allocation3 [shape = 'f32[1,1]{1,0:T(1,128)S(1)}', space=vmem, size = 0x200, scoped, tag = 'scoped memory for tpu_custom_call.1']
  %s0 = inlined_call_operand.vmem [shape: f32[2,4,32], index: 0, kind: input, shape index: {}]
  %s1 = inlined_call_operand.vmem [shape: f32[1,32], index: 1, kind: input, shape index: {}]
  %s2 = inlined_call_operand.vmem [shape: f32[8,8], index: 2, kind: input, shape index: {}]
  %s3 = inlined_call_operand.vmem [shape: f32[2,32,96], index: 3, kind: input, shape index: {}]
  %s4 = inlined_call_operand.vmem [shape: f32[2,1,96], index: 4, kind: input, shape index: {}]
  %s5 = inlined_call_operand.vmem [shape: f32[2,32,32], index: 5, kind: input, shape index: {}]
  %s6 = inlined_call_operand.vmem [shape: f32[2,1,32], index: 6, kind: input, shape index: {}]
  %s7 = inlined_call_operand.vmem [shape: f32[2,1,32], index: 7, kind: input, shape index: {}]
  %s8 = inlined_call_operand.vmem [shape: f32[2,1,32], index: 8, kind: input, shape index: {}]
  %s9 = inlined_call_operand.vmem [shape: f32[2,32,64], index: 9, kind: input, shape index: {}]
  %s10 = inlined_call_operand.vmem [shape: f32[2,1,64], index: 10, kind: input, shape index: {}]
  %s11 = inlined_call_operand.vmem [shape: f32[2,64,32], index: 11, kind: input, shape index: {}]
  %s12 = inlined_call_operand.vmem [shape: f32[2,1,32], index: 12, kind: input, shape index: {}]
  %s13 = inlined_call_operand.vmem [shape: f32[2,1,32], index: 13, kind: input, shape index: {}]
  %s14 = inlined_call_operand.vmem [shape: f32[2,1,32], index: 14, kind: input, shape index: {}]
  %s15 = inlined_call_operand.vmem [shape: f32[128,192], index: 15, kind: input, shape index: {}]
  %s16 = inlined_call_operand.vmem [shape: f32[1,192], index: 16, kind: input, shape index: {}]
  %s17 = inlined_call_operand.vmem [shape: f32[192,6], index: 17, kind: input, shape index: {}]
  %s18 = inlined_call_operand.vmem [shape: f32[1,6], index: 18, kind: input, shape index: {}]
  %s19 = inlined_call_operand.vmem [shape: f32[1,6], index: 19, kind: input, shape index: {}]
  %s20 = inlined_call_operand.<no memory space> [shape: f32[1,1], index: 20, kind: input, shape index: {}]
  %s21 = inlined_call_operand.vmem [shape: f32[2,1], index: 21, kind: output, shape index: {}]
  %s22 = sld [smem:[#allocation0]]
  $region94: #{tpu_custom_call.1} parent=0
    _
  %s24 = ssub.s32 1, %s22
  %s25 = scalar_select 0, %s24, %s22
  %v26 = vstv %s20
  %27 = vst [vmem:[#allocation3] sm:$0x1] %v26
  // Predicated region
  $region2: #{tpu_custom_call.1} parent=0 // pred_check
    _
  $region3: #{tpu_custom_call.1} parent=0 // pred_check_branch
    %29 = sbr.rel (0) target = $region5
  $region4: #{tpu_custom_call.1} parent=0 // pred_region
    _
  $region5: #{tpu_custom_call.1} parent=0 // pred_fallthru
    _
  // Predicated region
  $region6: #{tpu_custom_call.1} parent=0 // pred_check
    _
  $region7: #{tpu_custom_call.1} parent=0 // pred_check_branch
    %31 = sbr.rel (0) target = $region9
  $region8: #{tpu_custom_call.1} parent=0 // pred_region
    _
  $region9: #{tpu_custom_call.1} parent=0 // pred_fallthru
    _
  // Predicated region
  $region10: #{tpu_custom_call.1} parent=0 // pred_check
    _
  $region11: #{tpu_custom_call.1} parent=0 // pred_check_branch
    %33 = sbr.rel (0) target = $region13
  $region12: #{tpu_custom_call.1} parent=0 // pred_region
    _
  $region13: #{tpu_custom_call.1} parent=0 // pred_fallthru
    _
  // Predicated region
  $region14: #{tpu_custom_call.1} parent=0 // pred_check
    _
  $region15: #{tpu_custom_call.1} parent=0 // pred_check_branch
    %35 = sbr.rel (0) target = $region17
  $region16: #{tpu_custom_call.1} parent=0 // pred_region
    _
  $region17: #{tpu_custom_call.1} parent=0 // pred_fallthru
    _
  // Predicated region
  $region18: #{tpu_custom_call.1} parent=0 // pred_check
    _
  $region19: #{tpu_custom_call.1} parent=0 // pred_check_branch
    %37 = sbr.rel (0) target = $region21
  $region20: #{tpu_custom_call.1} parent=0 // pred_region
    _
  $region21: #{tpu_custom_call.1} parent=0 // pred_fallthru
    _
  // Predicated region
  $region22: #{tpu_custom_call.1} parent=0 // pred_check
    _
  $region23: #{tpu_custom_call.1} parent=0 // pred_check_branch
    %39 = sbr.rel (0) target = $region25
  $region24: #{tpu_custom_call.1} parent=0 // pred_region
    _
  $region25: #{tpu_custom_call.1} parent=0 // pred_fallthru
    _
  // Predicated region
  $region26: #{tpu_custom_call.1} parent=0 // pred_check
    _
  $region27: #{tpu_custom_call.1} parent=0 // pred_check_branch
    %41 = sbr.rel (0) target = $region29
  $region28: #{tpu_custom_call.1} parent=0 // pred_region
    _
  $region29: #{tpu_custom_call.1} parent=0 // pred_fallthru
    _
  // Predicated region
  $region30: #{tpu_custom_call.1} parent=0 // pred_check
    _
  $region31: #{tpu_custom_call.1} parent=0 // pred_check_branch
    %43 = sbr.rel (0) target = $region33
  $region32: #{tpu_custom_call.1} parent=0 // pred_region
    _
  $region33: #{tpu_custom_call.1} parent=0 // pred_fallthru
    _
  // Predicated region
  $region34: #{tpu_custom_call.1} parent=0 // pred_check
    _
  $region35: #{tpu_custom_call.1} parent=0 // pred_check_branch
    %45 = sbr.rel (0) target = $region37
  $region36: #{tpu_custom_call.1} parent=0 // pred_region
    _
  $region37: #{tpu_custom_call.1} parent=0 // pred_fallthru
    _
  // Predicated region
  $region38: #{tpu_custom_call.1} parent=0 // pred_check
    _
  $region39: #{tpu_custom_call.1} parent=0 // pred_check_branch
    %47 = sbr.rel (0) target = $region41
  $region40: #{tpu_custom_call.1} parent=0 // pred_region
    _
  $region41: #{tpu_custom_call.1} parent=0 // pred_fallthru
    _
  // Predicated region
  $region42: #{tpu_custom_call.1} parent=0 // pred_check
    _
  $region43: #{tpu_custom_call.1} parent=0 // pred_check_branch
    %49 = sbr.rel (0) target = $region45
  $region44: #{tpu_custom_call.1} parent=0 // pred_region
    _
  $region45: #{tpu_custom_call.1} parent=0 // pred_fallthru
    _
  // Predicated region
  $region46: #{tpu_custom_call.1} parent=0 // pred_check
    _
  $region47: #{tpu_custom_call.1} parent=0 // pred_check_branch
    %51 = sbr.rel (0) target = $region49
  $region48: #{tpu_custom_call.1} parent=0 // pred_region
    _
  $region49: #{tpu_custom_call.1} parent=0 // pred_fallthru
    _
  // Predicated region
  $region50: #{tpu_custom_call.1} parent=0 // pred_check
    _
  $region51: #{tpu_custom_call.1} parent=0 // pred_check_branch
    %53 = sbr.rel (0) target = $region53
  $region52: #{tpu_custom_call.1} parent=0 // pred_region
    _
  $region53: #{tpu_custom_call.1} parent=0 // pred_fallthru
    _
  // Predicated region
  $region54: #{tpu_custom_call.1} parent=0 // pred_check
    _
  $region55: #{tpu_custom_call.1} parent=0 // pred_check_branch
    %55 = sbr.rel (0) target = $region57
  $region56: #{tpu_custom_call.1} parent=0 // pred_region
    _
  $region57: #{tpu_custom_call.1} parent=0 // pred_fallthru
    _
  // Predicated region
  $region58: #{tpu_custom_call.1} parent=0 // pred_check
    _
  $region59: #{tpu_custom_call.1} parent=0 // pred_check_branch
    %57 = sbr.rel (0) target = $region61
  $region60: #{tpu_custom_call.1} parent=0 // pred_region
    _
  $region61: #{tpu_custom_call.1} parent=0 // pred_fallthru
    _
  // Predicated region
  $region62: #{tpu_custom_call.1} parent=0 // pred_check
    _
  $region63: #{tpu_custom_call.1} parent=0 // pred_check_branch
    %59 = sbr.rel (0) target = $region65
  $region64: #{tpu_custom_call.1} parent=0 // pred_region
    _
  $region65: #{tpu_custom_call.1} parent=0 // pred_fallthru
    _
  // Predicated region
  $region66: #{tpu_custom_call.1} parent=0 // pred_check
    _
  $region67: #{tpu_custom_call.1} parent=0 // pred_check_branch
    %61 = sbr.rel (0) target = $region69
  $region68: #{tpu_custom_call.1} parent=0 // pred_region
    _
  $region69: #{tpu_custom_call.1} parent=0 // pred_fallthru
    _
  // Predicated region
  $region70: #{tpu_custom_call.1} parent=0 // pred_check
    _
  $region71: #{tpu_custom_call.1} parent=0 // pred_check_branch
    %63 = sbr.rel (0) target = $region73
  $region72: #{tpu_custom_call.1} parent=0 // pred_region
    _
  $region73: #{tpu_custom_call.1} parent=0 // pred_fallthru
    _
  // Predicated region
  $region74: #{tpu_custom_call.1} parent=0 // pred_check
    _
  $region75: #{tpu_custom_call.1} parent=0 // pred_check_branch
    %65 = sbr.rel (0) target = $region77
  $region76: #{tpu_custom_call.1} parent=0 // pred_region
    _
  $region77: #{tpu_custom_call.1} parent=0 // pred_fallthru
    _
  // Predicated region
  $region78: #{tpu_custom_call.1} parent=0 // pred_check
    _
  $region79: #{tpu_custom_call.1} parent=0 // pred_check_branch
    %67 = sbr.rel (0) target = $region81
  $region80: #{tpu_custom_call.1} parent=0 // pred_region
    _
  $region81: #{tpu_custom_call.1} parent=0 // pred_fallthru
    _
  // Predicated region
  $region82: #{tpu_custom_call.1} parent=0 // pred_check
    _
  $region83: #{tpu_custom_call.1} parent=0 // pred_check_branch
    %69 = sbr.rel (0) target = $region85
  $region84: #{tpu_custom_call.1} parent=0 // pred_region
    _
  $region85: #{tpu_custom_call.1} parent=0 // pred_fallthru
    _
  %v70 = vld [vmem:[%s0] sm:$0xf]
  %v71 = vld [vmem:[%s0 + $0x4] sm:$0xf]
  %v72 = vld [vmem:[%s1] sm:$0x1]
  %v74 = vlaneseq
  %v75 = vshrl.u32 %v74, 7
  %v76 = vsub.s32 0, %v75
  %v77 = vrot.slane %v72, %v76
  %v79 = vcombine.high %v77, %v77
  %v81 = vadd.f32 %v70, %v77
  %v82 = vadd.f32 %v71, %v79
  %v83 = vld [vmem:[%s2] sm:$0xff]
  %v84 = vld [vmem:[%s3] sm:$0xff]
  %v85 = vld [vmem:[%s3 + $0x8] sm:$0xff]
  %v86 = vld [vmem:[%s3 + $0x10] sm:$0xff]
  %v87 = vld [vmem:[%s3 + $0x18] sm:$0xff]
  %v88 = vld [vmem:[%s4] sm:$0x1]
  %v90 = vlaneseq
  %v91 = vshrl.u32 %v90, 7
  %v92 = vsub.s32 0, %v91
  %v93 = vrot.slane %v88, %v92
  %v97 = vcombine.low %v81, %v82
  %vm98 = vcmask 261120
  %v99 = vsel %vm98, %v97, 0
  %101 = vmatprep.subr.mxu0 0.0
  %102 = vmatpush1.msra.mxu0 %v84
  %103 = vmatprep.subr.mxu0 0.0
  %104 = vmatpush1.msra.mxu0 %v85
  %105 = vmatprep.subr.mxu0 0.0
  %106 = vmatpush1.msra.mxu0 %v86
  %107 = vmatprep.subr.mxu0 0.0
  %108 = vmatpush1.msra.mxu0 %v87
  %109 = vmatprep.subr.mxu0 0.0
  %110 = vmatpush1.msra.mxu0 0.0
  %111 = vmatprep.subr.mxu0 0.0
  %112 = vmatpush1.msra.mxu0 0.0
  %113 = vmatprep.subr.mxu0 0.0
  %114 = vmatpush1.msra.mxu0 0.0
  %115 = vmatprep.subr.mxu0 0.0
  %116 = vmatpush1.msra.mxu0 0.0
  %117 = vmatprep.subr.mxu0 0.0
  %118 = vmatpush1.msra.mxu0 0.0
  %119 = vmatprep.subr.mxu0 0.0
  %120 = vmatpush1.msra.mxu0 0.0
  %121 = vmatprep.subr.mxu0 0.0
  %122 = vmatpush1.msra.mxu0 0.0
  %123 = vmatprep.subr.mxu0 0.0
  %124 = vmatpush1.msra.mxu0 0.0
  %125 = vmatprep.subr.mxu0 0.0
  %126 = vmatpush1.msra.mxu0 0.0
  %127 = vmatprep.subr.mxu0 0.0
  %128 = vmatpush1.msra.mxu0 0.0
  %129 = vmatprep.subr.mxu0 0.0
  %130 = vmatpush1.msra.mxu0 0.0
  %131 = vmatprep.subr.mxu0 0.0
  %132 = vmatpush1.msra.mxu0 0.0
  %133 = vmatprep.subr.mxu0 0.0
  %134 = vmatpush1.msra.mxu0 0.0
  %135 = vmatprep.subr.mxu0 0.0
  %136 = vmatpush1.msra.mxu0 0.0
  %137 = vmatprep.subr.mxu0 0.0
  %138 = vmatpush1.msra.mxu0 0.0
  %139 = vmatprep.subr.mxu0 0.0
  %140 = vmatpush1.msra.mxu0 0.0
  %141 = vmatprep.subr.mxu0 0.0
  %142 = vmatpush1.msra.mxu0 0.0
  %143 = vmatprep.subr.mxu0 0.0
  %144 = vmatpush1.msra.mxu0 0.0
  %145 = vmatprep.subr.mxu0 0.0
  %146 = vmatpush1.msra.mxu0 0.0
  %147 = vmatprep.subr.mxu0 0.0
  %148 = vmatpush1.msra.mxu0 0.0
  %149 = vmatprep.subr.mxu0 0.0
  %150 = vmatpush1.msra.mxu0 0.0
  %151 = vmatprep.subr.mxu0 0.0
  %152 = vmatpush1.msra.mxu0 0.0
  %153 = vmatprep.subr.mxu0 0.0
  %154 = vmatpush1.msra.mxu0 0.0
  %155 = vmatprep.subr.mxu0 0.0
  %156 = vmatpush1.msra.mxu0 0.0
  %157 = vmatprep.subr.mxu0 0.0
  %158 = vmatpush1.msra.mxu0 0.0
  %159 = vmatprep.subr.mxu0 0.0
  %160 = vmatpush1.msra.mxu0 0.0
  %161 = vmatprep.subr.mxu0 0.0
  %162 = vmatpush1.msra.mxu0 0.0
  %163 = vmatprep.subr.mxu0 0.0
  %164 = vmatpush1.msra.mxu0 0.0
  %165 = vmatprep.mubr.f32.mxu0 0.0
  %166 = vmatmul.mubr.f32.gmra.mrb[0].mxu0 %v99
  %v167 = vpop.f32.mrb[0].mxu0
  %v168 = vadd.f32 %v93, %v167
  %v169 = vpop.f32.mrb[0].mxu0
  %170 = vdwg.mxu0
  %172 = vrot.lane.b32.xlu0 %v168, 96
  %v173 = vpop.permute.xlu0 %172
  %vm174 = vcmask 64512
  %v175 = vsel %vm174, %v168, 0
  %v177 = vsel %vm174, %v173, 0
  %179 = vmatprep.subr.mxu0 0.0
  %180 = vmatpush1.xpose.msra.mxu0 %v177
  %181 = vmatprep.subr.mxu0 0.0
  %182 = vmatpush1.xpose.msra.mxu0 0.0
  %183 = vmatprep.subr.mxu0 0.0
  %184 = vmatpush1.xpose.msra.mxu0 0.0
  %185 = vmatprep.subr.mxu0 0.0
  %186 = vmatpush1.xpose.msra.mxu0 0.0
  %187 = vmatprep.subr.mxu0 0.0
  %188 = vmatpush1.xpose.msra.mxu0 0.0
  %189 = vmatprep.subr.mxu0 0.0
  %190 = vmatpush1.xpose.msra.mxu0 0.0
  %191 = vmatprep.subr.mxu0 0.0
  %192 = vmatpush1.xpose.msra.mxu0 0.0
  %193 = vmatprep.subr.mxu0 0.0
  %194 = vmatpush1.xpose.msra.mxu0 0.0
  %195 = vmatprep.subr.mxu0 0.0
  %196 = vmatpush1.xpose.msra.mxu0 0.0
  %197 = vmatprep.subr.mxu0 0.0
  %198 = vmatpush1.xpose.msra.mxu0 0.0
  %199 = vmatprep.subr.mxu0 0.0
  %200 = vmatpush1.xpose.msra.mxu0 0.0
  %201 = vmatprep.subr.mxu0 0.0
  %202 = vmatpush1.xpose.msra.mxu0 0.0
  %203 = vmatprep.subr.mxu0 0.0
  %204 = vmatpush1.xpose.msra.mxu0 0.0
  %205 = vmatprep.subr.mxu0 0.0
  %206 = vmatpush1.xpose.msra.mxu0 0.0
  %207 = vmatprep.subr.mxu0 0.0
  %208 = vmatpush1.xpose.msra.mxu0 0.0
  %209 = vmatprep.subr.mxu0 0.0
  %210 = vmatpush1.xpose.msra.mxu0 0.0
  %211 = vmatprep.subr.mxu0 0.0
  %212 = vmatpush1.xpose.msra.mxu0 0.0
  %213 = vmatprep.subr.mxu0 0.0
  %214 = vmatpush1.xpose.msra.mxu0 0.0
  %215 = vmatprep.subr.mxu0 0.0
  %216 = vmatpush1.xpose.msra.mxu0 0.0
  %217 = vmatprep.subr.mxu0 0.0
  %218 = vmatpush1.xpose.msra.mxu0 0.0
  %219 = vmatprep.subr.mxu0 0.0
  %220 = vmatpush1.xpose.msra.mxu0 0.0
  %221 = vmatprep.subr.mxu0 0.0
  %222 = vmatpush1.xpose.msra.mxu0 0.0
  %223 = vmatprep.subr.mxu0 0.0
  %224 = vmatpush1.xpose.msra.mxu0 0.0
  %225 = vmatprep.subr.mxu0 0.0
  %226 = vmatpush1.xpose.msra.mxu0 0.0
  %227 = vmatprep.subr.mxu0 0.0
  %228 = vmatpush1.xpose.msra.mxu0 0.0
  %229 = vmatprep.subr.mxu0 0.0
  %230 = vmatpush1.xpose.msra.mxu0 0.0
  %231 = vmatprep.subr.mxu0 0.0
  %232 = vmatpush1.xpose.msra.mxu0 0.0
  %233 = vmatprep.subr.mxu0 0.0
  %234 = vmatpush1.xpose.msra.mxu0 0.0
  %235 = vmatprep.subr.mxu0 0.0
  %236 = vmatpush1.xpose.msra.mxu0 0.0
  %237 = vmatprep.subr.mxu0 0.0
  %238 = vmatpush1.xpose.msra.mxu0 0.0
  %239 = vmatprep.subr.mxu0 0.0
  %240 = vmatpush1.xpose.msra.mxu0 0.0
  %241 = vmatprep.subr.mxu0 0.0
  %242 = vmatpush1.xpose.msra.mxu0 0.0
  %243 = vmatprep.mubr.f32.mxu0 0.0
  %244 = vmatmul.mubr.f32.gmra.mrb[0].mxu0 %v175
  %v245 = vpop.f32.mrb[0].mxu0
  %v246 = vadd.f32 %v83, %v245
  %v247 = vpop.f32.mrb[0].mxu0
  %248 = vdwg.mxu0
  %v249 = vsel %vm174, %v246, -inf
  %250 = vmax.xlane.f32.xlu0 %v249
  %v251 = vpop.xlane.xlu0 %250
  %v252 = vsub.f32 %v246, %v251
  %v253 = vmul.f32 %v252, 1.442695
  %v254 = vpow.pop %v253
  %v255 = vsel %vm174, %v254, 0.0
  %256 = vadd.xlane.f32.xlu0 %v255
  %v257 = vpop.xlane.xlu0 %256
  %v258 = vrcp.pop %v257
  %v259 = vmul.f32 %v257, %v258
  %v260 = vsub.f32 2.0, %v259
  %v261 = vmul.f32 %v258, %v260
  %v262 = vmul.f32 %v254, %v261
  %263 = vrot.lane.b32.xlu0 %v168, 64
  %v264 = vpop.permute.xlu0 %263
  %v267 = vsel %vm174, %v262, 0
  %269 = vmatprep.subr.mxu0 0.0
  %270 = vmatpush1.msra.mxu0 %v264
  %271 = vmatprep.subr.mxu0 0.0
  %272 = vmatpush1.msra.mxu0 0.0
  %273 = vmatprep.subr.mxu0 0.0
  %274 = vmatpush1.msra.mxu0 0.0
  %275 = vmatprep.subr.mxu0 0.0
  %276 = vmatpush1.msra.mxu0 0.0
  %277 = vmatprep.subr.mxu0 0.0
  %278 = vmatpush1.msra.mxu0 0.0
  %279 = vmatprep.subr.mxu0 0.0
  %280 = vmatpush1.msra.mxu0 0.0
  %281 = vmatprep.subr.mxu0 0.0
  %282 = vmatpush1.msra.mxu0 0.0
  %283 = vmatprep.subr.mxu0 0.0
  %284 = vmatpush1.msra.mxu0 0.0
  %285 = vmatprep.subr.mxu0 0.0
  %286 = vmatpush1.msra.mxu0 0.0
  %287 = vmatprep.subr.mxu0 0.0
  %288 = vmatpush1.msra.mxu0 0.0
  %289 = vmatprep.subr.mxu0 0.0
  %290 = vmatpush1.msra.mxu0 0.0
  %291 = vmatprep.subr.mxu0 0.0
  %292 = vmatpush1.msra.mxu0 0.0
  %293 = vmatprep.subr.mxu0 0.0
  %294 = vmatpush1.msra.mxu0 0.0
  %295 = vmatprep.subr.mxu0 0.0
  %296 = vmatpush1.msra.mxu0 0.0
  %297 = vmatprep.subr.mxu0 0.0
  %298 = vmatpush1.msra.mxu0 0.0
  %299 = vmatprep.subr.mxu0 0.0
  %300 = vmatpush1.msra.mxu0 0.0
  %301 = vmatprep.subr.mxu0 0.0
  %302 = vmatpush1.msra.mxu0 0.0
  %303 = vmatprep.subr.mxu0 0.0
  %304 = vmatpush1.msra.mxu0 0.0
  %305 = vmatprep.subr.mxu0 0.0
  %306 = vmatpush1.msra.mxu0 0.0
  %307 = vmatprep.subr.mxu0 0.0
  %308 = vmatpush1.msra.mxu0 0.0
  %309 = vmatprep.subr.mxu0 0.0
  %310 = vmatpush1.msra.mxu0 0.0
  %311 = vmatprep.subr.mxu0 0.0
  %312 = vmatpush1.msra.mxu0 0.0
  %313 = vmatprep.subr.mxu0 0.0
  %314 = vmatpush1.msra.mxu0 0.0
  %315 = vmatprep.subr.mxu0 0.0
  %316 = vmatpush1.msra.mxu0 0.0
  %317 = vmatprep.subr.mxu0 0.0
  %318 = vmatpush1.msra.mxu0 0.0
  %319 = vmatprep.subr.mxu0 0.0
  %320 = vmatpush1.msra.mxu0 0.0
  %321 = vmatprep.subr.mxu0 0.0
  %322 = vmatpush1.msra.mxu0 0.0
  %323 = vmatprep.subr.mxu0 0.0
  %324 = vmatpush1.msra.mxu0 0.0
  %325 = vmatprep.subr.mxu0 0.0
  %326 = vmatpush1.msra.mxu0 0.0
  %327 = vmatprep.subr.mxu0 0.0
  %328 = vmatpush1.msra.mxu0 0.0
  %329 = vmatprep.subr.mxu0 0.0
  %330 = vmatpush1.msra.mxu0 0.0
  %331 = vmatprep.subr.mxu0 0.0
  %332 = vmatpush1.msra.mxu0 0.0
  %333 = vmatprep.mubr.f32.mxu0 0.0
  %334 = vmatmul.mubr.f32.gmra.mrb[0].mxu0 %v267
  %v335 = vpop.f32.mrb[0].mxu0
  %v336 = vadd.f32 0.0, %v335
  %v337 = vpop.f32.mrb[0].mxu0
  %338 = vdwg.mxu0
  %339 = vrot.lane.b32.xlu0 %v168, 120
  %v340 = vpop.permute.xlu0 %339
  %341 = vrot.lane.b32.xlu0 %v168, 88
  %v342 = vpop.permute.xlu0 %341
  %v343 = vsel %vm174, %v340, 0
  %v345 = vsel %vm174, %v342, 0
  %347 = vmatprep.subr.mxu0 0.0
  %348 = vmatpush1.xpose.msra.mxu0 %v345
  %349 = vmatprep.subr.mxu0 0.0
  %350 = vmatpush1.xpose.msra.mxu0 0.0
  %351 = vmatprep.subr.mxu0 0.0
  %352 = vmatpush1.xpose.msra.mxu0 0.0
  %353 = vmatprep.subr.mxu0 0.0
  %354 = vmatpush1.xpose.msra.mxu0 0.0
  %355 = vmatprep.subr.mxu0 0.0
  %356 = vmatpush1.xpose.msra.mxu0 0.0
  %357 = vmatprep.subr.mxu0 0.0
  %358 = vmatpush1.xpose.msra.mxu0 0.0
  %359 = vmatprep.subr.mxu0 0.0
  %360 = vmatpush1.xpose.msra.mxu0 0.0
  %361 = vmatprep.subr.mxu0 0.0
  %362 = vmatpush1.xpose.msra.mxu0 0.0
  %363 = vmatprep.subr.mxu0 0.0
  %364 = vmatpush1.xpose.msra.mxu0 0.0
  %365 = vmatprep.subr.mxu0 0.0
  %366 = vmatpush1.xpose.msra.mxu0 0.0
  %367 = vmatprep.subr.mxu0 0.0
  %368 = vmatpush1.xpose.msra.mxu0 0.0
  %369 = vmatprep.subr.mxu0 0.0
  %370 = vmatpush1.xpose.msra.mxu0 0.0
  %371 = vmatprep.subr.mxu0 0.0
  %372 = vmatpush1.xpose.msra.mxu0 0.0
  %373 = vmatprep.subr.mxu0 0.0
  %374 = vmatpush1.xpose.msra.mxu0 0.0
  %375 = vmatprep.subr.mxu0 0.0
  %376 = vmatpush1.xpose.msra.mxu0 0.0
  %377 = vmatprep.subr.mxu0 0.0
  %378 = vmatpush1.xpose.msra.mxu0 0.0
  %379 = vmatprep.subr.mxu0 0.0
  %380 = vmatpush1.xpose.msra.mxu0 0.0
  %381 = vmatprep.subr.mxu0 0.0
  %382 = vmatpush1.xpose.msra.mxu0 0.0
  %383 = vmatprep.subr.mxu0 0.0
  %384 = vmatpush1.xpose.msra.mxu0 0.0
  %385 = vmatprep.subr.mxu0 0.0
  %386 = vmatpush1.xpose.msra.mxu0 0.0
  %387 = vmatprep.subr.mxu0 0.0
  %388 = vmatpush1.xpose.msra.mxu0 0.0
  %389 = vmatprep.subr.mxu0 0.0
  %390 = vmatpush1.xpose.msra.mxu0 0.0
  %391 = vmatprep.subr.mxu0 0.0
  %392 = vmatpush1.xpose.msra.mxu0 0.0
  %393 = vmatprep.subr.mxu0 0.0
  %394 = vmatpush1.xpose.msra.mxu0 0.0
  %395 = vmatprep.subr.mxu0 0.0
  %396 = vmatpush1.xpose.msra.mxu0 0.0
  %397 = vmatprep.subr.mxu0 0.0
  %398 = vmatpush1.xpose.msra.mxu0 0.0
  %399 = vmatprep.subr.mxu0 0.0
  %400 = vmatpush1.xpose.msra.mxu0 0.0
  %401 = vmatprep.subr.mxu0 0.0
  %402 = vmatpush1.xpose.msra.mxu0 0.0
  %403 = vmatprep.subr.mxu0 0.0
  %404 = vmatpush1.xpose.msra.mxu0 0.0
  %405 = vmatprep.subr.mxu0 0.0
  %406 = vmatpush1.xpose.msra.mxu0 0.0
  %407 = vmatprep.subr.mxu0 0.0
  %408 = vmatpush1.xpose.msra.mxu0 0.0
  %409 = vmatprep.subr.mxu0 0.0
  %410 = vmatpush1.xpose.msra.mxu0 0.0
  %411 = vmatprep.mubr.f32.mxu0 0.0
  %412 = vmatmul.mubr.f32.gmra.mrb[0].mxu0 %v343
  %v413 = vpop.f32.mrb[0].mxu0
  %v414 = vadd.f32 %v83, %v413
  %v415 = vpop.f32.mrb[0].mxu0
  %416 = vdwg.mxu0
  %v417 = vsel %vm174, %v414, -inf
  %418 = vmax.xlane.f32.xlu0 %v417
  %v419 = vpop.xlane.xlu0 %418
  %v420 = vsub.f32 %v414, %v419
  %v421 = vmul.f32 %v420, 1.442695
  %v422 = vpow.pop %v421
  %v423 = vsel %vm174, %v422, 0.0
  %424 = vadd.xlane.f32.xlu0 %v423
  %v425 = vpop.xlane.xlu0 %424
  %v426 = vrcp.pop %v425
  %v427 = vmul.f32 %v425, %v426
  %v428 = vsub.f32 2.0, %v427
  %v429 = vmul.f32 %v426, %v428
  %v430 = vmul.f32 %v422, %v429
  %431 = vrot.lane.b32.xlu0 %v168, 56
  %v432 = vpop.permute.xlu0 %431
  %v435 = vsel %vm174, %v430, 0
  %437 = vmatprep.subr.mxu0 0.0
  %438 = vmatpush1.msra.mxu0 %v432
  %439 = vmatprep.subr.mxu0 0.0
  %440 = vmatpush1.msra.mxu0 0.0
  %441 = vmatprep.subr.mxu0 0.0
  %442 = vmatpush1.msra.mxu0 0.0
  %443 = vmatprep.subr.mxu0 0.0
  %444 = vmatpush1.msra.mxu0 0.0
  %445 = vmatprep.subr.mxu0 0.0
  %446 = vmatpush1.msra.mxu0 0.0
  %447 = vmatprep.subr.mxu0 0.0
  %448 = vmatpush1.msra.mxu0 0.0
  %449 = vmatprep.subr.mxu0 0.0
  %450 = vmatpush1.msra.mxu0 0.0
  %451 = vmatprep.subr.mxu0 0.0
  %452 = vmatpush1.msra.mxu0 0.0
  %453 = vmatprep.subr.mxu0 0.0
  %454 = vmatpush1.msra.mxu0 0.0
  %455 = vmatprep.subr.mxu0 0.0
  %456 = vmatpush1.msra.mxu0 0.0
  %457 = vmatprep.subr.mxu0 0.0
  %458 = vmatpush1.msra.mxu0 0.0
  %459 = vmatprep.subr.mxu0 0.0
  %460 = vmatpush1.msra.mxu0 0.0
  %461 = vmatprep.subr.mxu0 0.0
  %462 = vmatpush1.msra.mxu0 0.0
  %463 = vmatprep.subr.mxu0 0.0
  %464 = vmatpush1.msra.mxu0 0.0
  %465 = vmatprep.subr.mxu0 0.0
  %466 = vmatpush1.msra.mxu0 0.0
  %467 = vmatprep.subr.mxu0 0.0
  %468 = vmatpush1.msra.mxu0 0.0
  %469 = vmatprep.subr.mxu0 0.0
  %470 = vmatpush1.msra.mxu0 0.0
  %471 = vmatprep.subr.mxu0 0.0
  %472 = vmatpush1.msra.mxu0 0.0
  %473 = vmatprep.subr.mxu0 0.0
  %474 = vmatpush1.msra.mxu0 0.0
  %475 = vmatprep.subr.mxu0 0.0
  %476 = vmatpush1.msra.mxu0 0.0
  %477 = vmatprep.subr.mxu0 0.0
  %478 = vmatpush1.msra.mxu0 0.0
  %479 = vmatprep.subr.mxu0 0.0
  %480 = vmatpush1.msra.mxu0 0.0
  %481 = vmatprep.subr.mxu0 0.0
  %482 = vmatpush1.msra.mxu0 0.0
  %483 = vmatprep.subr.mxu0 0.0
  %484 = vmatpush1.msra.mxu0 0.0
  %485 = vmatprep.subr.mxu0 0.0
  %486 = vmatpush1.msra.mxu0 0.0
  %487 = vmatprep.subr.mxu0 0.0
  %488 = vmatpush1.msra.mxu0 0.0
  %489 = vmatprep.subr.mxu0 0.0
  %490 = vmatpush1.msra.mxu0 0.0
  %491 = vmatprep.subr.mxu0 0.0
  %492 = vmatpush1.msra.mxu0 0.0
  %493 = vmatprep.subr.mxu0 0.0
  %494 = vmatpush1.msra.mxu0 0.0
  %495 = vmatprep.subr.mxu0 0.0
  %496 = vmatpush1.msra.mxu0 0.0
  %497 = vmatprep.subr.mxu0 0.0
  %498 = vmatpush1.msra.mxu0 0.0
  %499 = vmatprep.subr.mxu0 0.0
  %500 = vmatpush1.msra.mxu0 0.0
  %501 = vmatprep.mubr.f32.mxu0 0.0
  %502 = vmatmul.mubr.f32.gmra.mrb[0].mxu0 %v435
  %v503 = vpop.f32.mrb[0].mxu0
  %v504 = vadd.f32 0.0, %v503
  %v505 = vpop.f32.mrb[0].mxu0
  %506 = vdwg.mxu0
  %507 = vrot.lane.b32.xlu0 %v168, 112
  %v508 = vpop.permute.xlu0 %507
  %509 = vrot.lane.b32.xlu0 %v168, 80
  %v510 = vpop.permute.xlu0 %509
  %v511 = vsel %vm174, %v508, 0
  %v513 = vsel %vm174, %v510, 0
  %515 = vmatprep.subr.mxu0 0.0
  %516 = vmatpush1.xpose.msra.mxu0 %v513
  %517 = vmatprep.subr.mxu0 0.0
  %518 = vmatpush1.xpose.msra.mxu0 0.0
  %519 = vmatprep.subr.mxu0 0.0
  %520 = vmatpush1.xpose.msra.mxu0 0.0
  %521 = vmatprep.subr.mxu0 0.0
  %522 = vmatpush1.xpose.msra.mxu0 0.0
  %523 = vmatprep.subr.mxu0 0.0
  %524 = vmatpush1.xpose.msra.mxu0 0.0
  %525 = vmatprep.subr.mxu0 0.0
  %526 = vmatpush1.xpose.msra.mxu0 0.0
  %527 = vmatprep.subr.mxu0 0.0
  %528 = vmatpush1.xpose.msra.mxu0 0.0
  %529 = vmatprep.subr.mxu0 0.0
  %530 = vmatpush1.xpose.msra.mxu0 0.0
  %531 = vmatprep.subr.mxu0 0.0
  %532 = vmatpush1.xpose.msra.mxu0 0.0
  %533 = vmatprep.subr.mxu0 0.0
  %534 = vmatpush1.xpose.msra.mxu0 0.0
  %535 = vmatprep.subr.mxu0 0.0
  %536 = vmatpush1.xpose.msra.mxu0 0.0
  %537 = vmatprep.subr.mxu0 0.0
  %538 = vmatpush1.xpose.msra.mxu0 0.0
  %539 = vmatprep.subr.mxu0 0.0
  %540 = vmatpush1.xpose.msra.mxu0 0.0
  %541 = vmatprep.subr.mxu0 0.0
  %542 = vmatpush1.xpose.msra.mxu0 0.0
  %543 = vmatprep.subr.mxu0 0.0
  %544 = vmatpush1.xpose.msra.mxu0 0.0
  %545 = vmatprep.subr.mxu0 0.0
  %546 = vmatpush1.xpose.msra.mxu0 0.0
  %547 = vmatprep.subr.mxu0 0.0
  %548 = vmatpush1.xpose.msra.mxu0 0.0
  %549 = vmatprep.subr.mxu0 0.0
  %550 = vmatpush1.xpose.msra.mxu0 0.0
  %551 = vmatprep.subr.mxu0 0.0
  %552 = vmatpush1.xpose.msra.mxu0 0.0
  %553 = vmatprep.subr.mxu0 0.0
  %554 = vmatpush1.xpose.msra.mxu0 0.0
  %555 = vmatprep.subr.mxu0 0.0
  %556 = vmatpush1.xpose.msra.mxu0 0.0
  %557 = vmatprep.subr.mxu0 0.0
  %558 = vmatpush1.xpose.msra.mxu0 0.0
  %559 = vmatprep.subr.mxu0 0.0
  %560 = vmatpush1.xpose.msra.mxu0 0.0
  %561 = vmatprep.subr.mxu0 0.0
  %562 = vmatpush1.xpose.msra.mxu0 0.0
  %563 = vmatprep.subr.mxu0 0.0
  %564 = vmatpush1.xpose.msra.mxu0 0.0
  %565 = vmatprep.subr.mxu0 0.0
  %566 = vmatpush1.xpose.msra.mxu0 0.0
  %567 = vmatprep.subr.mxu0 0.0
  %568 = vmatpush1.xpose.msra.mxu0 0.0
  %569 = vmatprep.subr.mxu0 0.0
  %570 = vmatpush1.xpose.msra.mxu0 0.0
  %571 = vmatprep.subr.mxu0 0.0
  %572 = vmatpush1.xpose.msra.mxu0 0.0
  %573 = vmatprep.subr.mxu0 0.0
  %574 = vmatpush1.xpose.msra.mxu0 0.0
  %575 = vmatprep.subr.mxu0 0.0
  %576 = vmatpush1.xpose.msra.mxu0 0.0
  %577 = vmatprep.subr.mxu0 0.0
  %578 = vmatpush1.xpose.msra.mxu0 0.0
  %579 = vmatprep.mubr.f32.mxu0 0.0
  %580 = vmatmul.mubr.f32.gmra.mrb[0].mxu0 %v511
  %v581 = vpop.f32.mrb[0].mxu0
  %v582 = vadd.f32 %v83, %v581
  %v583 = vpop.f32.mrb[0].mxu0
  %584 = vdwg.mxu0
  %v585 = vsel %vm174, %v582, -inf
  %586 = vmax.xlane.f32.xlu0 %v585
  %v587 = vpop.xlane.xlu0 %586
  %v588 = vsub.f32 %v582, %v587
  %v589 = vmul.f32 %v588, 1.442695
  %v590 = vpow.pop %v589
  %v591 = vsel %vm174, %v590, 0.0
  %592 = vadd.xlane.f32.xlu0 %v591
  %v593 = vpop.xlane.xlu0 %592
  %v594 = vrcp.pop %v593
  %v595 = vmul.f32 %v593, %v594
  %v596 = vsub.f32 2.0, %v595
  %v597 = vmul.f32 %v594, %v596
  %v598 = vmul.f32 %v590, %v597
  %599 = vrot.lane.b32.xlu0 %v168, 48
  %v600 = vpop.permute.xlu0 %599
  %v603 = vsel %vm174, %v598, 0
  %605 = vmatprep.subr.mxu0 0.0
  %606 = vmatpush1.msra.mxu0 %v600
  %607 = vmatprep.subr.mxu0 0.0
  %608 = vmatpush1.msra.mxu0 0.0
  %609 = vmatprep.subr.mxu0 0.0
  %610 = vmatpush1.msra.mxu0 0.0
  %611 = vmatprep.subr.mxu0 0.0
  %612 = vmatpush1.msra.mxu0 0.0
  %613 = vmatprep.subr.mxu0 0.0
  %614 = vmatpush1.msra.mxu0 0.0
  %615 = vmatprep.subr.mxu0 0.0
  %616 = vmatpush1.msra.mxu0 0.0
  %617 = vmatprep.subr.mxu0 0.0
  %618 = vmatpush1.msra.mxu0 0.0
  %619 = vmatprep.subr.mxu0 0.0
  %620 = vmatpush1.msra.mxu0 0.0
  %621 = vmatprep.subr.mxu0 0.0
  %622 = vmatpush1.msra.mxu0 0.0
  %623 = vmatprep.subr.mxu0 0.0
  %624 = vmatpush1.msra.mxu0 0.0
  %625 = vmatprep.subr.mxu0 0.0
  %626 = vmatpush1.msra.mxu0 0.0
  %627 = vmatprep.subr.mxu0 0.0
  %628 = vmatpush1.msra.mxu0 0.0
  %629 = vmatprep.subr.mxu0 0.0
  %630 = vmatpush1.msra.mxu0 0.0
  %631 = vmatprep.subr.mxu0 0.0
  %632 = vmatpush1.msra.mxu0 0.0
  %633 = vmatprep.subr.mxu0 0.0
  %634 = vmatpush1.msra.mxu0 0.0
  %635 = vmatprep.subr.mxu0 0.0
  %636 = vmatpush1.msra.mxu0 0.0
  %637 = vmatprep.subr.mxu0 0.0
  %638 = vmatpush1.msra.mxu0 0.0
  %639 = vmatprep.subr.mxu0 0.0
  %640 = vmatpush1.msra.mxu0 0.0
  %641 = vmatprep.subr.mxu0 0.0
  %642 = vmatpush1.msra.mxu0 0.0
  %643 = vmatprep.subr.mxu0 0.0
  %644 = vmatpush1.msra.mxu0 0.0
  %645 = vmatprep.subr.mxu0 0.0
  %646 = vmatpush1.msra.mxu0 0.0
  %647 = vmatprep.subr.mxu0 0.0
  %648 = vmatpush1.msra.mxu0 0.0
  %649 = vmatprep.subr.mxu0 0.0
  %650 = vmatpush1.msra.mxu0 0.0
  %651 = vmatprep.subr.mxu0 0.0
  %652 = vmatpush1.msra.mxu0 0.0
  %653 = vmatprep.subr.mxu0 0.0
  %654 = vmatpush1.msra.mxu0 0.0
  %655 = vmatprep.subr.mxu0 0.0
  %656 = vmatpush1.msra.mxu0 0.0
  %657 = vmatprep.subr.mxu0 0.0
  %658 = vmatpush1.msra.mxu0 0.0
  %659 = vmatprep.subr.mxu0 0.0
  %660 = vmatpush1.msra.mxu0 0.0
  %661 = vmatprep.subr.mxu0 0.0
  %662 = vmatpush1.msra.mxu0 0.0
  %663 = vmatprep.subr.mxu0 0.0
  %664 = vmatpush1.msra.mxu0 0.0
  %665 = vmatprep.subr.mxu0 0.0
  %666 = vmatpush1.msra.mxu0 0.0
  %667 = vmatprep.subr.mxu0 0.0
  %668 = vmatpush1.msra.mxu0 0.0
  %669 = vmatprep.mubr.f32.mxu0 0.0
  %670 = vmatmul.mubr.f32.gmra.mrb[0].mxu0 %v603
  %v671 = vpop.f32.mrb[0].mxu0
  %v672 = vadd.f32 0.0, %v671
  %v673 = vpop.f32.mrb[0].mxu0
  %674 = vdwg.mxu0
  %675 = vrot.lane.b32.xlu0 %v168, 104
  %v676 = vpop.permute.xlu0 %675
  %677 = vrot.lane.b32.xlu0 %v168, 72
  %v678 = vpop.permute.xlu0 %677
  %v679 = vsel %vm174, %v676, 0
  %v681 = vsel %vm174, %v678, 0
  %683 = vmatprep.subr.mxu0 0.0
  %684 = vmatpush1.xpose.msra.mxu0 %v681
  %685 = vmatprep.subr.mxu0 0.0
  %686 = vmatpush1.xpose.msra.mxu0 0.0
  %687 = vmatprep.subr.mxu0 0.0
  %688 = vmatpush1.xpose.msra.mxu0 0.0
  %689 = vmatprep.subr.mxu0 0.0
  %690 = vmatpush1.xpose.msra.mxu0 0.0
  %691 = vmatprep.subr.mxu0 0.0
  %692 = vmatpush1.xpose.msra.mxu0 0.0
  %693 = vmatprep.subr.mxu0 0.0
  %694 = vmatpush1.xpose.msra.mxu0 0.0
  %695 = vmatprep.subr.mxu0 0.0
  %696 = vmatpush1.xpose.msra.mxu0 0.0
  %697 = vmatprep.subr.mxu0 0.0
  %698 = vmatpush1.xpose.msra.mxu0 0.0
  %699 = vmatprep.subr.mxu0 0.0
  %700 = vmatpush1.xpose.msra.mxu0 0.0
  %701 = vmatprep.subr.mxu0 0.0
  %702 = vmatpush1.xpose.msra.mxu0 0.0
  %703 = vmatprep.subr.mxu0 0.0
  %704 = vmatpush1.xpose.msra.mxu0 0.0
  %705 = vmatprep.subr.mxu0 0.0
  %706 = vmatpush1.xpose.msra.mxu0 0.0
  %707 = vmatprep.subr.mxu0 0.0
  %708 = vmatpush1.xpose.msra.mxu0 0.0
  %709 = vmatprep.subr.mxu0 0.0
  %710 = vmatpush1.xpose.msra.mxu0 0.0
  %711 = vmatprep.subr.mxu0 0.0
  %712 = vmatpush1.xpose.msra.mxu0 0.0
  %713 = vmatprep.subr.mxu0 0.0
  %714 = vmatpush1.xpose.msra.mxu0 0.0
  %715 = vmatprep.subr.mxu0 0.0
  %716 = vmatpush1.xpose.msra.mxu0 0.0
  %717 = vmatprep.subr.mxu0 0.0
  %718 = vmatpush1.xpose.msra.mxu0 0.0
  %719 = vmatprep.subr.mxu0 0.0
  %720 = vmatpush1.xpose.msra.mxu0 0.0
  %721 = vmatprep.subr.mxu0 0.0
  %722 = vmatpush1.xpose.msra.mxu0 0.0
  %723 = vmatprep.subr.mxu0 0.0
  %724 = vmatpush1.xpose.msra.mxu0 0.0
  %725 = vmatprep.subr.mxu0 0.0
  %726 = vmatpush1.xpose.msra.mxu0 0.0
  %727 = vmatprep.subr.mxu0 0.0
  %728 = vmatpush1.xpose.msra.mxu0 0.0
  %729 = vmatprep.subr.mxu0 0.0
  %730 = vmatpush1.xpose.msra.mxu0 0.0
  %731 = vmatprep.subr.mxu0 0.0
  %732 = vmatpush1.xpose.msra.mxu0 0.0
  %733 = vmatprep.subr.mxu0 0.0
  %734 = vmatpush1.xpose.msra.mxu0 0.0
  %735 = vmatprep.subr.mxu0 0.0
  %736 = vmatpush1.xpose.msra.mxu0 0.0
  %737 = vmatprep.subr.mxu0 0.0
  %738 = vmatpush1.xpose.msra.mxu0 0.0
  %739 = vmatprep.subr.mxu0 0.0
  %740 = vmatpush1.xpose.msra.mxu0 0.0
  %741 = vmatprep.subr.mxu0 0.0
  %742 = vmatpush1.xpose.msra.mxu0 0.0
  %743 = vmatprep.subr.mxu0 0.0
  %744 = vmatpush1.xpose.msra.mxu0 0.0
  %745 = vmatprep.subr.mxu0 0.0
  %746 = vmatpush1.xpose.msra.mxu0 0.0
  %747 = vmatprep.mubr.f32.mxu0 0.0
  %748 = vmatmul.mubr.f32.gmra.mrb[0].mxu0 %v679
  %v749 = vpop.f32.mrb[0].mxu0
  %v750 = vadd.f32 %v83, %v749
  %v751 = vpop.f32.mrb[0].mxu0
  %752 = vdwg.mxu0
  %v753 = vsel %vm174, %v750, -inf
  %754 = vmax.xlane.f32.xlu0 %v753
  %v755 = vpop.xlane.xlu0 %754
  %v756 = vsub.f32 %v750, %v755
  %v757 = vmul.f32 %v756, 1.442695
  %v758 = vpow.pop %v757
  %v759 = vsel %vm174, %v758, 0.0
  %760 = vadd.xlane.f32.xlu0 %v759
  %v761 = vpop.xlane.xlu0 %760
  %v762 = vrcp.pop %v761
  %v763 = vmul.f32 %v761, %v762
  %v764 = vsub.f32 2.0, %v763
  %v765 = vmul.f32 %v762, %v764
  %v766 = vmul.f32 %v758, %v765
  %767 = vrot.lane.b32.xlu0 %v168, 40
  %v768 = vpop.permute.xlu0 %767
  %v771 = vsel %vm174, %v766, 0
  %773 = vmatprep.subr.mxu0 0.0
  %774 = vmatpush1.msra.mxu0 %v768
  %775 = vmatprep.subr.mxu0 0.0
  %776 = vmatpush1.msra.mxu0 0.0
  %777 = vmatprep.subr.mxu0 0.0
  %778 = vmatpush1.msra.mxu0 0.0
  %779 = vmatprep.subr.mxu0 0.0
  %780 = vmatpush1.msra.mxu0 0.0
  %781 = vmatprep.subr.mxu0 0.0
  %782 = vmatpush1.msra.mxu0 0.0
  %783 = vmatprep.subr.mxu0 0.0
  %784 = vmatpush1.msra.mxu0 0.0
  %785 = vmatprep.subr.mxu0 0.0
  %786 = vmatpush1.msra.mxu0 0.0
  %787 = vmatprep.subr.mxu0 0.0
  %788 = vmatpush1.msra.mxu0 0.0
  %789 = vmatprep.subr.mxu0 0.0
  %790 = vmatpush1.msra.mxu0 0.0
  %791 = vmatprep.subr.mxu0 0.0
  %792 = vmatpush1.msra.mxu0 0.0
  %793 = vmatprep.subr.mxu0 0.0
  %794 = vmatpush1.msra.mxu0 0.0
  %795 = vmatprep.subr.mxu0 0.0
  %796 = vmatpush1.msra.mxu0 0.0
  %797 = vmatprep.subr.mxu0 0.0
  %798 = vmatpush1.msra.mxu0 0.0
  %799 = vmatprep.subr.mxu0 0.0
  %800 = vmatpush1.msra.mxu0 0.0
  %801 = vmatprep.subr.mxu0 0.0
  %802 = vmatpush1.msra.mxu0 0.0
  %803 = vmatprep.subr.mxu0 0.0
  %804 = vmatpush1.msra.mxu0 0.0
  %805 = vmatprep.subr.mxu0 0.0
  %806 = vmatpush1.msra.mxu0 0.0
  %807 = vmatprep.subr.mxu0 0.0
  %808 = vmatpush1.msra.mxu0 0.0
  %809 = vmatprep.subr.mxu0 0.0
  %810 = vmatpush1.msra.mxu0 0.0
  %811 = vmatprep.subr.mxu0 0.0
  %812 = vmatpush1.msra.mxu0 0.0
  %813 = vmatprep.subr.mxu0 0.0
  %814 = vmatpush1.msra.mxu0 0.0
  %815 = vmatprep.subr.mxu0 0.0
  %816 = vmatpush1.msra.mxu0 0.0
  %817 = vmatprep.subr.mxu0 0.0
  %818 = vmatpush1.msra.mxu0 0.0
  %819 = vmatprep.subr.mxu0 0.0
  %820 = vmatpush1.msra.mxu0 0.0
  %821 = vmatprep.subr.mxu0 0.0
  %822 = vmatpush1.msra.mxu0 0.0
  %823 = vmatprep.subr.mxu0 0.0
  %824 = vmatpush1.msra.mxu0 0.0
  %825 = vmatprep.subr.mxu0 0.0
  %826 = vmatpush1.msra.mxu0 0.0
  %827 = vmatprep.subr.mxu0 0.0
  %828 = vmatpush1.msra.mxu0 0.0
  %829 = vmatprep.subr.mxu0 0.0
  %830 = vmatpush1.msra.mxu0 0.0
  %831 = vmatprep.subr.mxu0 0.0
  %832 = vmatpush1.msra.mxu0 0.0
  %833 = vmatprep.subr.mxu0 0.0
  %834 = vmatpush1.msra.mxu0 0.0
  %835 = vmatprep.subr.mxu0 0.0
  %836 = vmatpush1.msra.mxu0 0.0
  %837 = vmatprep.mubr.f32.mxu0 0.0
  %838 = vmatmul.mubr.f32.gmra.mrb[0].mxu0 %v771
  %v839 = vpop.f32.mrb[0].mxu0
  %v840 = vadd.f32 0.0, %v839
  %v841 = vpop.f32.mrb[0].mxu0
  %842 = vdwg.mxu0
  %844 = vrot.lane.b32.xlu0 %v504, 8
  %v845 = vpop.permute.xlu0 %844
  %848 = vrot.lane.b32.xlu0 %v672, 16
  %v849 = vpop.permute.xlu0 %848
  %852 = vrot.lane.b32.xlu0 %v840, 24
  %v853 = vpop.permute.xlu0 %852
  %v855 = vsel %vm174, %v336, %v845
  %vm856 = vcmask 130048
  %v857 = vsel %vm856, %v855, %v849
  %vm858 = vcmask 195584
  %v859 = vsel %vm858, %v857, %v853
  %v860 = vld [vmem:[%s5] sm:$0xff]
  %v861 = vld [vmem:[%s5 + $0x8] sm:$0xff]
  %v862 = vld [vmem:[%s5 + $0x10] sm:$0xff]
  %v863 = vld [vmem:[%s5 + $0x18] sm:$0xff]
  %v864 = vld [vmem:[%s6] sm:$0x1]
  %v866 = vlaneseq
  %v867 = vshrl.u32 %v866, 7
  %v868 = vsub.s32 0, %v867
  %v869 = vrot.slane %v864, %v868
  %v872 = vsel %vm98, %v859, 0
  %874 = vmatprep.subr.mxu0 0.0
  %875 = vmatpush1.msra.mxu0 %v860
  %876 = vmatprep.subr.mxu0 0.0
  %877 = vmatpush1.msra.mxu0 %v861
  %878 = vmatprep.subr.mxu0 0.0
  %879 = vmatpush1.msra.mxu0 %v862
  %880 = vmatprep.subr.mxu0 0.0
  %881 = vmatpush1.msra.mxu0 %v863
  %882 = vmatprep.subr.mxu0 0.0
  %883 = vmatpush1.msra.mxu0 0.0
  %884 = vmatprep.subr.mxu0 0.0
  %885 = vmatpush1.msra.mxu0 0.0
  %886 = vmatprep.subr.mxu0 0.0
  %887 = vmatpush1.msra.mxu0 0.0
  %888 = vmatprep.subr.mxu0 0.0
  %889 = vmatpush1.msra.mxu0 0.0
  %890 = vmatprep.subr.mxu0 0.0
  %891 = vmatpush1.msra.mxu0 0.0
  %892 = vmatprep.subr.mxu0 0.0
  %893 = vmatpush1.msra.mxu0 0.0
  %894 = vmatprep.subr.mxu0 0.0
  %895 = vmatpush1.msra.mxu0 0.0
  %896 = vmatprep.subr.mxu0 0.0
  %897 = vmatpush1.msra.mxu0 0.0
  %898 = vmatprep.subr.mxu0 0.0
  %899 = vmatpush1.msra.mxu0 0.0
  %900 = vmatprep.subr.mxu0 0.0
  %901 = vmatpush1.msra.mxu0 0.0
  %902 = vmatprep.subr.mxu0 0.0
  %903 = vmatpush1.msra.mxu0 0.0
  %904 = vmatprep.subr.mxu0 0.0
  %905 = vmatpush1.msra.mxu0 0.0
  %906 = vmatprep.subr.mxu0 0.0
  %907 = vmatpush1.msra.mxu0 0.0
  %908 = vmatprep.subr.mxu0 0.0
  %909 = vmatpush1.msra.mxu0 0.0
  %910 = vmatprep.subr.mxu0 0.0
  %911 = vmatpush1.msra.mxu0 0.0
  %912 = vmatprep.subr.mxu0 0.0
  %913 = vmatpush1.msra.mxu0 0.0
  %914 = vmatprep.subr.mxu0 0.0
  %915 = vmatpush1.msra.mxu0 0.0
  %916 = vmatprep.subr.mxu0 0.0
  %917 = vmatpush1.msra.mxu0 0.0
  %918 = vmatprep.subr.mxu0 0.0
  %919 = vmatpush1.msra.mxu0 0.0
  %920 = vmatprep.subr.mxu0 0.0
  %921 = vmatpush1.msra.mxu0 0.0
  %922 = vmatprep.subr.mxu0 0.0
  %923 = vmatpush1.msra.mxu0 0.0
  %924 = vmatprep.subr.mxu0 0.0
  %925 = vmatpush1.msra.mxu0 0.0
  %926 = vmatprep.subr.mxu0 0.0
  %927 = vmatpush1.msra.mxu0 0.0
  %928 = vmatprep.subr.mxu0 0.0
  %929 = vmatpush1.msra.mxu0 0.0
  %930 = vmatprep.subr.mxu0 0.0
  %931 = vmatpush1.msra.mxu0 0.0
  %932 = vmatprep.subr.mxu0 0.0
  %933 = vmatpush1.msra.mxu0 0.0
  %934 = vmatprep.subr.mxu0 0.0
  %935 = vmatpush1.msra.mxu0 0.0
  %936 = vmatprep.subr.mxu0 0.0
  %937 = vmatpush1.msra.mxu0 0.0
  %938 = vmatprep.mubr.f32.mxu0 0.0
  %939 = vmatmul.mubr.f32.gmra.mrb[0].mxu0 %v872
  %v940 = vpop.f32.mrb[0].mxu0
  %v941 = vadd.f32 %v869, %v940
  %v942 = vpop.f32.mrb[0].mxu0
  %943 = vdwg.mxu0
  %v945 = vcombine.high %v941, %v941
  %v947 = vadd.f32 %v81, %v941
  %v948 = vadd.f32 %v82, %v945
  %v949 = vld [vmem:[%s7] sm:$0x1]
  %v950 = vld [vmem:[%s8] sm:$0x1]
  %v953 = vcombine.low %v947, %v948
  %v955 = vsel %vm98, %v953, 0.0
  %956 = vadd.xlane.f32.xlu0 %v955
  %v957 = vpop.xlane.xlu0 %956
  %v958 = vrcp.pop 32.0
  %v959 = vmul.f32 %v957, %v958
  %v962 = vunpack.c.l.s4 839922192
  %v963 = vunpack.c.0.s8 %v962
  %v964 = vlaneseq
  %v965 = vshrl.u32 %v964, 7
  %v966 = vsub.s32 %v963, %v965
  %v967 = vrot.slane %v959, %v966
  %v969 = vunpack.c.l.s4 1985246804
  %v970 = vunpack.c.0.s8 %v969
  %v971 = vlaneseq
  %v972 = vshrl.u32 %v971, 7
  %v973 = vsub.s32 %v970, %v972
  %v974 = vrot.slane %v959, %v973
  %v977 = vsub.f32 %v947, %v967
  %v978 = vsub.f32 %v948, %v974
  %v979 = vmul.f32 %v977, %v977
  %v980 = vmul.f32 %v978, %v978
  %v983 = vcombine.low %v979, %v980
  %v985 = vsel %vm98, %v983, 0.0
  %986 = vadd.xlane.f32.xlu0 %v985
  %v987 = vpop.xlane.xlu0 %986
  %v988 = vmul.f32 %v987, %v958
  %v989 = vadd.f32 %v988, 1e-05
  %v990 = vrsqrt.pop %v989
  %v993 = vunpack.c.l.s4 839922192
  %v994 = vunpack.c.0.s8 %v993
  %v995 = vlaneseq
  %v996 = vshrl.u32 %v995, 7
  %v997 = vsub.s32 %v994, %v996
  %v998 = vrot.slane %v990, %v997
  %v1000 = vunpack.c.l.s4 1985246804
  %v1001 = vunpack.c.0.s8 %v1000
  %v1002 = vlaneseq
  %v1003 = vshrl.u32 %v1002, 7
  %v1004 = vsub.s32 %v1001, %v1003
  %v1005 = vrot.slane %v990, %v1004
  %v1008 = vmul.f32 %v977, %v998
  %v1009 = vmul.f32 %v978, %v1005
  %v1011 = vlaneseq
  %v1012 = vshrl.u32 %v1011, 7
  %v1013 = vsub.s32 0, %v1012
  %v1014 = vrot.slane %v949, %v1013
  %v1016 = vcombine.high %v1014, %v1014
  %v1018 = vmul.f32 %v1008, %v1014
  %v1019 = vmul.f32 %v1009, %v1016
  %v1021 = vlaneseq
  %v1022 = vshrl.u32 %v1021, 7
  %v1023 = vsub.s32 0, %v1022
  %v1024 = vrot.slane %v950, %v1023
  %v1026 = vcombine.high %v1024, %v1024
  %v1028 = vadd.f32 %v1018, %v1024
  %v1029 = vadd.f32 %v1019, %v1026
  %v1030 = vld [vmem:[%s9] sm:$0xff]
  %v1031 = vld [vmem:[%s9 + $0x8] sm:$0xff]
  %v1032 = vld [vmem:[%s9 + $0x10] sm:$0xff]
  %v1033 = vld [vmem:[%s9 + $0x18] sm:$0xff]
  %v1034 = vld [vmem:[%s10] sm:$0x1]
  %v1036 = vlaneseq
  %v1037 = vshrl.u32 %v1036, 7
  %v1038 = vsub.s32 0, %v1037
  %v1039 = vrot.slane %v1034, %v1038
  %v1043 = vcombine.low %v1028, %v1029
  %v1044 = vsel %vm98, %v1043, 0
  %1046 = vmatprep.subr.mxu0 0.0
  %1047 = vmatpush1.msra.mxu0 %v1030
  %1048 = vmatprep.subr.mxu0 0.0
  %1049 = vmatpush1.msra.mxu0 %v1031
  %1050 = vmatprep.subr.mxu0 0.0
  %1051 = vmatpush1.msra.mxu0 %v1032
  %1052 = vmatprep.subr.mxu0 0.0
  %1053 = vmatpush1.msra.mxu0 %v1033
  %1054 = vmatprep.subr.mxu0 0.0
  %1055 = vmatpush1.msra.mxu0 0.0
  %1056 = vmatprep.subr.mxu0 0.0
  %1057 = vmatpush1.msra.mxu0 0.0
  %1058 = vmatprep.subr.mxu0 0.0
  %1059 = vmatpush1.msra.mxu0 0.0
  %1060 = vmatprep.subr.mxu0 0.0
  %1061 = vmatpush1.msra.mxu0 0.0
  %1062 = vmatprep.subr.mxu0 0.0
  %1063 = vmatpush1.msra.mxu0 0.0
  %1064 = vmatprep.subr.mxu0 0.0
  %1065 = vmatpush1.msra.mxu0 0.0
  %1066 = vmatprep.subr.mxu0 0.0
  %1067 = vmatpush1.msra.mxu0 0.0
  %1068 = vmatprep.subr.mxu0 0.0
  %1069 = vmatpush1.msra.mxu0 0.0
  %1070 = vmatprep.subr.mxu0 0.0
  %1071 = vmatpush1.msra.mxu0 0.0
  %1072 = vmatprep.subr.mxu0 0.0
  %1073 = vmatpush1.msra.mxu0 0.0
  %1074 = vmatprep.subr.mxu0 0.0
  %1075 = vmatpush1.msra.mxu0 0.0
  %1076 = vmatprep.subr.mxu0 0.0
  %1077 = vmatpush1.msra.mxu0 0.0
  %1078 = vmatprep.subr.mxu0 0.0
  %1079 = vmatpush1.msra.mxu0 0.0
  %1080 = vmatprep.subr.mxu0 0.0
  %1081 = vmatpush1.msra.mxu0 0.0
  %1082 = vmatprep.subr.mxu0 0.0
  %1083 = vmatpush1.msra.mxu0 0.0
  %1084 = vmatprep.subr.mxu0 0.0
  %1085 = vmatpush1.msra.mxu0 0.0
  %1086 = vmatprep.subr.mxu0 0.0
  %1087 = vmatpush1.msra.mxu0 0.0
  %1088 = vmatprep.subr.mxu0 0.0
  %1089 = vmatpush1.msra.mxu0 0.0
  %1090 = vmatprep.subr.mxu0 0.0
  %1091 = vmatpush1.msra.mxu0 0.0
  %1092 = vmatprep.subr.mxu0 0.0
  %1093 = vmatpush1.msra.mxu0 0.0
  %1094 = vmatprep.subr.mxu0 0.0
  %1095 = vmatpush1.msra.mxu0 0.0
  %1096 = vmatprep.subr.mxu0 0.0
  %1097 = vmatpush1.msra.mxu0 0.0
  %1098 = vmatprep.subr.mxu0 0.0
  %1099 = vmatpush1.msra.mxu0 0.0
  %1100 = vmatprep.subr.mxu0 0.0
  %1101 = vmatpush1.msra.mxu0 0.0
  %1102 = vmatprep.subr.mxu0 0.0
  %1103 = vmatpush1.msra.mxu0 0.0
  %1104 = vmatprep.subr.mxu0 0.0
  %1105 = vmatpush1.msra.mxu0 0.0
  %1106 = vmatprep.subr.mxu0 0.0
  %1107 = vmatpush1.msra.mxu0 0.0
  %1108 = vmatprep.subr.mxu0 0.0
  %1109 = vmatpush1.msra.mxu0 0.0
  %1110 = vmatprep.mubr.f32.mxu0 0.0
  %1111 = vmatmul.mubr.f32.gmra.mrb[0].mxu0 %v1044
  %v1112 = vpop.f32.mrb[0].mxu0
  %v1113 = vadd.f32 %v1039, %v1112
  %v1114 = vpop.f32.mrb[0].mxu0
  %1115 = vdwg.mxu0
  %v1116 = vmax.f32 %v1113, 0.0
  %v1117 = vld [vmem:[%s11] sm:$0xff]
  %v1118 = vld [vmem:[%s11 + $0x8] sm:$0xff]
  %v1119 = vld [vmem:[%s11 + $0x10] sm:$0xff]
  %v1120 = vld [vmem:[%s11 + $0x18] sm:$0xff]
  %v1121 = vld [vmem:[%s11 + $0x20] sm:$0xff]
  %v1122 = vld [vmem:[%s11 + $0x28] sm:$0xff]
  %v1123 = vld [vmem:[%s11 + $0x30] sm:$0xff]
  %v1124 = vld [vmem:[%s11 + $0x38] sm:$0xff]
  %v1125 = vld [vmem:[%s12] sm:$0x1]
  %v1127 = vlaneseq
  %v1128 = vshrl.u32 %v1127, 7
  %v1129 = vsub.s32 0, %v1128
  %v1130 = vrot.slane %v1125, %v1129
  %vm1132 = vcmask 523264
  %v1134 = vsel %vm1132, %v1116, 0
  %1136 = vmatprep.subr.mxu0 0.0
  %1137 = vmatpush1.msra.mxu0 %v1117
  %1138 = vmatprep.subr.mxu0 0.0
  %1139 = vmatpush1.msra.mxu0 %v1118
  %1140 = vmatprep.subr.mxu0 0.0
  %1141 = vmatpush1.msra.mxu0 %v1119
  %1142 = vmatprep.subr.mxu0 0.0
  %1143 = vmatpush1.msra.mxu0 %v1120
  %1144 = vmatprep.subr.mxu0 0.0
  %1145 = vmatpush1.msra.mxu0 %v1121
  %1146 = vmatprep.subr.mxu0 0.0
  %1147 = vmatpush1.msra.mxu0 %v1122
  %1148 = vmatprep.subr.mxu0 0.0
  %1149 = vmatpush1.msra.mxu0 %v1123
  %1150 = vmatprep.subr.mxu0 0.0
  %1151 = vmatpush1.msra.mxu0 %v1124
  %1152 = vmatprep.subr.mxu0 0.0
  %1153 = vmatpush1.msra.mxu0 0.0
  %1154 = vmatprep.subr.mxu0 0.0
  %1155 = vmatpush1.msra.mxu0 0.0
  %1156 = vmatprep.subr.mxu0 0.0
  %1157 = vmatpush1.msra.mxu0 0.0
  %1158 = vmatprep.subr.mxu0 0.0
  %1159 = vmatpush1.msra.mxu0 0.0
  %1160 = vmatprep.subr.mxu0 0.0
  %1161 = vmatpush1.msra.mxu0 0.0
  %1162 = vmatprep.subr.mxu0 0.0
  %1163 = vmatpush1.msra.mxu0 0.0
  %1164 = vmatprep.subr.mxu0 0.0
  %1165 = vmatpush1.msra.mxu0 0.0
  %1166 = vmatprep.subr.mxu0 0.0
  %1167 = vmatpush1.msra.mxu0 0.0
  %1168 = vmatprep.subr.mxu0 0.0
  %1169 = vmatpush1.msra.mxu0 0.0
  %1170 = vmatprep.subr.mxu0 0.0
  %1171 = vmatpush1.msra.mxu0 0.0
  %1172 = vmatprep.subr.mxu0 0.0
  %1173 = vmatpush1.msra.mxu0 0.0
  %1174 = vmatprep.subr.mxu0 0.0
  %1175 = vmatpush1.msra.mxu0 0.0
  %1176 = vmatprep.subr.mxu0 0.0
  %1177 = vmatpush1.msra.mxu0 0.0
  %1178 = vmatprep.subr.mxu0 0.0
  %1179 = vmatpush1.msra.mxu0 0.0
  %1180 = vmatprep.subr.mxu0 0.0
  %1181 = vmatpush1.msra.mxu0 0.0
  %1182 = vmatprep.subr.mxu0 0.0
  %1183 = vmatpush1.msra.mxu0 0.0
  %1184 = vmatprep.subr.mxu0 0.0
  %1185 = vmatpush1.msra.mxu0 0.0
  %1186 = vmatprep.subr.mxu0 0.0
  %1187 = vmatpush1.msra.mxu0 0.0
  %1188 = vmatprep.subr.mxu0 0.0
  %1189 = vmatpush1.msra.mxu0 0.0
  %1190 = vmatprep.subr.mxu0 0.0
  %1191 = vmatpush1.msra.mxu0 0.0
  %1192 = vmatprep.subr.mxu0 0.0
  %1193 = vmatpush1.msra.mxu0 0.0
  %1194 = vmatprep.subr.mxu0 0.0
  %1195 = vmatpush1.msra.mxu0 0.0
  %1196 = vmatprep.subr.mxu0 0.0
  %1197 = vmatpush1.msra.mxu0 0.0
  %1198 = vmatprep.subr.mxu0 0.0
  %1199 = vmatpush1.msra.mxu0 0.0
  %1200 = vmatprep.mubr.f32.mxu0 0.0
  %1201 = vmatmul.mubr.f32.gmra.mrb[0].mxu0 %v1134
  %v1202 = vpop.f32.mrb[0].mxu0
  %v1203 = vadd.f32 %v1130, %v1202
  %v1204 = vpop.f32.mrb[0].mxu0
  %1205 = vdwg.mxu0
  %v1207 = vcombine.high %v1203, %v1203
  %v1209 = vadd.f32 %v1028, %v1203
  %v1210 = vadd.f32 %v1029, %v1207
  %v1211 = vld [vmem:[%s13] sm:$0x1]
  %v1212 = vld [vmem:[%s14] sm:$0x1]
  %v1215 = vcombine.low %v1209, %v1210
  %v1217 = vsel %vm98, %v1215, 0.0
  %1218 = vadd.xlane.f32.xlu0 %v1217
  %v1219 = vpop.xlane.xlu0 %1218
  %v1220 = vmul.f32 %v1219, %v958
  %v1223 = vunpack.c.l.s4 839922192
  %v1224 = vunpack.c.0.s8 %v1223
  %v1225 = vlaneseq
  %v1226 = vshrl.u32 %v1225, 7
  %v1227 = vsub.s32 %v1224, %v1226
  %v1228 = vrot.slane %v1220, %v1227
  %v1230 = vunpack.c.l.s4 1985246804
  %v1231 = vunpack.c.0.s8 %v1230
  %v1232 = vlaneseq
  %v1233 = vshrl.u32 %v1232, 7
  %v1234 = vsub.s32 %v1231, %v1233
  %v1235 = vrot.slane %v1220, %v1234
  %v1238 = vsub.f32 %v1209, %v1228
  %v1239 = vsub.f32 %v1210, %v1235
  %v1240 = vmul.f32 %v1238, %v1238
  %v1241 = vmul.f32 %v1239, %v1239
  %v1244 = vcombine.low %v1240, %v1241
  %v1246 = vsel %vm98, %v1244, 0.0
  %1247 = vadd.xlane.f32.xlu0 %v1246
  %v1248 = vpop.xlane.xlu0 %1247
  %v1249 = vmul.f32 %v1248, %v958
  %v1250 = vadd.f32 %v1249, 1e-05
  %v1251 = vrsqrt.pop %v1250
  %v1254 = vunpack.c.l.s4 839922192
  %v1255 = vunpack.c.0.s8 %v1254
  %v1256 = vlaneseq
  %v1257 = vshrl.u32 %v1256, 7
  %v1258 = vsub.s32 %v1255, %v1257
  %v1259 = vrot.slane %v1251, %v1258
  %v1261 = vunpack.c.l.s4 1985246804
  %v1262 = vunpack.c.0.s8 %v1261
  %v1263 = vlaneseq
  %v1264 = vshrl.u32 %v1263, 7
  %v1265 = vsub.s32 %v1262, %v1264
  %v1266 = vrot.slane %v1251, %v1265
  %v1269 = vmul.f32 %v1238, %v1259
  %v1270 = vmul.f32 %v1239, %v1266
  %v1272 = vlaneseq
  %v1273 = vshrl.u32 %v1272, 7
  %v1274 = vsub.s32 0, %v1273
  %v1275 = vrot.slane %v1211, %v1274
  %v1277 = vcombine.high %v1275, %v1275
  %v1279 = vmul.f32 %v1269, %v1275
  %v1280 = vmul.f32 %v1270, %v1277
  %v1282 = vlaneseq
  %v1283 = vshrl.u32 %v1282, 7
  %v1284 = vsub.s32 0, %v1283
  %v1285 = vrot.slane %v1212, %v1284
  %v1287 = vcombine.high %v1285, %v1285
  %v1289 = vadd.f32 %v1279, %v1285
  %v1290 = vadd.f32 %v1280, %v1287
  %s1291 = scalar_lea.vmem %s3, 32
  %v1292 = vld [vmem:[%s1291] sm:$0xff]
  %v1293 = vld [vmem:[%s1291 + $0x8] sm:$0xff]
  %v1294 = vld [vmem:[%s1291 + $0x10] sm:$0xff]
  %v1295 = vld [vmem:[%s1291 + $0x18] sm:$0xff]
  %s1296 = scalar_lea.vmem %s4, 1
  %v1297 = vld [vmem:[%s1296] sm:$0x1]
  %v1299 = vlaneseq
  %v1300 = vshrl.u32 %v1299, 7
  %v1301 = vsub.s32 0, %v1300
  %v1302 = vrot.slane %v1297, %v1301
  %v1306 = vcombine.low %v1289, %v1290
  %v1307 = vsel %vm98, %v1306, 0
  %1309 = vmatprep.subr.mxu0 0.0
  %1310 = vmatpush1.msra.mxu0 %v1292
  %1311 = vmatprep.subr.mxu0 0.0
  %1312 = vmatpush1.msra.mxu0 %v1293
  %1313 = vmatprep.subr.mxu0 0.0
  %1314 = vmatpush1.msra.mxu0 %v1294
  %1315 = vmatprep.subr.mxu0 0.0
  %1316 = vmatpush1.msra.mxu0 %v1295
  %1317 = vmatprep.subr.mxu0 0.0
  %1318 = vmatpush1.msra.mxu0 0.0
  %1319 = vmatprep.subr.mxu0 0.0
  %1320 = vmatpush1.msra.mxu0 0.0
  %1321 = vmatprep.subr.mxu0 0.0
  %1322 = vmatpush1.msra.mxu0 0.0
  %1323 = vmatprep.subr.mxu0 0.0
  %1324 = vmatpush1.msra.mxu0 0.0
  %1325 = vmatprep.subr.mxu0 0.0
  %1326 = vmatpush1.msra.mxu0 0.0
  %1327 = vmatprep.subr.mxu0 0.0
  %1328 = vmatpush1.msra.mxu0 0.0
  %1329 = vmatprep.subr.mxu0 0.0
  %1330 = vmatpush1.msra.mxu0 0.0
  %1331 = vmatprep.subr.mxu0 0.0
  %1332 = vmatpush1.msra.mxu0 0.0
  %1333 = vmatprep.subr.mxu0 0.0
  %1334 = vmatpush1.msra.mxu0 0.0
  %1335 = vmatprep.subr.mxu0 0.0
  %1336 = vmatpush1.msra.mxu0 0.0
  %1337 = vmatprep.subr.mxu0 0.0
  %1338 = vmatpush1.msra.mxu0 0.0
  %1339 = vmatprep.subr.mxu0 0.0
  %1340 = vmatpush1.msra.mxu0 0.0
  %1341 = vmatprep.subr.mxu0 0.0
  %1342 = vmatpush1.msra.mxu0 0.0
  %1343 = vmatprep.subr.mxu0 0.0
  %1344 = vmatpush1.msra.mxu0 0.0
  %1345 = vmatprep.subr.mxu0 0.0
  %1346 = vmatpush1.msra.mxu0 0.0
  %1347 = vmatprep.subr.mxu0 0.0
  %1348 = vmatpush1.msra.mxu0 0.0
  %1349 = vmatprep.subr.mxu0 0.0
  %1350 = vmatpush1.msra.mxu0 0.0
  %1351 = vmatprep.subr.mxu0 0.0
  %1352 = vmatpush1.msra.mxu0 0.0
  %1353 = vmatprep.subr.mxu0 0.0
  %1354 = vmatpush1.msra.mxu0 0.0
  %1355 = vmatprep.subr.mxu0 0.0
  %1356 = vmatpush1.msra.mxu0 0.0
  %1357 = vmatprep.subr.mxu0 0.0
  %1358 = vmatpush1.msra.mxu0 0.0
  %1359 = vmatprep.subr.mxu0 0.0
  %1360 = vmatpush1.msra.mxu0 0.0
  %1361 = vmatprep.subr.mxu0 0.0
  %1362 = vmatpush1.msra.mxu0 0.0
  %1363 = vmatprep.subr.mxu0 0.0
  %1364 = vmatpush1.msra.mxu0 0.0
  %1365 = vmatprep.subr.mxu0 0.0
  %1366 = vmatpush1.msra.mxu0 0.0
  %1367 = vmatprep.subr.mxu0 0.0
  %1368 = vmatpush1.msra.mxu0 0.0
  %1369 = vmatprep.subr.mxu0 0.0
  %1370 = vmatpush1.msra.mxu0 0.0
  %1371 = vmatprep.subr.mxu0 0.0
  %1372 = vmatpush1.msra.mxu0 0.0
  %1373 = vmatprep.mubr.f32.mxu0 0.0
  %1374 = vmatmul.mubr.f32.gmra.mrb[0].mxu0 %v1307
  %v1375 = vpop.f32.mrb[0].mxu0
  %v1376 = vadd.f32 %v1302, %v1375
  %v1377 = vpop.f32.mrb[0].mxu0
  %1378 = vdwg.mxu0
  %1380 = vrot.lane.b32.xlu0 %v1376, 96
  %v1381 = vpop.permute.xlu0 %1380
  %v1382 = vsel %vm174, %v1376, 0
  %v1384 = vsel %vm174, %v1381, 0
  %1386 = vmatprep.subr.mxu0 0.0
  %1387 = vmatpush1.xpose.msra.mxu0 %v1384
  %1388 = vmatprep.subr.mxu0 0.0
  %1389 = vmatpush1.xpose.msra.mxu0 0.0
  %1390 = vmatprep.subr.mxu0 0.0
  %1391 = vmatpush1.xpose.msra.mxu0 0.0
  %1392 = vmatprep.subr.mxu0 0.0
  %1393 = vmatpush1.xpose.msra.mxu0 0.0
  %1394 = vmatprep.subr.mxu0 0.0
  %1395 = vmatpush1.xpose.msra.mxu0 0.0
  %1396 = vmatprep.subr.mxu0 0.0
  %1397 = vmatpush1.xpose.msra.mxu0 0.0
  %1398 = vmatprep.subr.mxu0 0.0
  %1399 = vmatpush1.xpose.msra.mxu0 0.0
  %1400 = vmatprep.subr.mxu0 0.0
  %1401 = vmatpush1.xpose.msra.mxu0 0.0
  %1402 = vmatprep.subr.mxu0 0.0
  %1403 = vmatpush1.xpose.msra.mxu0 0.0
  %1404 = vmatprep.subr.mxu0 0.0
  %1405 = vmatpush1.xpose.msra.mxu0 0.0
  %1406 = vmatprep.subr.mxu0 0.0
  %1407 = vmatpush1.xpose.msra.mxu0 0.0
  %1408 = vmatprep.subr.mxu0 0.0
  %1409 = vmatpush1.xpose.msra.mxu0 0.0
  %1410 = vmatprep.subr.mxu0 0.0
  %1411 = vmatpush1.xpose.msra.mxu0 0.0
  %1412 = vmatprep.subr.mxu0 0.0
  %1413 = vmatpush1.xpose.msra.mxu0 0.0
  %1414 = vmatprep.subr.mxu0 0.0
  %1415 = vmatpush1.xpose.msra.mxu0 0.0
  %1416 = vmatprep.subr.mxu0 0.0
  %1417 = vmatpush1.xpose.msra.mxu0 0.0
  %1418 = vmatprep.subr.mxu0 0.0
  %1419 = vmatpush1.xpose.msra.mxu0 0.0
  %1420 = vmatprep.subr.mxu0 0.0
  %1421 = vmatpush1.xpose.msra.mxu0 0.0
  %1422 = vmatprep.subr.mxu0 0.0
  %1423 = vmatpush1.xpose.msra.mxu0 0.0
  %1424 = vmatprep.subr.mxu0 0.0
  %1425 = vmatpush1.xpose.msra.mxu0 0.0
  %1426 = vmatprep.subr.mxu0 0.0
  %1427 = vmatpush1.xpose.msra.mxu0 0.0
  %1428 = vmatprep.subr.mxu0 0.0
  %1429 = vmatpush1.xpose.msra.mxu0 0.0
  %1430 = vmatprep.subr.mxu0 0.0
  %1431 = vmatpush1.xpose.msra.mxu0 0.0
  %1432 = vmatprep.subr.mxu0 0.0
  %1433 = vmatpush1.xpose.msra.mxu0 0.0
  %1434 = vmatprep.subr.mxu0 0.0
  %1435 = vmatpush1.xpose.msra.mxu0 0.0
  %1436 = vmatprep.subr.mxu0 0.0
  %1437 = vmatpush1.xpose.msra.mxu0 0.0
  %1438 = vmatprep.subr.mxu0 0.0
  %1439 = vmatpush1.xpose.msra.mxu0 0.0
  %1440 = vmatprep.subr.mxu0 0.0
  %1441 = vmatpush1.xpose.msra.mxu0 0.0
  %1442 = vmatprep.subr.mxu0 0.0
  %1443 = vmatpush1.xpose.msra.mxu0 0.0
  %1444 = vmatprep.subr.mxu0 0.0
  %1445 = vmatpush1.xpose.msra.mxu0 0.0
  %1446 = vmatprep.subr.mxu0 0.0
  %1447 = vmatpush1.xpose.msra.mxu0 0.0
  %1448 = vmatprep.subr.mxu0 0.0
  %1449 = vmatpush1.xpose.msra.mxu0 0.0
  %1450 = vmatprep.mubr.f32.mxu0 0.0
  %1451 = vmatmul.mubr.f32.gmra.mrb[0].mxu0 %v1382
  %v1452 = vpop.f32.mrb[0].mxu0
  %v1453 = vadd.f32 %v83, %v1452
  %v1454 = vpop.f32.mrb[0].mxu0
  %1455 = vdwg.mxu0
  %v1456 = vsel %vm174, %v1453, -inf
  %1457 = vmax.xlane.f32.xlu0 %v1456
  %v1458 = vpop.xlane.xlu0 %1457
  %v1459 = vsub.f32 %v1453, %v1458
  %v1460 = vmul.f32 %v1459, 1.442695
  %v1461 = vpow.pop %v1460
  %v1462 = vsel %vm174, %v1461, 0.0
  %1463 = vadd.xlane.f32.xlu0 %v1462
  %v1464 = vpop.xlane.xlu0 %1463
  %v1465 = vrcp.pop %v1464
  %v1466 = vmul.f32 %v1464, %v1465
  %v1467 = vsub.f32 2.0, %v1466
  %v1468 = vmul.f32 %v1465, %v1467
  %v1469 = vmul.f32 %v1461, %v1468
  %1470 = vrot.lane.b32.xlu0 %v1376, 64
  %v1471 = vpop.permute.xlu0 %1470
  %v1474 = vsel %vm174, %v1469, 0
  %1476 = vmatprep.subr.mxu0 0.0
  %1477 = vmatpush1.msra.mxu0 %v1471
  %1478 = vmatprep.subr.mxu0 0.0
  %1479 = vmatpush1.msra.mxu0 0.0
  %1480 = vmatprep.subr.mxu0 0.0
  %1481 = vmatpush1.msra.mxu0 0.0
  %1482 = vmatprep.subr.mxu0 0.0
  %1483 = vmatpush1.msra.mxu0 0.0
  %1484 = vmatprep.subr.mxu0 0.0
  %1485 = vmatpush1.msra.mxu0 0.0
  %1486 = vmatprep.subr.mxu0 0.0
  %1487 = vmatpush1.msra.mxu0 0.0
  %1488 = vmatprep.subr.mxu0 0.0
  %1489 = vmatpush1.msra.mxu0 0.0
  %1490 = vmatprep.subr.mxu0 0.0
  %1491 = vmatpush1.msra.mxu0 0.0
  %1492 = vmatprep.subr.mxu0 0.0
  %1493 = vmatpush1.msra.mxu0 0.0
  %1494 = vmatprep.subr.mxu0 0.0
  %1495 = vmatpush1.msra.mxu0 0.0
  %1496 = vmatprep.subr.mxu0 0.0
  %1497 = vmatpush1.msra.mxu0 0.0
  %1498 = vmatprep.subr.mxu0 0.0
  %1499 = vmatpush1.msra.mxu0 0.0
  %1500 = vmatprep.subr.mxu0 0.0
  %1501 = vmatpush1.msra.mxu0 0.0
  %1502 = vmatprep.subr.mxu0 0.0
  %1503 = vmatpush1.msra.mxu0 0.0
  %1504 = vmatprep.subr.mxu0 0.0
  %1505 = vmatpush1.msra.mxu0 0.0
  %1506 = vmatprep.subr.mxu0 0.0
  %1507 = vmatpush1.msra.mxu0 0.0
  %1508 = vmatprep.subr.mxu0 0.0
  %1509 = vmatpush1.msra.mxu0 0.0
  %1510 = vmatprep.subr.mxu0 0.0
  %1511 = vmatpush1.msra.mxu0 0.0
  %1512 = vmatprep.subr.mxu0 0.0
  %1513 = vmatpush1.msra.mxu0 0.0
  %1514 = vmatprep.subr.mxu0 0.0
  %1515 = vmatpush1.msra.mxu0 0.0
  %1516 = vmatprep.subr.mxu0 0.0
  %1517 = vmatpush1.msra.mxu0 0.0
  %1518 = vmatprep.subr.mxu0 0.0
  %1519 = vmatpush1.msra.mxu0 0.0
  %1520 = vmatprep.subr.mxu0 0.0
  %1521 = vmatpush1.msra.mxu0 0.0
  %1522 = vmatprep.subr.mxu0 0.0
  %1523 = vmatpush1.msra.mxu0 0.0
  %1524 = vmatprep.subr.mxu0 0.0
  %1525 = vmatpush1.msra.mxu0 0.0
  %1526 = vmatprep.subr.mxu0 0.0
  %1527 = vmatpush1.msra.mxu0 0.0
  %1528 = vmatprep.subr.mxu0 0.0
  %1529 = vmatpush1.msra.mxu0 0.0
  %1530 = vmatprep.subr.mxu0 0.0
  %1531 = vmatpush1.msra.mxu0 0.0
  %1532 = vmatprep.subr.mxu0 0.0
  %1533 = vmatpush1.msra.mxu0 0.0
  %1534 = vmatprep.subr.mxu0 0.0
  %1535 = vmatpush1.msra.mxu0 0.0
  %1536 = vmatprep.subr.mxu0 0.0
  %1537 = vmatpush1.msra.mxu0 0.0
  %1538 = vmatprep.subr.mxu0 0.0
  %1539 = vmatpush1.msra.mxu0 0.0
  %1540 = vmatprep.mubr.f32.mxu0 0.0
  %1541 = vmatmul.mubr.f32.gmra.mrb[0].mxu0 %v1474
  %v1542 = vpop.f32.mrb[0].mxu0
  %v1543 = vadd.f32 0.0, %v1542
  %v1544 = vpop.f32.mrb[0].mxu0
  %1545 = vdwg.mxu0
  %1546 = vrot.lane.b32.xlu0 %v1376, 120
  %v1547 = vpop.permute.xlu0 %1546
  %1548 = vrot.lane.b32.xlu0 %v1376, 88
  %v1549 = vpop.permute.xlu0 %1548
  %v1550 = vsel %vm174, %v1547, 0
  %v1552 = vsel %vm174, %v1549, 0
  %1554 = vmatprep.subr.mxu0 0.0
  %1555 = vmatpush1.xpose.msra.mxu0 %v1552
  %1556 = vmatprep.subr.mxu0 0.0
  %1557 = vmatpush1.xpose.msra.mxu0 0.0
  %1558 = vmatprep.subr.mxu0 0.0
  %1559 = vmatpush1.xpose.msra.mxu0 0.0
  %1560 = vmatprep.subr.mxu0 0.0
  %1561 = vmatpush1.xpose.msra.mxu0 0.0
  %1562 = vmatprep.subr.mxu0 0.0
  %1563 = vmatpush1.xpose.msra.mxu0 0.0
  %1564 = vmatprep.subr.mxu0 0.0
  %1565 = vmatpush1.xpose.msra.mxu0 0.0
  %1566 = vmatprep.subr.mxu0 0.0
  %1567 = vmatpush1.xpose.msra.mxu0 0.0
  %1568 = vmatprep.subr.mxu0 0.0
  %1569 = vmatpush1.xpose.msra.mxu0 0.0
  %1570 = vmatprep.subr.mxu0 0.0
  %1571 = vmatpush1.xpose.msra.mxu0 0.0
  %1572 = vmatprep.subr.mxu0 0.0
  %1573 = vmatpush1.xpose.msra.mxu0 0.0
  %1574 = vmatprep.subr.mxu0 0.0
  %1575 = vmatpush1.xpose.msra.mxu0 0.0
  %1576 = vmatprep.subr.mxu0 0.0
  %1577 = vmatpush1.xpose.msra.mxu0 0.0
  %1578 = vmatprep.subr.mxu0 0.0
  %1579 = vmatpush1.xpose.msra.mxu0 0.0
  %1580 = vmatprep.subr.mxu0 0.0
  %1581 = vmatpush1.xpose.msra.mxu0 0.0
  %1582 = vmatprep.subr.mxu0 0.0
  %1583 = vmatpush1.xpose.msra.mxu0 0.0
  %1584 = vmatprep.subr.mxu0 0.0
  %1585 = vmatpush1.xpose.msra.mxu0 0.0
  %1586 = vmatprep.subr.mxu0 0.0
  %1587 = vmatpush1.xpose.msra.mxu0 0.0
  %1588 = vmatprep.subr.mxu0 0.0
  %1589 = vmatpush1.xpose.msra.mxu0 0.0
  %1590 = vmatprep.subr.mxu0 0.0
  %1591 = vmatpush1.xpose.msra.mxu0 0.0
  %1592 = vmatprep.subr.mxu0 0.0
  %1593 = vmatpush1.xpose.msra.mxu0 0.0
  %1594 = vmatprep.subr.mxu0 0.0
  %1595 = vmatpush1.xpose.msra.mxu0 0.0
  %1596 = vmatprep.subr.mxu0 0.0
  %1597 = vmatpush1.xpose.msra.mxu0 0.0
  %1598 = vmatprep.subr.mxu0 0.0
  %1599 = vmatpush1.xpose.msra.mxu0 0.0
  %1600 = vmatprep.subr.mxu0 0.0
  %1601 = vmatpush1.xpose.msra.mxu0 0.0
  %1602 = vmatprep.subr.mxu0 0.0
  %1603 = vmatpush1.xpose.msra.mxu0 0.0
  %1604 = vmatprep.subr.mxu0 0.0
  %1605 = vmatpush1.xpose.msra.mxu0 0.0
  %1606 = vmatprep.subr.mxu0 0.0
  %1607 = vmatpush1.xpose.msra.mxu0 0.0
  %1608 = vmatprep.subr.mxu0 0.0
  %1609 = vmatpush1.xpose.msra.mxu0 0.0
  %1610 = vmatprep.subr.mxu0 0.0
  %1611 = vmatpush1.xpose.msra.mxu0 0.0
  %1612 = vmatprep.subr.mxu0 0.0
  %1613 = vmatpush1.xpose.msra.mxu0 0.0
  %1614 = vmatprep.subr.mxu0 0.0
  %1615 = vmatpush1.xpose.msra.mxu0 0.0
  %1616 = vmatprep.subr.mxu0 0.0
  %1617 = vmatpush1.xpose.msra.mxu0 0.0
  %1618 = vmatprep.mubr.f32.mxu0 0.0
  %1619 = vmatmul.mubr.f32.gmra.mrb[0].mxu0 %v1550
  %v1620 = vpop.f32.mrb[0].mxu0
  %v1621 = vadd.f32 %v83, %v1620
  %v1622 = vpop.f32.mrb[0].mxu0
  %1623 = vdwg.mxu0
  %v1624 = vsel %vm174, %v1621, -inf
  %1625 = vmax.xlane.f32.xlu0 %v1624
  %v1626 = vpop.xlane.xlu0 %1625
  %v1627 = vsub.f32 %v1621, %v1626
  %v1628 = vmul.f32 %v1627, 1.442695
  %v1629 = vpow.pop %v1628
  %v1630 = vsel %vm174, %v1629, 0.0
  %1631 = vadd.xlane.f32.xlu0 %v1630
  %v1632 = vpop.xlane.xlu0 %1631
  %v1633 = vrcp.pop %v1632
  %v1634 = vmul.f32 %v1632, %v1633
  %v1635 = vsub.f32 2.0, %v1634
  %v1636 = vmul.f32 %v1633, %v1635
  %v1637 = vmul.f32 %v1629, %v1636
  %1638 = vrot.lane.b32.xlu0 %v1376, 56
  %v1639 = vpop.permute.xlu0 %1638
  %v1642 = vsel %vm174, %v1637, 0
  %1644 = vmatprep.subr.mxu0 0.0
  %1645 = vmatpush1.msra.mxu0 %v1639
  %1646 = vmatprep.subr.mxu0 0.0
  %1647 = vmatpush1.msra.mxu0 0.0
  %1648 = vmatprep.subr.mxu0 0.0
  %1649 = vmatpush1.msra.mxu0 0.0
  %1650 = vmatprep.subr.mxu0 0.0
  %1651 = vmatpush1.msra.mxu0 0.0
  %1652 = vmatprep.subr.mxu0 0.0
  %1653 = vmatpush1.msra.mxu0 0.0
  %1654 = vmatprep.subr.mxu0 0.0
  %1655 = vmatpush1.msra.mxu0 0.0
  %1656 = vmatprep.subr.mxu0 0.0
  %1657 = vmatpush1.msra.mxu0 0.0
  %1658 = vmatprep.subr.mxu0 0.0
  %1659 = vmatpush1.msra.mxu0 0.0
  %1660 = vmatprep.subr.mxu0 0.0
  %1661 = vmatpush1.msra.mxu0 0.0
  %1662 = vmatprep.subr.mxu0 0.0
  %1663 = vmatpush1.msra.mxu0 0.0
  %1664 = vmatprep.subr.mxu0 0.0
  %1665 = vmatpush1.msra.mxu0 0.0
  %1666 = vmatprep.subr.mxu0 0.0
  %1667 = vmatpush1.msra.mxu0 0.0
  %1668 = vmatprep.subr.mxu0 0.0
  %1669 = vmatpush1.msra.mxu0 0.0
  %1670 = vmatprep.subr.mxu0 0.0
  %1671 = vmatpush1.msra.mxu0 0.0
  %1672 = vmatprep.subr.mxu0 0.0
  %1673 = vmatpush1.msra.mxu0 0.0
  %1674 = vmatprep.subr.mxu0 0.0
  %1675 = vmatpush1.msra.mxu0 0.0
  %1676 = vmatprep.subr.mxu0 0.0
  %1677 = vmatpush1.msra.mxu0 0.0
  %1678 = vmatprep.subr.mxu0 0.0
  %1679 = vmatpush1.msra.mxu0 0.0
  %1680 = vmatprep.subr.mxu0 0.0
  %1681 = vmatpush1.msra.mxu0 0.0
  %1682 = vmatprep.subr.mxu0 0.0
  %1683 = vmatpush1.msra.mxu0 0.0
  %1684 = vmatprep.subr.mxu0 0.0
  %1685 = vmatpush1.msra.mxu0 0.0
  %1686 = vmatprep.subr.mxu0 0.0
  %1687 = vmatpush1.msra.mxu0 0.0
  %1688 = vmatprep.subr.mxu0 0.0
  %1689 = vmatpush1.msra.mxu0 0.0
  %1690 = vmatprep.subr.mxu0 0.0
  %1691 = vmatpush1.msra.mxu0 0.0
  %1692 = vmatprep.subr.mxu0 0.0
  %1693 = vmatpush1.msra.mxu0 0.0
  %1694 = vmatprep.subr.mxu0 0.0
  %1695 = vmatpush1.msra.mxu0 0.0
  %1696 = vmatprep.subr.mxu0 0.0
  %1697 = vmatpush1.msra.mxu0 0.0
  %1698 = vmatprep.subr.mxu0 0.0
  %1699 = vmatpush1.msra.mxu0 0.0
  %1700 = vmatprep.subr.mxu0 0.0
  %1701 = vmatpush1.msra.mxu0 0.0
  %1702 = vmatprep.subr.mxu0 0.0
  %1703 = vmatpush1.msra.mxu0 0.0
  %1704 = vmatprep.subr.mxu0 0.0
  %1705 = vmatpush1.msra.mxu0 0.0
  %1706 = vmatprep.subr.mxu0 0.0
  %1707 = vmatpush1.msra.mxu0 0.0
  %1708 = vmatprep.mubr.f32.mxu0 0.0
  %1709 = vmatmul.mubr.f32.gmra.mrb[0].mxu0 %v1642
  %v1710 = vpop.f32.mrb[0].mxu0
  %v1711 = vadd.f32 0.0, %v1710
  %v1712 = vpop.f32.mrb[0].mxu0
  %1713 = vdwg.mxu0
  %1714 = vrot.lane.b32.xlu0 %v1376, 112
  %v1715 = vpop.permute.xlu0 %1714
  %1716 = vrot.lane.b32.xlu0 %v1376, 80
  %v1717 = vpop.permute.xlu0 %1716
  %v1718 = vsel %vm174, %v1715, 0
  %v1720 = vsel %vm174, %v1717, 0
  %1722 = vmatprep.subr.mxu0 0.0
  %1723 = vmatpush1.xpose.msra.mxu0 %v1720
  %1724 = vmatprep.subr.mxu0 0.0
  %1725 = vmatpush1.xpose.msra.mxu0 0.0
  %1726 = vmatprep.subr.mxu0 0.0
  %1727 = vmatpush1.xpose.msra.mxu0 0.0
  %1728 = vmatprep.subr.mxu0 0.0
  %1729 = vmatpush1.xpose.msra.mxu0 0.0
  %1730 = vmatprep.subr.mxu0 0.0
  %1731 = vmatpush1.xpose.msra.mxu0 0.0
  %1732 = vmatprep.subr.mxu0 0.0
  %1733 = vmatpush1.xpose.msra.mxu0 0.0
  %1734 = vmatprep.subr.mxu0 0.0
  %1735 = vmatpush1.xpose.msra.mxu0 0.0
  %1736 = vmatprep.subr.mxu0 0.0
  %1737 = vmatpush1.xpose.msra.mxu0 0.0
  %1738 = vmatprep.subr.mxu0 0.0
  %1739 = vmatpush1.xpose.msra.mxu0 0.0
  %1740 = vmatprep.subr.mxu0 0.0
  %1741 = vmatpush1.xpose.msra.mxu0 0.0
  %1742 = vmatprep.subr.mxu0 0.0
  %1743 = vmatpush1.xpose.msra.mxu0 0.0
  %1744 = vmatprep.subr.mxu0 0.0
  %1745 = vmatpush1.xpose.msra.mxu0 0.0
  %1746 = vmatprep.subr.mxu0 0.0
  %1747 = vmatpush1.xpose.msra.mxu0 0.0
  %1748 = vmatprep.subr.mxu0 0.0
  %1749 = vmatpush1.xpose.msra.mxu0 0.0
  %1750 = vmatprep.subr.mxu0 0.0
  %1751 = vmatpush1.xpose.msra.mxu0 0.0
  %1752 = vmatprep.subr.mxu0 0.0
  %1753 = vmatpush1.xpose.msra.mxu0 0.0
  %1754 = vmatprep.subr.mxu0 0.0
  %1755 = vmatpush1.xpose.msra.mxu0 0.0
  %1756 = vmatprep.subr.mxu0 0.0
  %1757 = vmatpush1.xpose.msra.mxu0 0.0
  %1758 = vmatprep.subr.mxu0 0.0
  %1759 = vmatpush1.xpose.msra.mxu0 0.0
  %1760 = vmatprep.subr.mxu0 0.0
  %1761 = vmatpush1.xpose.msra.mxu0 0.0
  %1762 = vmatprep.subr.mxu0 0.0
  %1763 = vmatpush1.xpose.msra.mxu0 0.0
  %1764 = vmatprep.subr.mxu0 0.0
  %1765 = vmatpush1.xpose.msra.mxu0 0.0
  %1766 = vmatprep.subr.mxu0 0.0
  %1767 = vmatpush1.xpose.msra.mxu0 0.0
  %1768 = vmatprep.subr.mxu0 0.0
  %1769 = vmatpush1.xpose.msra.mxu0 0.0
  %1770 = vmatprep.subr.mxu0 0.0
  %1771 = vmatpush1.xpose.msra.mxu0 0.0
  %1772 = vmatprep.subr.mxu0 0.0
  %1773 = vmatpush1.xpose.msra.mxu0 0.0
  %1774 = vmatprep.subr.mxu0 0.0
  %1775 = vmatpush1.xpose.msra.mxu0 0.0
  %1776 = vmatprep.subr.mxu0 0.0
  %1777 = vmatpush1.xpose.msra.mxu0 0.0
  %1778 = vmatprep.subr.mxu0 0.0
  %1779 = vmatpush1.xpose.msra.mxu0 0.0
  %1780 = vmatprep.subr.mxu0 0.0
  %1781 = vmatpush1.xpose.msra.mxu0 0.0
  %1782 = vmatprep.subr.mxu0 0.0
  %1783 = vmatpush1.xpose.msra.mxu0 0.0
  %1784 = vmatprep.subr.mxu0 0.0
  %1785 = vmatpush1.xpose.msra.mxu0 0.0
  %1786 = vmatprep.mubr.f32.mxu0 0.0
  %1787 = vmatmul.mubr.f32.gmra.mrb[0].mxu0 %v1718
  %v1788 = vpop.f32.mrb[0].mxu0
  %v1789 = vadd.f32 %v83, %v1788
  %v1790 = vpop.f32.mrb[0].mxu0
  %1791 = vdwg.mxu0
  %v1792 = vsel %vm174, %v1789, -inf
  %1793 = vmax.xlane.f32.xlu0 %v1792
  %v1794 = vpop.xlane.xlu0 %1793
  %v1795 = vsub.f32 %v1789, %v1794
  %v1796 = vmul.f32 %v1795, 1.442695
  %v1797 = vpow.pop %v1796
  %v1798 = vsel %vm174, %v1797, 0.0
  %1799 = vadd.xlane.f32.xlu0 %v1798
  %v1800 = vpop.xlane.xlu0 %1799
  %v1801 = vrcp.pop %v1800
  %v1802 = vmul.f32 %v1800, %v1801
  %v1803 = vsub.f32 2.0, %v1802
  %v1804 = vmul.f32 %v1801, %v1803
  %v1805 = vmul.f32 %v1797, %v1804
  %1806 = vrot.lane.b32.xlu0 %v1376, 48
  %v1807 = vpop.permute.xlu0 %1806
  %v1810 = vsel %vm174, %v1805, 0
  %1812 = vmatprep.subr.mxu0 0.0
  %1813 = vmatpush1.msra.mxu0 %v1807
  %1814 = vmatprep.subr.mxu0 0.0
  %1815 = vmatpush1.msra.mxu0 0.0
  %1816 = vmatprep.subr.mxu0 0.0
  %1817 = vmatpush1.msra.mxu0 0.0
  %1818 = vmatprep.subr.mxu0 0.0
  %1819 = vmatpush1.msra.mxu0 0.0
  %1820 = vmatprep.subr.mxu0 0.0
  %1821 = vmatpush1.msra.mxu0 0.0
  %1822 = vmatprep.subr.mxu0 0.0
  %1823 = vmatpush1.msra.mxu0 0.0
  %1824 = vmatprep.subr.mxu0 0.0
  %1825 = vmatpush1.msra.mxu0 0.0
  %1826 = vmatprep.subr.mxu0 0.0
  %1827 = vmatpush1.msra.mxu0 0.0
  %1828 = vmatprep.subr.mxu0 0.0
  %1829 = vmatpush1.msra.mxu0 0.0
  %1830 = vmatprep.subr.mxu0 0.0
  %1831 = vmatpush1.msra.mxu0 0.0
  %1832 = vmatprep.subr.mxu0 0.0
  %1833 = vmatpush1.msra.mxu0 0.0
  %1834 = vmatprep.subr.mxu0 0.0
  %1835 = vmatpush1.msra.mxu0 0.0
  %1836 = vmatprep.subr.mxu0 0.0
  %1837 = vmatpush1.msra.mxu0 0.0
  %1838 = vmatprep.subr.mxu0 0.0
  %1839 = vmatpush1.msra.mxu0 0.0
  %1840 = vmatprep.subr.mxu0 0.0
  %1841 = vmatpush1.msra.mxu0 0.0
  %1842 = vmatprep.subr.mxu0 0.0
  %1843 = vmatpush1.msra.mxu0 0.0
  %1844 = vmatprep.subr.mxu0 0.0
  %1845 = vmatpush1.msra.mxu0 0.0
  %1846 = vmatprep.subr.mxu0 0.0
  %1847 = vmatpush1.msra.mxu0 0.0
  %1848 = vmatprep.subr.mxu0 0.0
  %1849 = vmatpush1.msra.mxu0 0.0
  %1850 = vmatprep.subr.mxu0 0.0
  %1851 = vmatpush1.msra.mxu0 0.0
  %1852 = vmatprep.subr.mxu0 0.0
  %1853 = vmatpush1.msra.mxu0 0.0
  %1854 = vmatprep.subr.mxu0 0.0
  %1855 = vmatpush1.msra.mxu0 0.0
  %1856 = vmatprep.subr.mxu0 0.0
  %1857 = vmatpush1.msra.mxu0 0.0
  %1858 = vmatprep.subr.mxu0 0.0
  %1859 = vmatpush1.msra.mxu0 0.0
  %1860 = vmatprep.subr.mxu0 0.0
  %1861 = vmatpush1.msra.mxu0 0.0
  %1862 = vmatprep.subr.mxu0 0.0
  %1863 = vmatpush1.msra.mxu0 0.0
  %1864 = vmatprep.subr.mxu0 0.0
  %1865 = vmatpush1.msra.mxu0 0.0
  %1866 = vmatprep.subr.mxu0 0.0
  %1867 = vmatpush1.msra.mxu0 0.0
  %1868 = vmatprep.subr.mxu0 0.0
  %1869 = vmatpush1.msra.mxu0 0.0
  %1870 = vmatprep.subr.mxu0 0.0
  %1871 = vmatpush1.msra.mxu0 0.0
  %1872 = vmatprep.subr.mxu0 0.0
  %1873 = vmatpush1.msra.mxu0 0.0
  %1874 = vmatprep.subr.mxu0 0.0
  %1875 = vmatpush1.msra.mxu0 0.0
  %1876 = vmatprep.mubr.f32.mxu0 0.0
  %1877 = vmatmul.mubr.f32.gmra.mrb[0].mxu0 %v1810
  %v1878 = vpop.f32.mrb[0].mxu0
  %v1879 = vadd.f32 0.0, %v1878
  %v1880 = vpop.f32.mrb[0].mxu0
  %1881 = vdwg.mxu0
  %1882 = vrot.lane.b32.xlu0 %v1376, 104
  %v1883 = vpop.permute.xlu0 %1882
  %1884 = vrot.lane.b32.xlu0 %v1376, 72
  %v1885 = vpop.permute.xlu0 %1884
  %v1886 = vsel %vm174, %v1883, 0
  %v1888 = vsel %vm174, %v1885, 0
  %1890 = vmatprep.subr.mxu0 0.0
  %1891 = vmatpush1.xpose.msra.mxu0 %v1888
  %1892 = vmatprep.subr.mxu0 0.0
  %1893 = vmatpush1.xpose.msra.mxu0 0.0
  %1894 = vmatprep.subr.mxu0 0.0
  %1895 = vmatpush1.xpose.msra.mxu0 0.0
  %1896 = vmatprep.subr.mxu0 0.0
  %1897 = vmatpush1.xpose.msra.mxu0 0.0
  %1898 = vmatprep.subr.mxu0 0.0
  %1899 = vmatpush1.xpose.msra.mxu0 0.0
  %1900 = vmatprep.subr.mxu0 0.0
  %1901 = vmatpush1.xpose.msra.mxu0 0.0
  %1902 = vmatprep.subr.mxu0 0.0
  %1903 = vmatpush1.xpose.msra.mxu0 0.0
  %1904 = vmatprep.subr.mxu0 0.0
  %1905 = vmatpush1.xpose.msra.mxu0 0.0
  %1906 = vmatprep.subr.mxu0 0.0
  %1907 = vmatpush1.xpose.msra.mxu0 0.0
  %1908 = vmatprep.subr.mxu0 0.0
  %1909 = vmatpush1.xpose.msra.mxu0 0.0
  %1910 = vmatprep.subr.mxu0 0.0
  %1911 = vmatpush1.xpose.msra.mxu0 0.0
  %1912 = vmatprep.subr.mxu0 0.0
  %1913 = vmatpush1.xpose.msra.mxu0 0.0
  %1914 = vmatprep.subr.mxu0 0.0
  %1915 = vmatpush1.xpose.msra.mxu0 0.0
  %1916 = vmatprep.subr.mxu0 0.0
  %1917 = vmatpush1.xpose.msra.mxu0 0.0
  %1918 = vmatprep.subr.mxu0 0.0
  %1919 = vmatpush1.xpose.msra.mxu0 0.0
  %1920 = vmatprep.subr.mxu0 0.0
  %1921 = vmatpush1.xpose.msra.mxu0 0.0
  %1922 = vmatprep.subr.mxu0 0.0
  %1923 = vmatpush1.xpose.msra.mxu0 0.0
  %1924 = vmatprep.subr.mxu0 0.0
  %1925 = vmatpush1.xpose.msra.mxu0 0.0
  %1926 = vmatprep.subr.mxu0 0.0
  %1927 = vmatpush1.xpose.msra.mxu0 0.0
  %1928 = vmatprep.subr.mxu0 0.0
  %1929 = vmatpush1.xpose.msra.mxu0 0.0
  %1930 = vmatprep.subr.mxu0 0.0
  %1931 = vmatpush1.xpose.msra.mxu0 0.0
  %1932 = vmatprep.subr.mxu0 0.0
  %1933 = vmatpush1.xpose.msra.mxu0 0.0
  %1934 = vmatprep.subr.mxu0 0.0
  %1935 = vmatpush1.xpose.msra.mxu0 0.0
  %1936 = vmatprep.subr.mxu0 0.0
  %1937 = vmatpush1.xpose.msra.mxu0 0.0
  %1938 = vmatprep.subr.mxu0 0.0
  %1939 = vmatpush1.xpose.msra.mxu0 0.0
  %1940 = vmatprep.subr.mxu0 0.0
  %1941 = vmatpush1.xpose.msra.mxu0 0.0
  %1942 = vmatprep.subr.mxu0 0.0
  %1943 = vmatpush1.xpose.msra.mxu0 0.0
  %1944 = vmatprep.subr.mxu0 0.0
  %1945 = vmatpush1.xpose.msra.mxu0 0.0
  %1946 = vmatprep.subr.mxu0 0.0
  %1947 = vmatpush1.xpose.msra.mxu0 0.0
  %1948 = vmatprep.subr.mxu0 0.0
  %1949 = vmatpush1.xpose.msra.mxu0 0.0
  %1950 = vmatprep.subr.mxu0 0.0
  %1951 = vmatpush1.xpose.msra.mxu0 0.0
  %1952 = vmatprep.subr.mxu0 0.0
  %1953 = vmatpush1.xpose.msra.mxu0 0.0
  %1954 = vmatprep.mubr.f32.mxu0 0.0
  %1955 = vmatmul.mubr.f32.gmra.mrb[0].mxu0 %v1886
  %v1956 = vpop.f32.mrb[0].mxu0
  %v1957 = vadd.f32 %v83, %v1956
  %v1958 = vpop.f32.mrb[0].mxu0
  %1959 = vdwg.mxu0
  %v1960 = vsel %vm174, %v1957, -inf
  %1961 = vmax.xlane.f32.xlu0 %v1960
  %v1962 = vpop.xlane.xlu0 %1961
  %v1963 = vsub.f32 %v1957, %v1962
  %v1964 = vmul.f32 %v1963, 1.442695
  %v1965 = vpow.pop %v1964
  %v1966 = vsel %vm174, %v1965, 0.0
  %1967 = vadd.xlane.f32.xlu0 %v1966
  %v1968 = vpop.xlane.xlu0 %1967
  %v1969 = vrcp.pop %v1968
  %v1970 = vmul.f32 %v1968, %v1969
  %v1971 = vsub.f32 2.0, %v1970
  %v1972 = vmul.f32 %v1969, %v1971
  %v1973 = vmul.f32 %v1965, %v1972
  %1974 = vrot.lane.b32.xlu0 %v1376, 40
  %v1975 = vpop.permute.xlu0 %1974
  %v1978 = vsel %vm174, %v1973, 0
  %1980 = vmatprep.subr.mxu0 0.0
  %1981 = vmatpush1.msra.mxu0 %v1975
  %1982 = vmatprep.subr.mxu0 0.0
  %1983 = vmatpush1.msra.mxu0 0.0
  %1984 = vmatprep.subr.mxu0 0.0
  %1985 = vmatpush1.msra.mxu0 0.0
  %1986 = vmatprep.subr.mxu0 0.0
  %1987 = vmatpush1.msra.mxu0 0.0
  %1988 = vmatprep.subr.mxu0 0.0
  %1989 = vmatpush1.msra.mxu0 0.0
  %1990 = vmatprep.subr.mxu0 0.0
  %1991 = vmatpush1.msra.mxu0 0.0
  %1992 = vmatprep.subr.mxu0 0.0
  %1993 = vmatpush1.msra.mxu0 0.0
  %1994 = vmatprep.subr.mxu0 0.0
  %1995 = vmatpush1.msra.mxu0 0.0
  %1996 = vmatprep.subr.mxu0 0.0
  %1997 = vmatpush1.msra.mxu0 0.0
  %1998 = vmatprep.subr.mxu0 0.0
  %1999 = vmatpush1.msra.mxu0 0.0
  %2000 = vmatprep.subr.mxu0 0.0
  %2001 = vmatpush1.msra.mxu0 0.0
  %2002 = vmatprep.subr.mxu0 0.0
  %2003 = vmatpush1.msra.mxu0 0.0
  %2004 = vmatprep.subr.mxu0 0.0
  %2005 = vmatpush1.msra.mxu0 0.0
  %2006 = vmatprep.subr.mxu0 0.0
  %2007 = vmatpush1.msra.mxu0 0.0
  %2008 = vmatprep.subr.mxu0 0.0
  %2009 = vmatpush1.msra.mxu0 0.0
  %2010 = vmatprep.subr.mxu0 0.0
  %2011 = vmatpush1.msra.mxu0 0.0
  %2012 = vmatprep.subr.mxu0 0.0
  %2013 = vmatpush1.msra.mxu0 0.0
  %2014 = vmatprep.subr.mxu0 0.0
  %2015 = vmatpush1.msra.mxu0 0.0
  %2016 = vmatprep.subr.mxu0 0.0
  %2017 = vmatpush1.msra.mxu0 0.0
  %2018 = vmatprep.subr.mxu0 0.0
  %2019 = vmatpush1.msra.mxu0 0.0
  %2020 = vmatprep.subr.mxu0 0.0
  %2021 = vmatpush1.msra.mxu0 0.0
  %2022 = vmatprep.subr.mxu0 0.0
  %2023 = vmatpush1.msra.mxu0 0.0
  %2024 = vmatprep.subr.mxu0 0.0
  %2025 = vmatpush1.msra.mxu0 0.0
  %2026 = vmatprep.subr.mxu0 0.0
  %2027 = vmatpush1.msra.mxu0 0.0
  %2028 = vmatprep.subr.mxu0 0.0
  %2029 = vmatpush1.msra.mxu0 0.0
  %2030 = vmatprep.subr.mxu0 0.0
  %2031 = vmatpush1.msra.mxu0 0.0
  %2032 = vmatprep.subr.mxu0 0.0
  %2033 = vmatpush1.msra.mxu0 0.0
  %2034 = vmatprep.subr.mxu0 0.0
  %2035 = vmatpush1.msra.mxu0 0.0
  %2036 = vmatprep.subr.mxu0 0.0
  %2037 = vmatpush1.msra.mxu0 0.0
  %2038 = vmatprep.subr.mxu0 0.0
  %2039 = vmatpush1.msra.mxu0 0.0
  %2040 = vmatprep.subr.mxu0 0.0
  %2041 = vmatpush1.msra.mxu0 0.0
  %2042 = vmatprep.subr.mxu0 0.0
  %2043 = vmatpush1.msra.mxu0 0.0
  %2044 = vmatprep.mubr.f32.mxu0 0.0
  %2045 = vmatmul.mubr.f32.gmra.mrb[0].mxu0 %v1978
  %v2046 = vpop.f32.mrb[0].mxu0
  %v2047 = vadd.f32 0.0, %v2046
  %v2048 = vpop.f32.mrb[0].mxu0
  %2049 = vdwg.mxu0
  %2051 = vrot.lane.b32.xlu0 %v1711, 8
  %v2052 = vpop.permute.xlu0 %2051
  %2055 = vrot.lane.b32.xlu0 %v1879, 16
  %v2056 = vpop.permute.xlu0 %2055
  %2059 = vrot.lane.b32.xlu0 %v2047, 24
  %v2060 = vpop.permute.xlu0 %2059
  %v2062 = vsel %vm174, %v1543, %v2052
  %v2063 = vsel %vm856, %v2062, %v2056
  %v2064 = vsel %vm858, %v2063, %v2060
  %s2065 = scalar_lea.vmem %s5, 32
  %v2066 = vld [vmem:[%s2065] sm:$0xff]
  %v2067 = vld [vmem:[%s2065 + $0x8] sm:$0xff]
  %v2068 = vld [vmem:[%s2065 + $0x10] sm:$0xff]
  %v2069 = vld [vmem:[%s2065 + $0x18] sm:$0xff]
  %s2070 = scalar_lea.vmem %s6, 1
  %v2071 = vld [vmem:[%s2070] sm:$0x1]
  %v2073 = vlaneseq
  %v2074 = vshrl.u32 %v2073, 7
  %v2075 = vsub.s32 0, %v2074
  %v2076 = vrot.slane %v2071, %v2075
  %v2079 = vsel %vm98, %v2064, 0
  %2081 = vmatprep.subr.mxu0 0.0
  %2082 = vmatpush1.msra.mxu0 %v2066
  %2083 = vmatprep.subr.mxu0 0.0
  %2084 = vmatpush1.msra.mxu0 %v2067
  %2085 = vmatprep.subr.mxu0 0.0
  %2086 = vmatpush1.msra.mxu0 %v2068
  %2087 = vmatprep.subr.mxu0 0.0
  %2088 = vmatpush1.msra.mxu0 %v2069
  %2089 = vmatprep.subr.mxu0 0.0
  %2090 = vmatpush1.msra.mxu0 0.0
  %2091 = vmatprep.subr.mxu0 0.0
  %2092 = vmatpush1.msra.mxu0 0.0
  %2093 = vmatprep.subr.mxu0 0.0
  %2094 = vmatpush1.msra.mxu0 0.0
  %2095 = vmatprep.subr.mxu0 0.0
  %2096 = vmatpush1.msra.mxu0 0.0
  %2097 = vmatprep.subr.mxu0 0.0
  %2098 = vmatpush1.msra.mxu0 0.0
  %2099 = vmatprep.subr.mxu0 0.0
  %2100 = vmatpush1.msra.mxu0 0.0
  %2101 = vmatprep.subr.mxu0 0.0
  %2102 = vmatpush1.msra.mxu0 0.0
  %2103 = vmatprep.subr.mxu0 0.0
  %2104 = vmatpush1.msra.mxu0 0.0
  %2105 = vmatprep.subr.mxu0 0.0
  %2106 = vmatpush1.msra.mxu0 0.0
  %2107 = vmatprep.subr.mxu0 0.0
  %2108 = vmatpush1.msra.mxu0 0.0
  %2109 = vmatprep.subr.mxu0 0.0
  %2110 = vmatpush1.msra.mxu0 0.0
  %2111 = vmatprep.subr.mxu0 0.0
  %2112 = vmatpush1.msra.mxu0 0.0
  %2113 = vmatprep.subr.mxu0 0.0
  %2114 = vmatpush1.msra.mxu0 0.0
  %2115 = vmatprep.subr.mxu0 0.0
  %2116 = vmatpush1.msra.mxu0 0.0
  %2117 = vmatprep.subr.mxu0 0.0
  %2118 = vmatpush1.msra.mxu0 0.0
  %2119 = vmatprep.subr.mxu0 0.0
  %2120 = vmatpush1.msra.mxu0 0.0
  %2121 = vmatprep.subr.mxu0 0.0
  %2122 = vmatpush1.msra.mxu0 0.0
  %2123 = vmatprep.subr.mxu0 0.0
  %2124 = vmatpush1.msra.mxu0 0.0
  %2125 = vmatprep.subr.mxu0 0.0
  %2126 = vmatpush1.msra.mxu0 0.0
  %2127 = vmatprep.subr.mxu0 0.0
  %2128 = vmatpush1.msra.mxu0 0.0
  %2129 = vmatprep.subr.mxu0 0.0
  %2130 = vmatpush1.msra.mxu0 0.0
  %2131 = vmatprep.subr.mxu0 0.0
  %2132 = vmatpush1.msra.mxu0 0.0
  %2133 = vmatprep.subr.mxu0 0.0
  %2134 = vmatpush1.msra.mxu0 0.0
  %2135 = vmatprep.subr.mxu0 0.0
  %2136 = vmatpush1.msra.mxu0 0.0
  %2137 = vmatprep.subr.mxu0 0.0
  %2138 = vmatpush1.msra.mxu0 0.0
  %2139 = vmatprep.subr.mxu0 0.0
  %2140 = vmatpush1.msra.mxu0 0.0
  %2141 = vmatprep.subr.mxu0 0.0
  %2142 = vmatpush1.msra.mxu0 0.0
  %2143 = vmatprep.subr.mxu0 0.0
  %2144 = vmatpush1.msra.mxu0 0.0
  %2145 = vmatprep.mubr.f32.mxu0 0.0
  %2146 = vmatmul.mubr.f32.gmra.mrb[0].mxu0 %v2079
  %v2147 = vpop.f32.mrb[0].mxu0
  %v2148 = vadd.f32 %v2076, %v2147
  %v2149 = vpop.f32.mrb[0].mxu0
  %2150 = vdwg.mxu0
  %v2152 = vcombine.high %v2148, %v2148
  %v2154 = vadd.f32 %v1289, %v2148
  %v2155 = vadd.f32 %v1290, %v2152
  %s2156 = scalar_lea.vmem %s7, 1
  %v2157 = vld [vmem:[%s2156] sm:$0x1]
  %s2158 = scalar_lea.vmem %s8, 1
  %v2159 = vld [vmem:[%s2158] sm:$0x1]
  %v2162 = vcombine.low %v2154, %v2155
  %v2164 = vsel %vm98, %v2162, 0.0
  %2165 = vadd.xlane.f32.xlu0 %v2164
  %v2166 = vpop.xlane.xlu0 %2165
  %v2167 = vmul.f32 %v2166, %v958
  %v2170 = vunpack.c.l.s4 839922192
  %v2171 = vunpack.c.0.s8 %v2170
  %v2172 = vlaneseq
  %v2173 = vshrl.u32 %v2172, 7
  %v2174 = vsub.s32 %v2171, %v2173
  %v2175 = vrot.slane %v2167, %v2174
  %v2177 = vunpack.c.l.s4 1985246804
  %v2178 = vunpack.c.0.s8 %v2177
  %v2179 = vlaneseq
  %v2180 = vshrl.u32 %v2179, 7
  %v2181 = vsub.s32 %v2178, %v2180
  %v2182 = vrot.slane %v2167, %v2181
  %v2185 = vsub.f32 %v2154, %v2175
  %v2186 = vsub.f32 %v2155, %v2182
  %v2187 = vmul.f32 %v2185, %v2185
  %v2188 = vmul.f32 %v2186, %v2186
  %v2191 = vcombine.low %v2187, %v2188
  %v2193 = vsel %vm98, %v2191, 0.0
  %2194 = vadd.xlane.f32.xlu0 %v2193
  %v2195 = vpop.xlane.xlu0 %2194
  %v2196 = vmul.f32 %v2195, %v958
  %v2197 = vadd.f32 %v2196, 1e-05
  %v2198 = vrsqrt.pop %v2197
  %v2201 = vunpack.c.l.s4 839922192
  %v2202 = vunpack.c.0.s8 %v2201
  %v2203 = vlaneseq
  %v2204 = vshrl.u32 %v2203, 7
  %v2205 = vsub.s32 %v2202, %v2204
  %v2206 = vrot.slane %v2198, %v2205
  %v2208 = vunpack.c.l.s4 1985246804
  %v2209 = vunpack.c.0.s8 %v2208
  %v2210 = vlaneseq
  %v2211 = vshrl.u32 %v2210, 7
  %v2212 = vsub.s32 %v2209, %v2211
  %v2213 = vrot.slane %v2198, %v2212
  %v2216 = vmul.f32 %v2185, %v2206
  %v2217 = vmul.f32 %v2186, %v2213
  %v2219 = vlaneseq
  %v2220 = vshrl.u32 %v2219, 7
  %v2221 = vsub.s32 0, %v2220
  %v2222 = vrot.slane %v2157, %v2221
  %v2224 = vcombine.high %v2222, %v2222
  %v2226 = vmul.f32 %v2216, %v2222
  %v2227 = vmul.f32 %v2217, %v2224
  %v2229 = vlaneseq
  %v2230 = vshrl.u32 %v2229, 7
  %v2231 = vsub.s32 0, %v2230
  %v2232 = vrot.slane %v2159, %v2231
  %v2234 = vcombine.high %v2232, %v2232
  %v2236 = vadd.f32 %v2226, %v2232
  %v2237 = vadd.f32 %v2227, %v2234
  %s2238 = scalar_lea.vmem %s9, 32
  %v2239 = vld [vmem:[%s2238] sm:$0xff]
  %v2240 = vld [vmem:[%s2238 + $0x8] sm:$0xff]
  %v2241 = vld [vmem:[%s2238 + $0x10] sm:$0xff]
  %v2242 = vld [vmem:[%s2238 + $0x18] sm:$0xff]
  %s2243 = scalar_lea.vmem %s10, 1
  %v2244 = vld [vmem:[%s2243] sm:$0x1]
  %v2246 = vlaneseq
  %v2247 = vshrl.u32 %v2246, 7
  %v2248 = vsub.s32 0, %v2247
  %v2249 = vrot.slane %v2244, %v2248
  %v2253 = vcombine.low %v2236, %v2237
  %v2254 = vsel %vm98, %v2253, 0
  %2256 = vmatprep.subr.mxu0 0.0
  %2257 = vmatpush1.msra.mxu0 %v2239
  %2258 = vmatprep.subr.mxu0 0.0
  %2259 = vmatpush1.msra.mxu0 %v2240
  %2260 = vmatprep.subr.mxu0 0.0
  %2261 = vmatpush1.msra.mxu0 %v2241
  %2262 = vmatprep.subr.mxu0 0.0
  %2263 = vmatpush1.msra.mxu0 %v2242
  %2264 = vmatprep.subr.mxu0 0.0
  %2265 = vmatpush1.msra.mxu0 0.0
  %2266 = vmatprep.subr.mxu0 0.0
  %2267 = vmatpush1.msra.mxu0 0.0
  %2268 = vmatprep.subr.mxu0 0.0
  %2269 = vmatpush1.msra.mxu0 0.0
  %2270 = vmatprep.subr.mxu0 0.0
  %2271 = vmatpush1.msra.mxu0 0.0
  %2272 = vmatprep.subr.mxu0 0.0
  %2273 = vmatpush1.msra.mxu0 0.0
  %2274 = vmatprep.subr.mxu0 0.0
  %2275 = vmatpush1.msra.mxu0 0.0
  %2276 = vmatprep.subr.mxu0 0.0
  %2277 = vmatpush1.msra.mxu0 0.0
  %2278 = vmatprep.subr.mxu0 0.0
  %2279 = vmatpush1.msra.mxu0 0.0
  %2280 = vmatprep.subr.mxu0 0.0
  %2281 = vmatpush1.msra.mxu0 0.0
  %2282 = vmatprep.subr.mxu0 0.0
  %2283 = vmatpush1.msra.mxu0 0.0
  %2284 = vmatprep.subr.mxu0 0.0
  %2285 = vmatpush1.msra.mxu0 0.0
  %2286 = vmatprep.subr.mxu0 0.0
  %2287 = vmatpush1.msra.mxu0 0.0
  %2288 = vmatprep.subr.mxu0 0.0
  %2289 = vmatpush1.msra.mxu0 0.0
  %2290 = vmatprep.subr.mxu0 0.0
  %2291 = vmatpush1.msra.mxu0 0.0
  %2292 = vmatprep.subr.mxu0 0.0
  %2293 = vmatpush1.msra.mxu0 0.0
  %2294 = vmatprep.subr.mxu0 0.0
  %2295 = vmatpush1.msra.mxu0 0.0
  %2296 = vmatprep.subr.mxu0 0.0
  %2297 = vmatpush1.msra.mxu0 0.0
  %2298 = vmatprep.subr.mxu0 0.0
  %2299 = vmatpush1.msra.mxu0 0.0
  %2300 = vmatprep.subr.mxu0 0.0
  %2301 = vmatpush1.msra.mxu0 0.0
  %2302 = vmatprep.subr.mxu0 0.0
  %2303 = vmatpush1.msra.mxu0 0.0
  %2304 = vmatprep.subr.mxu0 0.0
  %2305 = vmatpush1.msra.mxu0 0.0
  %2306 = vmatprep.subr.mxu0 0.0
  %2307 = vmatpush1.msra.mxu0 0.0
  %2308 = vmatprep.subr.mxu0 0.0
  %2309 = vmatpush1.msra.mxu0 0.0
  %2310 = vmatprep.subr.mxu0 0.0
  %2311 = vmatpush1.msra.mxu0 0.0
  %2312 = vmatprep.subr.mxu0 0.0
  %2313 = vmatpush1.msra.mxu0 0.0
  %2314 = vmatprep.subr.mxu0 0.0
  %2315 = vmatpush1.msra.mxu0 0.0
  %2316 = vmatprep.subr.mxu0 0.0
  %2317 = vmatpush1.msra.mxu0 0.0
  %2318 = vmatprep.subr.mxu0 0.0
  %2319 = vmatpush1.msra.mxu0 0.0
  %2320 = vmatprep.mubr.f32.mxu0 0.0
  %2321 = vmatmul.mubr.f32.gmra.mrb[0].mxu0 %v2254
  %v2322 = vpop.f32.mrb[0].mxu0
  %v2323 = vadd.f32 %v2249, %v2322
  %v2324 = vpop.f32.mrb[0].mxu0
  %2325 = vdwg.mxu0
  %v2326 = vmax.f32 %v2323, 0.0
  %s2327 = scalar_lea.vmem %s11, 64
  %v2328 = vld [vmem:[%s2327] sm:$0xff]
  %v2329 = vld [vmem:[%s2327 + $0x8] sm:$0xff]
  %v2330 = vld [vmem:[%s2327 + $0x10] sm:$0xff]
  %v2331 = vld [vmem:[%s2327 + $0x18] sm:$0xff]
  %v2332 = vld [vmem:[%s2327 + $0x20] sm:$0xff]
  %v2333 = vld [vmem:[%s2327 + $0x28] sm:$0xff]
  %v2334 = vld [vmem:[%s2327 + $0x30] sm:$0xff]
  %v2335 = vld [vmem:[%s2327 + $0x38] sm:$0xff]
  %s2336 = scalar_lea.vmem %s12, 1
  %v2337 = vld [vmem:[%s2336] sm:$0x1]
  %v2339 = vlaneseq
  %v2340 = vshrl.u32 %v2339, 7
  %v2341 = vsub.s32 0, %v2340
  %v2342 = vrot.slane %v2337, %v2341
  %v2345 = vsel %vm1132, %v2326, 0
  %2347 = vmatprep.subr.mxu0 0.0
  %2348 = vmatpush1.msra.mxu0 %v2328
  %2349 = vmatprep.subr.mxu0 0.0
  %2350 = vmatpush1.msra.mxu0 %v2329
  %2351 = vmatprep.subr.mxu0 0.0
  %2352 = vmatpush1.msra.mxu0 %v2330
  %2353 = vmatprep.subr.mxu0 0.0
  %2354 = vmatpush1.msra.mxu0 %v2331
  %2355 = vmatprep.subr.mxu0 0.0
  %2356 = vmatpush1.msra.mxu0 %v2332
  %2357 = vmatprep.subr.mxu0 0.0
  %2358 = vmatpush1.msra.mxu0 %v2333
  %2359 = vmatprep.subr.mxu0 0.0
  %2360 = vmatpush1.msra.mxu0 %v2334
  %2361 = vmatprep.subr.mxu0 0.0
  %2362 = vmatpush1.msra.mxu0 %v2335
  %2363 = vmatprep.subr.mxu0 0.0
  %2364 = vmatpush1.msra.mxu0 0.0
  %2365 = vmatprep.subr.mxu0 0.0
  %2366 = vmatpush1.msra.mxu0 0.0
  %2367 = vmatprep.subr.mxu0 0.0
  %2368 = vmatpush1.msra.mxu0 0.0
  %2369 = vmatprep.subr.mxu0 0.0
  %2370 = vmatpush1.msra.mxu0 0.0
  %2371 = vmatprep.subr.mxu0 0.0
  %2372 = vmatpush1.msra.mxu0 0.0
  %2373 = vmatprep.subr.mxu0 0.0
  %2374 = vmatpush1.msra.mxu0 0.0
  %2375 = vmatprep.subr.mxu0 0.0
  %2376 = vmatpush1.msra.mxu0 0.0
  %2377 = vmatprep.subr.mxu0 0.0
  %2378 = vmatpush1.msra.mxu0 0.0
  %2379 = vmatprep.subr.mxu0 0.0
  %2380 = vmatpush1.msra.mxu0 0.0
  %2381 = vmatprep.subr.mxu0 0.0
  %2382 = vmatpush1.msra.mxu0 0.0
  %2383 = vmatprep.subr.mxu0 0.0
  %2384 = vmatpush1.msra.mxu0 0.0
  %2385 = vmatprep.subr.mxu0 0.0
  %2386 = vmatpush1.msra.mxu0 0.0
  %2387 = vmatprep.subr.mxu0 0.0
  %2388 = vmatpush1.msra.mxu0 0.0
  %2389 = vmatprep.subr.mxu0 0.0
  %2390 = vmatpush1.msra.mxu0 0.0
  %2391 = vmatprep.subr.mxu0 0.0
  %2392 = vmatpush1.msra.mxu0 0.0
  %2393 = vmatprep.subr.mxu0 0.0
  %2394 = vmatpush1.msra.mxu0 0.0
  %2395 = vmatprep.subr.mxu0 0.0
  %2396 = vmatpush1.msra.mxu0 0.0
  %2397 = vmatprep.subr.mxu0 0.0
  %2398 = vmatpush1.msra.mxu0 0.0
  %2399 = vmatprep.subr.mxu0 0.0
  %2400 = vmatpush1.msra.mxu0 0.0
  %2401 = vmatprep.subr.mxu0 0.0
  %2402 = vmatpush1.msra.mxu0 0.0
  %2403 = vmatprep.subr.mxu0 0.0
  %2404 = vmatpush1.msra.mxu0 0.0
  %2405 = vmatprep.subr.mxu0 0.0
  %2406 = vmatpush1.msra.mxu0 0.0
  %2407 = vmatprep.subr.mxu0 0.0
  %2408 = vmatpush1.msra.mxu0 0.0
  %2409 = vmatprep.subr.mxu0 0.0
  %2410 = vmatpush1.msra.mxu0 0.0
  %2411 = vmatprep.mubr.f32.mxu0 0.0
  %2412 = vmatmul.mubr.f32.gmra.mrb[0].mxu0 %v2345
  %v2413 = vpop.f32.mrb[0].mxu0
  %v2414 = vadd.f32 %v2342, %v2413
  %v2415 = vpop.f32.mrb[0].mxu0
  %2416 = vdwg.mxu0
  %v2418 = vcombine.high %v2414, %v2414
  %v2420 = vadd.f32 %v2236, %v2414
  %v2421 = vadd.f32 %v2237, %v2418
  %s2422 = scalar_lea.vmem %s13, 1
  %v2423 = vld [vmem:[%s2422] sm:$0x1]
  %s2424 = scalar_lea.vmem %s14, 1
  %v2425 = vld [vmem:[%s2424] sm:$0x1]
  %v2428 = vcombine.low %v2420, %v2421
  %v2430 = vsel %vm98, %v2428, 0.0
  %2431 = vadd.xlane.f32.xlu0 %v2430
  %v2432 = vpop.xlane.xlu0 %2431
  %v2433 = vmul.f32 %v2432, %v958
  %v2436 = vunpack.c.l.s4 839922192
  %v2437 = vunpack.c.0.s8 %v2436
  %v2438 = vlaneseq
  %v2439 = vshrl.u32 %v2438, 7
  %v2440 = vsub.s32 %v2437, %v2439
  %v2441 = vrot.slane %v2433, %v2440
  %v2443 = vunpack.c.l.s4 1985246804
  %v2444 = vunpack.c.0.s8 %v2443
  %v2445 = vlaneseq
  %v2446 = vshrl.u32 %v2445, 7
  %v2447 = vsub.s32 %v2444, %v2446
  %v2448 = vrot.slane %v2433, %v2447
  %v2451 = vsub.f32 %v2420, %v2441
  %v2452 = vsub.f32 %v2421, %v2448
  %v2453 = vmul.f32 %v2451, %v2451
  %v2454 = vmul.f32 %v2452, %v2452
  %v2457 = vcombine.low %v2453, %v2454
  %v2459 = vsel %vm98, %v2457, 0.0
  %2460 = vadd.xlane.f32.xlu0 %v2459
  %v2461 = vpop.xlane.xlu0 %2460
  %v2462 = vmul.f32 %v2461, %v958
  %v2463 = vadd.f32 %v2462, 1e-05
  %v2464 = vrsqrt.pop %v2463
  %v2467 = vunpack.c.l.s4 839922192
  %v2468 = vunpack.c.0.s8 %v2467
  %v2469 = vlaneseq
  %v2470 = vshrl.u32 %v2469, 7
  %v2471 = vsub.s32 %v2468, %v2470
  %v2472 = vrot.slane %v2464, %v2471
  %v2474 = vunpack.c.l.s4 1985246804
  %v2475 = vunpack.c.0.s8 %v2474
  %v2476 = vlaneseq
  %v2477 = vshrl.u32 %v2476, 7
  %v2478 = vsub.s32 %v2475, %v2477
  %v2479 = vrot.slane %v2464, %v2478
  %v2482 = vmul.f32 %v2451, %v2472
  %v2483 = vmul.f32 %v2452, %v2479
  %v2485 = vlaneseq
  %v2486 = vshrl.u32 %v2485, 7
  %v2487 = vsub.s32 0, %v2486
  %v2488 = vrot.slane %v2423, %v2487
  %v2490 = vcombine.high %v2488, %v2488
  %v2492 = vmul.f32 %v2482, %v2488
  %v2493 = vmul.f32 %v2483, %v2490
  %v2495 = vlaneseq
  %v2496 = vshrl.u32 %v2495, 7
  %v2497 = vsub.s32 0, %v2496
  %v2498 = vrot.slane %v2425, %v2497
  %v2500 = vcombine.high %v2498, %v2498
  %v2502 = vadd.f32 %v2492, %v2498
  %v2503 = vadd.f32 %v2493, %v2500
  %vm2504 = vcmask 253952
  %2505 = vst.msk [vmem:[#allocation2] sm:$0x1] %vm2504, %v2502
  %v2507 = vlaneseq
  %v2508 = vshrl.u32 %v2507, 7
  %v2509 = vsub.s32 1, %v2508
  %v2510 = vrot.slane %v2502, %v2509
  %2511 = vrot.lane.b32.xlu0 %v2510, 32
  %v2512 = vpop.permute.xlu0 %2511
  %vm2514 = vcmask 517377
  %2515 = vst.msk [vmem:[#allocation2 - $0x1] sm:$0x2] %vm2514, %v2512
  %v2516 = vlaneseq
  %v2517 = vshrl.u32 %v2516, 7
  %v2518 = vsub.s32 2, %v2517
  %v2519 = vrot.slane %v2502, %v2518
  %2520 = vrot.lane.b32.xlu0 %v2519, 64
  %v2521 = vpop.permute.xlu0 %2520
  %vm2523 = vcmask 780802
  %2524 = vst.msk [vmem:[#allocation2 - $0x2] sm:$0x4] %vm2523, %v2521
  %v2525 = vlaneseq
  %v2526 = vshrl.u32 %v2525, 7
  %v2527 = vsub.s32 3, %v2526
  %v2528 = vrot.slane %v2502, %v2527
  %2529 = vrot.lane.b32.xlu0 %v2528, 96
  %v2530 = vpop.permute.xlu0 %2529
  %vm2532 = vcmask 1044227
  %2533 = vst.msk [vmem:[#allocation2 - $0x3] sm:$0x8] %vm2532, %v2530
  %2534 = vst.msk [vmem:[#allocation2 + $0x1] sm:$0x1] %vm2504, %v2503
  %v2536 = vlaneseq
  %v2537 = vshrl.u32 %v2536, 7
  %v2538 = vsub.s32 1, %v2537
  %v2539 = vrot.slane %v2503, %v2538
  %2540 = vrot.lane.b32.xlu0 %v2539, 32
  %v2541 = vpop.permute.xlu0 %2540
  %2543 = vst.msk [vmem:[#allocation2] sm:$0x2] %vm2514, %v2541
  %v2544 = vlaneseq
  %v2545 = vshrl.u32 %v2544, 7
  %v2546 = vsub.s32 2, %v2545
  %v2547 = vrot.slane %v2503, %v2546
  %2548 = vrot.lane.b32.xlu0 %v2547, 64
  %v2549 = vpop.permute.xlu0 %2548
  %2551 = vst.msk [vmem:[#allocation2 - $0x1] sm:$0x4] %vm2523, %v2549
  %v2552 = vlaneseq
  %v2553 = vshrl.u32 %v2552, 7
  %v2554 = vsub.s32 3, %v2553
  %v2555 = vrot.slane %v2503, %v2554
  %2556 = vrot.lane.b32.xlu0 %v2555, 96
  %v2557 = vpop.permute.xlu0 %2556
  %2559 = vst.msk [vmem:[#allocation2 - $0x2] sm:$0x8] %vm2532, %v2557
  %v2560 = vld [vmem:[#allocation2] sm:$0x3]
  %v2561 = vld [vmem:[%s15] sm:$0xff]
  %v2562 = vld [vmem:[%s15 + $0x8] sm:$0xff]
  %v2563 = vld [vmem:[%s15 + $0x10] sm:$0xff]
  %v2564 = vld [vmem:[%s15 + $0x18] sm:$0xff]
  %v2565 = vld [vmem:[%s15 + $0x20] sm:$0xff]
  %v2566 = vld [vmem:[%s15 + $0x28] sm:$0xff]
  %v2567 = vld [vmem:[%s15 + $0x30] sm:$0xff]
  %v2568 = vld [vmem:[%s15 + $0x38] sm:$0xff]
  %v2569 = vld [vmem:[%s15 + $0x40] sm:$0xff]
  %v2570 = vld [vmem:[%s15 + $0x48] sm:$0xff]
  %v2571 = vld [vmem:[%s15 + $0x50] sm:$0xff]
  %v2572 = vld [vmem:[%s15 + $0x58] sm:$0xff]
  %v2573 = vld [vmem:[%s15 + $0x60] sm:$0xff]
  %v2574 = vld [vmem:[%s15 + $0x68] sm:$0xff]
  %v2575 = vld [vmem:[%s15 + $0x70] sm:$0xff]
  %v2576 = vld [vmem:[%s15 + $0x78] sm:$0xff]
  %v2577 = vld [vmem:[%s15 + $0x80] sm:$0xff]
  %v2578 = vld [vmem:[%s15 + $0x88] sm:$0xff]
  %v2579 = vld [vmem:[%s15 + $0x90] sm:$0xff]
  %v2580 = vld [vmem:[%s15 + $0x98] sm:$0xff]
  %v2581 = vld [vmem:[%s15 + $0xa0] sm:$0xff]
  %v2582 = vld [vmem:[%s15 + $0xa8] sm:$0xff]
  %v2583 = vld [vmem:[%s15 + $0xb0] sm:$0xff]
  %v2584 = vld [vmem:[%s15 + $0xb8] sm:$0xff]
  %v2585 = vld [vmem:[%s15 + $0xc0] sm:$0xff]
  %v2586 = vld [vmem:[%s15 + $0xc8] sm:$0xff]
  %v2587 = vld [vmem:[%s15 + $0xd0] sm:$0xff]
  %v2588 = vld [vmem:[%s15 + $0xd8] sm:$0xff]
  %v2589 = vld [vmem:[%s15 + $0xe0] sm:$0xff]
  %v2590 = vld [vmem:[%s15 + $0xe8] sm:$0xff]
  %v2591 = vld [vmem:[%s15 + $0xf0] sm:$0xff]
  %v2592 = vld [vmem:[%s15 + $0xf8] sm:$0xff]
  %v2593 = vld [vmem:[%s16] sm:$0x3]
  %v2595 = vlaneseq
  %v2596 = vshrl.u32 %v2595, 7
  %v2597 = vsub.s32 0, %v2596
  %v2598 = vrot.slane %v2593, %v2597
  %v2599 = vlaneseq
  %v2600 = vshrl.u32 %v2599, 7
  %v2601 = vsub.s32 1, %v2600
  %v2602 = vrot.slane %v2593, %v2601
  %2605 = vmatprep.subr.mxu0 %v2562
  %2606 = vmatpush1.msra.mxu0 %v2561
  %2607 = vmatprep.subr.mxu0 %v2564
  %2608 = vmatpush1.msra.mxu0 %v2563
  %2609 = vmatprep.subr.mxu0 %v2566
  %2610 = vmatpush1.msra.mxu0 %v2565
  %2611 = vmatprep.subr.mxu0 %v2568
  %2612 = vmatpush1.msra.mxu0 %v2567
  %2613 = vmatprep.subr.mxu0 %v2570
  %2614 = vmatpush1.msra.mxu0 %v2569
  %2615 = vmatprep.subr.mxu0 %v2572
  %2616 = vmatpush1.msra.mxu0 %v2571
  %2617 = vmatprep.subr.mxu0 %v2574
  %2618 = vmatpush1.msra.mxu0 %v2573
  %2619 = vmatprep.subr.mxu0 %v2576
  %2620 = vmatpush1.msra.mxu0 %v2575
  %2621 = vmatprep.subr.mxu0 %v2578
  %2622 = vmatpush1.msra.mxu0 %v2577
  %2623 = vmatprep.subr.mxu0 %v2580
  %2624 = vmatpush1.msra.mxu0 %v2579
  %2625 = vmatprep.subr.mxu0 %v2582
  %2626 = vmatpush1.msra.mxu0 %v2581
  %2627 = vmatprep.subr.mxu0 %v2584
  %2628 = vmatpush1.msra.mxu0 %v2583
  %2629 = vmatprep.subr.mxu0 %v2586
  %2630 = vmatpush1.msra.mxu0 %v2585
  %2631 = vmatprep.subr.mxu0 %v2588
  %2632 = vmatpush1.msra.mxu0 %v2587
  %2633 = vmatprep.subr.mxu0 %v2590
  %2634 = vmatpush1.msra.mxu0 %v2589
  %2635 = vmatprep.subr.mxu0 %v2592
  %2636 = vmatpush1.msra.mxu0 %v2591
  %2637 = vmatprep.subr.mxu0 0.0
  %2638 = vmatpush1.msra.mxu0 0.0
  %2639 = vmatprep.subr.mxu0 0.0
  %2640 = vmatpush1.msra.mxu0 0.0
  %2641 = vmatprep.subr.mxu0 0.0
  %2642 = vmatpush1.msra.mxu0 0.0
  %2643 = vmatprep.subr.mxu0 0.0
  %2644 = vmatpush1.msra.mxu0 0.0
  %2645 = vmatprep.subr.mxu0 0.0
  %2646 = vmatpush1.msra.mxu0 0.0
  %2647 = vmatprep.subr.mxu0 0.0
  %2648 = vmatpush1.msra.mxu0 0.0
  %2649 = vmatprep.subr.mxu0 0.0
  %2650 = vmatpush1.msra.mxu0 0.0
  %2651 = vmatprep.subr.mxu0 0.0
  %2652 = vmatpush1.msra.mxu0 0.0
  %2653 = vmatprep.subr.mxu0 0.0
  %2654 = vmatpush1.msra.mxu0 0.0
  %2655 = vmatprep.subr.mxu0 0.0
  %2656 = vmatpush1.msra.mxu0 0.0
  %2657 = vmatprep.subr.mxu0 0.0
  %2658 = vmatpush1.msra.mxu0 0.0
  %2659 = vmatprep.subr.mxu0 0.0
  %2660 = vmatpush1.msra.mxu0 0.0
  %2661 = vmatprep.subr.mxu0 0.0
  %2662 = vmatpush1.msra.mxu0 0.0
  %2663 = vmatprep.subr.mxu0 0.0
  %2664 = vmatpush1.msra.mxu0 0.0
  %2665 = vmatprep.subr.mxu0 0.0
  %2666 = vmatpush1.msra.mxu0 0.0
  %2667 = vmatprep.subr.mxu0 0.0
  %2668 = vmatpush1.msra.mxu0 0.0
  %2669 = vmatprep.mubr.f32.mxu0 0.0
  %2670 = vmatmul.mubr.f32.gmra.mrb[0].mxu0 %v2560
  %v2671 = vpop.f32.mrb[0].mxu0
  %v2672 = vadd.f32 %v2598, %v2671
  %v2673 = vpop.f32.mrb[0].mxu0
  %v2674 = vadd.f32 %v2602, %v2673
  %2675 = vdwg.mxu0
  %v2676 = vmax.f32 %v2672, 0.0
  %v2677 = vmax.f32 %v2674, 0.0
  %v2678 = vld [vmem:[%s17] sm:$0xff]
  %v2679 = vld [vmem:[%s17 + $0x8] sm:$0xff]
  %v2680 = vld [vmem:[%s17 + $0x10] sm:$0xff]
  %v2681 = vld [vmem:[%s17 + $0x18] sm:$0xff]
  %v2682 = vld [vmem:[%s17 + $0x20] sm:$0xff]
  %v2683 = vld [vmem:[%s17 + $0x28] sm:$0xff]
  %v2684 = vld [vmem:[%s17 + $0x30] sm:$0xff]
  %v2685 = vld [vmem:[%s17 + $0x38] sm:$0xff]
  %v2686 = vld [vmem:[%s17 + $0x40] sm:$0xff]
  %v2687 = vld [vmem:[%s17 + $0x48] sm:$0xff]
  %v2688 = vld [vmem:[%s17 + $0x50] sm:$0xff]
  %v2689 = vld [vmem:[%s17 + $0x58] sm:$0xff]
  %v2690 = vld [vmem:[%s17 + $0x60] sm:$0xff]
  %v2691 = vld [vmem:[%s17 + $0x68] sm:$0xff]
  %v2692 = vld [vmem:[%s17 + $0x70] sm:$0xff]
  %v2693 = vld [vmem:[%s17 + $0x78] sm:$0xff]
  %v2694 = vld [vmem:[%s17 + $0x80] sm:$0xff]
  %v2695 = vld [vmem:[%s17 + $0x88] sm:$0xff]
  %v2696 = vld [vmem:[%s17 + $0x90] sm:$0xff]
  %v2697 = vld [vmem:[%s17 + $0x98] sm:$0xff]
  %v2698 = vld [vmem:[%s17 + $0xa0] sm:$0xff]
  %v2699 = vld [vmem:[%s17 + $0xa8] sm:$0xff]
  %v2700 = vld [vmem:[%s17 + $0xb0] sm:$0xff]
  %v2701 = vld [vmem:[%s17 + $0xb8] sm:$0xff]
  %v2702 = vld [vmem:[%s18] sm:$0x1]
  %v2704 = vlaneseq
  %v2705 = vshrl.u32 %v2704, 7
  %v2706 = vsub.s32 0, %v2705
  %v2707 = vrot.slane %v2702, %v2706
  %v2710 = vsel %vm1132, %v2677, 0
  %2712 = vmatprep.subr.mxu0 0.0
  %2713 = vmatpush1.msra.mxu0 %v2678
  %2714 = vmatprep.subr.mxu0 0.0
  %2715 = vmatpush1.msra.mxu0 %v2679
  %2716 = vmatprep.subr.mxu0 0.0
  %2717 = vmatpush1.msra.mxu0 %v2680
  %2718 = vmatprep.subr.mxu0 0.0
  %2719 = vmatpush1.msra.mxu0 %v2681
  %2720 = vmatprep.subr.mxu0 0.0
  %2721 = vmatpush1.msra.mxu0 %v2682
  %2722 = vmatprep.subr.mxu0 0.0
  %2723 = vmatpush1.msra.mxu0 %v2683
  %2724 = vmatprep.subr.mxu0 0.0
  %2725 = vmatpush1.msra.mxu0 %v2684
  %2726 = vmatprep.subr.mxu0 0.0
  %2727 = vmatpush1.msra.mxu0 %v2685
  %2728 = vmatprep.subr.mxu0 0.0
  %2729 = vmatpush1.msra.mxu0 %v2686
  %2730 = vmatprep.subr.mxu0 0.0
  %2731 = vmatpush1.msra.mxu0 %v2687
  %2732 = vmatprep.subr.mxu0 0.0
  %2733 = vmatpush1.msra.mxu0 %v2688
  %2734 = vmatprep.subr.mxu0 0.0
  %2735 = vmatpush1.msra.mxu0 %v2689
  %2736 = vmatprep.subr.mxu0 0.0
  %2737 = vmatpush1.msra.mxu0 %v2690
  %2738 = vmatprep.subr.mxu0 0.0
  %2739 = vmatpush1.msra.mxu0 %v2691
  %2740 = vmatprep.subr.mxu0 0.0
  %2741 = vmatpush1.msra.mxu0 %v2692
  %2742 = vmatprep.subr.mxu0 0.0
  %2743 = vmatpush1.msra.mxu0 %v2693
  %2744 = vmatprep.subr.mxu0 0.0
  %2745 = vmatpush1.msra.mxu0 %v2694
  %2746 = vmatprep.subr.mxu0 0.0
  %2747 = vmatpush1.msra.mxu0 %v2695
  %2748 = vmatprep.subr.mxu0 0.0
  %2749 = vmatpush1.msra.mxu0 %v2696
  %2750 = vmatprep.subr.mxu0 0.0
  %2751 = vmatpush1.msra.mxu0 %v2697
  %2752 = vmatprep.subr.mxu0 0.0
  %2753 = vmatpush1.msra.mxu0 %v2698
  %2754 = vmatprep.subr.mxu0 0.0
  %2755 = vmatpush1.msra.mxu0 %v2699
  %2756 = vmatprep.subr.mxu0 0.0
  %2757 = vmatpush1.msra.mxu0 %v2700
  %2758 = vmatprep.subr.mxu0 0.0
  %2759 = vmatpush1.msra.mxu0 %v2701
  %2760 = vmatprep.subr.mxu0 0.0
  %2761 = vmatpush1.msra.mxu0 0.0
  %2762 = vmatprep.subr.mxu0 0.0
  %2763 = vmatpush1.msra.mxu0 0.0
  %2764 = vmatprep.subr.mxu0 0.0
  %2765 = vmatpush1.msra.mxu0 0.0
  %2766 = vmatprep.subr.mxu0 0.0
  %2767 = vmatpush1.msra.mxu0 0.0
  %2768 = vmatprep.subr.mxu0 0.0
  %2769 = vmatpush1.msra.mxu0 0.0
  %2770 = vmatprep.subr.mxu0 0.0
  %2771 = vmatpush1.msra.mxu0 0.0
  %2772 = vmatprep.subr.mxu0 0.0
  %2773 = vmatpush1.msra.mxu0 0.0
  %2774 = vmatprep.subr.mxu0 0.0
  %2775 = vmatpush1.msra.mxu0 0.0
  %2776 = vmatprep.mubr.f32.mxu0 %v2710
  %2777 = vmatmul.mubr.f32.gmra.mrb[0].mxu0 %v2676
  %v2778 = vpop.f32.mrb[0].mxu0
  %v2779 = vadd.f32 %v2707, %v2778
  %v2780 = vpop.f32.mrb[0].mxu0
  %2781 = vdwg.mxu0
  %v2782 = vmax.f32 %v2779, 0.0
  %v2783 = vld [vmem:[%s19] sm:$0x1]
  %v2785 = vlaneseq
  %v2786 = vshrl.u32 %v2785, 7
  %v2787 = vsub.s32 0, %v2786
  %v2788 = vrot.slane %v2783, %v2787
  %v2790 = vmul.f32 %v2782, %v2788
  %vm2791 = vcmask 41984
  %v2792 = vsel %vm2791, %v2790, 0.0
  %2793 = vadd.xlane.f32.xlu0 %v2792
  %v2794 = vpop.xlane.xlu0 %2793
  %v2795 = vld [vmem:[#allocation3] sm:$0x1]
  %v2797 = vlaneseq
  %v2798 = vshrl.u32 %v2797, 7
  %v2799 = vsub.s32 0, %v2798
  %v2800 = vrot.slane %v2795, %v2799
  %v2802 = vadd.f32 %v2794, %v2800
  %v2803 = vmax.f32 %v2802, 0.0
  %vm2804 = vcmask 1024
  %2805 = vst.msk [vmem:[%s21] sm:$0x3] %vm2804, %v2803
  // Predicated region
  $region86: #{tpu_custom_call.1} parent=0 // pred_check
    _
  $region87: #{tpu_custom_call.1} parent=0 // pred_check_branch
    %2807 = sbr.rel (0) target = $region89
  $region88: #{tpu_custom_call.1} parent=0 // pred_region
    _
  $region89: #{tpu_custom_call.1} parent=0 // pred_fallthru
    _
  // Predicated region
  $region90: #{tpu_custom_call.1} parent=0 // pred_check
    _
  $region91: #{tpu_custom_call.1} parent=0 // pred_check_branch
    %2809 = sbr.rel (0) target = $region93
  $region92: #{tpu_custom_call.1} parent=0 // pred_region
    _
  $region93: #{tpu_custom_call.1} parent=0 // pred_fallthru
    _

</llo_original>
